<compile_context>
chip_gen: v5e
topology: v5e:2x2
jax: 0.10.0
libtpu: 0.0.40
codegen_flags: <defaults>
</compile_context>

<pallas_src>
import functools

import jax
import jax.numpy as jnp
import numpy as np
from jax.experimental import pallas as pl
from jax.experimental.pallas import tpu as pltpu


def _round_up(x, m):
    return ((x + m - 1) // m) * m


# ---------------------------------------------------------------------------
# Pallas kernels
# ---------------------------------------------------------------------------

def _conv_gauss_kernel(xr_ref, xi_ref, wr_ref, wi_ref, ws_ref, out_ref, *,
                       kq, w, h_out, c_out):
    """Tap-summed complex conv as 3-multiply (Gauss) MXU matmuls.

    xr_ref/xi_ref: (1, Hs*W, S*Cin) bf16  stride-folded activations (one n).
    wr_ref/wi_ref/ws_ref: (KQ, S*Cin, Cout) bf16, ws = wr + wi.
    out_ref: (1, H_out*W, 2*Cout) f32, packed [real | imag] on lanes.
    """
    m = h_out * w
    rr = jnp.zeros((m, c_out), jnp.float32)
    ii = jnp.zeros((m, c_out), jnp.float32)
    mm = jnp.zeros((m, c_out), jnp.float32)
    for q in range(kq):                       # static (kq <= 4): unrolled taps
        lo = q * w                            # tap shift in folded rows
        ar = xr_ref[0, lo:lo + m, :]
        ai = xi_ref[0, lo:lo + m, :]
        asum = (ar.astype(jnp.float32) + ai.astype(jnp.float32)).astype(jnp.bfloat16)
        rr = rr + jnp.dot(ar, wr_ref[q], preferred_element_type=jnp.float32)
        ii = ii + jnp.dot(ai, wi_ref[q], preferred_element_type=jnp.float32)
        mm = mm + jnp.dot(asum, ws_ref[q], preferred_element_type=jnp.float32)
    # cr = rr - ii ; ci = (ar+ai)(br+bi) - rr - ii   (lane-dense packed store)
    out_ref[0] = jnp.concatenate([rr - ii, mm - rr - ii], axis=-1)


def _bn_stats_kernel(x_ref, stats_ref, *, c):
    """Accumulate per-lane sum / sum^2 / cross(xr*xi) over M tiles.

    x_ref: (tm, 2C) f32 packed [real | imag]; stats_ref: (8, 2C) f32, resident
    across the 'arbitrary' grid axis (accumulator pattern).
    """
    @pl.when(pl.program_id(0) == 0)
    def _():
        stats_ref[...] = jnp.zeros_like(stats_ref)

    x = x_ref[...]
    x_sw = pltpu.roll(x, c, axis=1)                 # swap real/imag halves (XLU)
    stats_ref[0:1, :] += jnp.sum(x, axis=0, keepdims=True)
    stats_ref[1:2, :] += jnp.sum(x * x, axis=0, keepdims=True)
    stats_ref[2:3, :] += jnp.sum(x * x_sw, axis=0, keepdims=True)


def _bn_apply_kernel(x_ref, p_ref, q_ref, d_ref, y_ref, *, c):
    """y = relu(P * x + Q * swap(x) + D) on the packed [real | imag] slab."""
    x = x_ref[...]
    x_sw = pltpu.roll(x, c, axis=1)
    y = p_ref[...] * x + q_ref[...] * x_sw + d_ref[...]
    y_ref[...] = jnp.maximum(y, 0.0).astype(y_ref.dtype)


# ---------------------------------------------------------------------------
# Layer wrappers (pallas_call + thin XLA glue)
# ---------------------------------------------------------------------------

def complex_conv_fold(xr, xi, wp, cfg):
    """xr, xi: (N, H, W, Cin) bf16.  Returns ((M, 2*Cout) f32 packed, H_out)."""
    n, h, w, cin = xr.shape
    k, s, p, c_out = cfg["k"], cfg["s"], cfg["p"], cfg["cout"]
    kq = k // s
    h_out = (h + 2 * p - k) // s + 1
    h_s = h_out + kq - 1                      # folded rows needed along H
    sc = s * cin

    def fold(x):                              # pad + space-to-depth along H
        xp = jnp.pad(x, ((0, 0), (p, p), (0, 0), (0, 0)))
        xp = xp[:, :h_s * s]
        xp = xp.reshape(n, h_s, s, w, cin)
        xp = jnp.transpose(xp, (0, 1, 3, 2, 4))          # (N, Hs, W, S, Cin)
        return xp.reshape(n, h_s * w, sc)

    xsr, xsi = fold(xr), fold(xi)

    kern = functools.partial(_conv_gauss_kernel, kq=kq, w=w, h_out=h_out,
                             c_out=c_out)
    out = pl.pallas_call(
        kern,
        out_shape=jax.ShapeDtypeStruct((n, h_out * w, 2 * c_out), jnp.float32),
        grid=(n,),
        in_specs=[
            pl.BlockSpec((1, h_s * w, sc), lambda i: (i, 0, 0)),
            pl.BlockSpec((1, h_s * w, sc), lambda i: (i, 0, 0)),
            pl.BlockSpec((kq, sc, c_out), lambda i: (0, 0, 0)),
            pl.BlockSpec((kq, sc, c_out), lambda i: (0, 0, 0)),
            pl.BlockSpec((kq, sc, c_out), lambda i: (0, 0, 0)),
        ],
        out_specs=pl.BlockSpec((1, h_out * w, 2 * c_out), lambda i: (i, 0, 0)),
        compiler_params=pltpu.CompilerParams(
            dimension_semantics=("parallel",)),
    )(xsr, xsi, wp["wr"], wp["wi"], wp["ws"])
    # TODO(synk): for very long sequences, tile H_out with manual halo DMA
    # instead of one folded block per sample.
    return out.reshape(n * h_out * w, 2 * c_out), h_out


def complex_bn_relu(y_packed, bn, *, block_m=512, eps=1e-5,
                    out_dtype=jnp.bfloat16):
    """Training-mode ComplexBatchNorm2d + complex_relu on packed (M, 2C)."""
    m, two_c = y_packed.shape
    c = two_c // 2
    tm = min(block_m, _round_up(m, 8))
    mp = _round_up(m, tm)
    x = y_packed if mp == m else jnp.pad(y_packed, ((0, mp - m), (0, 0)))

    # pass 1: tiled per-lane reduction (sum, sum^2, cross)
    stats = pl.pallas_call(
        functools.partial(_bn_stats_kernel, c=c),
        out_shape=jax.ShapeDtypeStruct((8, two_c), jnp.float32),
        grid=(mp // tm,),
        in_specs=[pl.BlockSpec((tm, two_c), lambda i: (i, 0))],
        out_specs=pl.BlockSpec((8, two_c), lambda i: (0, 0)),
        compiler_params=pltpu.CompilerParams(
            dimension_semantics=("arbitrary",)),
    )(x)

    # tiny per-channel glue: mean + 2x2 covariance whitening + affine folded
    # into per-lane coefficients for  out = P*x + Q*swap(x) + D
    inv_m = 1.0 / float(m)
    s1, s2, s12 = stats[0], stats[1], stats[2]
    mean = s1 * inv_m
    mr, mi = mean[:c], mean[c:]
    var = s2 * inv_m - mean * mean
    crr = var[:c] + eps
    cii = var[c:] + eps
    cri = s12[:c] * inv_m - mr * mi
    det = crr * cii - cri * cri
    sq = jnp.sqrt(det)
    t = jnp.sqrt(crr + cii + 2.0 * sq)
    inv_st = 1.0 / (sq * t)
    rrr = (cii + sq) * inv_st
    rii = (crr + sq) * inv_st
    rri = -cri * inv_st
    wrr, wii, wri = bn["wrr"], bn["wii"], bn["wri"]
    br, bi = bn["br"], bn["bi"]
    arr = wrr * rrr + wri * rri
    ari = wrr * rri + wri * rii
    air = wri * rrr + wii * rri
    aii = wri * rri + wii * rii
    pc = jnp.concatenate([arr, aii])[None, :]
    qc = jnp.concatenate([ari, air])[None, :]
    dc = jnp.concatenate([br - arr * mr - ari * mi,
                          bi - air * mr - aii * mi])[None, :]

    # pass 2: dense per-lane affine + ReLU
    y = pl.pallas_call(
        functools.partial(_bn_apply_kernel, c=c),
        out_shape=jax.ShapeDtypeStruct((mp, two_c), out_dtype),
        grid=(mp // tm,),
        in_specs=[pl.BlockSpec((tm, two_c), lambda i: (i, 0)),
                  pl.BlockSpec((1, two_c), lambda i: (0, 0)),
                  pl.BlockSpec((1, two_c), lambda i: (0, 0)),
                  pl.BlockSpec((1, two_c), lambda i: (0, 0))],
        out_specs=pl.BlockSpec((tm, two_c), lambda i: (i, 0)),
        compiler_params=pltpu.CompilerParams(
            dimension_semantics=("parallel",)),
    )(x, pc, qc, dc)
    return y[:m] if mp != m else y


# ---------------------------------------------------------------------------
# Parameters / forward
# ---------------------------------------------------------------------------

LAYER_CFG = (
    dict(cout=64, k=8, s=2, p=3),    # conv1
    dict(cout=64, k=8, s=2, p=3),    # conv2
    dict(cout=128, k=8, s=4, p=3),   # conv3
)


def _fold_weight(w, k, s):
    """(Cout, Cin, K) -> (K//S, S*Cin, Cout) matching the stride-folded input."""
    c_out, c_in, _ = w.shape
    kq = k // s
    w = w.reshape(c_out, c_in, kq, s)
    w = jnp.transpose(w, (2, 3, 1, 0))               # (KQ, S, Cin, Cout)
    return w.reshape(kq, s * c_in, c_out)


def init_params(num_channels, key):
    cfgs = []
    cin = num_channels
    for cfg in LAYER_CFG:
        cfgs.append(dict(cfg, cin=cin))
        cin = cfg["cout"]
    params = {"convs": [], "bns": []}
    keys = jax.random.split(key, 2 * len(cfgs))
    rt2 = 1.4142135623730951
    for i, c in enumerate(cfgs):
        fan_in = c["cin"] * c["k"]
        scale = 1.0 / np.sqrt(2.0 * fan_in)
        wr = scale * jax.random.normal(keys[2 * i], (c["cout"], c["cin"], c["k"]),
                                       jnp.float32)
        wi = scale * jax.random.normal(keys[2 * i + 1], (c["cout"], c["cin"], c["k"]),
                                       jnp.float32)
        wr_f = _fold_weight(wr, c["k"], c["s"])
        wi_f = _fold_weight(wi, c["k"], c["s"])
        params["convs"].append({
            "wr_f32": wr, "wi_f32": wi,                        # reference copies
            "wr": wr_f.astype(jnp.bfloat16),
            "wi": wi_f.astype(jnp.bfloat16),
            "ws": (wr_f + wi_f).astype(jnp.bfloat16),
        })
        co = c["cout"]
        # ComplexBatchNorm2d reset_parameters: Wrr = Wii = sqrt(2), Wri = 0, bias = 0
        params["bns"].append({
            "wrr": jnp.full((co,), rt2, jnp.float32),
            "wii": jnp.full((co,), rt2, jnp.float32),
            "wri": jnp.zeros((co,), jnp.float32),
            "br": jnp.zeros((co,), jnp.float32),
            "bi": jnp.zeros((co,), jnp.float32),
        })
    return params, cfgs


def base_encoder_forward(params, cfgs, xr_nchw, xi_nchw, *, bn_block_m=512):
    """xr, xi: (N, C, H, W) f32.  Returns (yr, yi) as (N, 128, H_out, W) f32."""
    # TODO(synk): ComplexBatchNorm2d running-stats (momentum) buffers are not
    # updated; forward uses training-mode batch statistics (module.train()).
    n, _, _, w = xr_nchw.shape
    xr = jnp.transpose(xr_nchw, (0, 2, 3, 1)).astype(jnp.bfloat16)   # NHWC bf16
    xi = jnp.transpose(xi_nchw, (0, 2, 3, 1)).astype(jnp.bfloat16)
    for li, (convp, bnp, cfg) in enumerate(zip(params["convs"], params["bns"],
                                               cfgs)):
        last = li == len(cfgs) - 1
        y_packed, h = complex_conv_fold(xr, xi, convp, cfg)   # (M, 2*Cout) f32
        y_packed = complex_bn_relu(
            y_packed, bnp, block_m=bn_block_m,
            out_dtype=jnp.float32 if last else jnp.bfloat16)
        c = cfg["cout"]
        y4 = y_packed.reshape(n, h, w, 2 * c)
        xr, xi = y4[..., :c], y4[..., c:]
    yr = jnp.transpose(xr, (0, 3, 1, 2)).astype(jnp.float32)
    yi = jnp.transpose(xi, (0, 3, 1, 2)).astype(jnp.float32)
    return yr, yi


# ---------------------------------------------------------------------------
# Pure-JAX f32 reference (module semantics)
# ---------------------------------------------------------------------------

def _ref_forward(params, cfgs, xr, xi, eps=1e-5):
    for convp, bnp, cfg in zip(params["convs"], params["bns"], cfgs):
        k, s, p = cfg["k"], cfg["s"], cfg["p"]
        wr, wi = convp["wr_f32"], convp["wi_f32"]
        n, _, h, _ = xr.shape
        h_out = (h + 2 * p - k) // s + 1
        xpr = jnp.pad(xr, ((0, 0), (0, 0), (p, p), (0, 0)))
        xpi = jnp.pad(xi, ((0, 0), (0, 0), (p, p), (0, 0)))
        or_ = 0.0
        oi_ = 0.0
        for kk in range(k):
            slr = xpr[:, :, kk:kk + h_out * s:s, :]
            sli = xpi[:, :, kk:kk + h_out * s:s, :]
            or_ = or_ + jnp.einsum("nchw,oc->nohw", slr, wr[:, :, kk]) \
                      - jnp.einsum("nchw,oc->nohw", sli, wi[:, :, kk])
            oi_ = oi_ + jnp.einsum("nchw,oc->nohw", slr, wi[:, :, kk]) \
                      + jnp.einsum("nchw,oc->nohw", sli, wr[:, :, kk])
        mr = or_.mean(axis=(0, 2, 3), keepdims=True)
        mi = oi_.mean(axis=(0, 2, 3), keepdims=True)
        xrc, xic = or_ - mr, oi_ - mi
        crr = (xrc * xrc).mean(axis=(0, 2, 3), keepdims=True) + eps
        cii = (xic * xic).mean(axis=(0, 2, 3), keepdims=True) + eps
        cri = (xrc * xic).mean(axis=(0, 2, 3), keepdims=True)
        det = crr * cii - cri * cri
        sq = jnp.sqrt(det)
        t = jnp.sqrt(crr + cii + 2.0 * sq)
        inv_st = 1.0 / (sq * t)
        rrr, rii, rri = (cii + sq) * inv_st, (crr + sq) * inv_st, -cri * inv_st
        zr = rrr * xrc + rri * xic
        zi = rri * xrc + rii * xic
        wrr = bnp["wrr"][None, :, None, None]
        wii = bnp["wii"][None, :, None, None]
        wri = bnp["wri"][None, :, None, None]
        br = bnp["br"][None, :, None, None]
        bi = bnp["bi"][None, :, None, None]
        xr = jnp.maximum(wrr * zr + wri * zi + br, 0.0)
        xi = jnp.maximum(wri * zr + wii * zi + bi, 0.0)
    return xr, xi


# ---------------------------------------------------------------------------
# Main
# ---------------------------------------------------------------------------

if __name__ == "__main__":
    key = jax.random.PRNGKey(0)
    k_xr, k_xi, k_p = jax.random.split(key, 3)

    # small input consistent with the module: complex NCHW (N, num_channels, H, W)
    n, num_channels, h, w = 2, 4, 32, 4
    xr_in = jax.random.normal(k_xr, (n, num_channels, h, w), jnp.float32)
    xi_in = jax.random.normal(k_xi, (n, num_channels, h, w), jnp.float32)

    params, cfgs = init_params(num_channels, k_p)

    # small bn_block_m so the tiled reduction runs multiple grid steps at this
    # size; use 512+ in production.
    fwd = jax.jit(functools.partial(base_encoder_forward, params, cfgs,
                                    bn_block_m=32))
    yr, yi = fwd(xr_in, xi_in)
    jax.block_until_ready((yr, yi))

    assert yr.shape == (n, 128, 2, w), yr.shape
    assert bool(jnp.all(jnp.isfinite(yr))) and bool(jnp.all(jnp.isfinite(yi)))

    # validate against the f32 pure-JAX reference (bf16 MXU operands -> loose tol)
    ref_r, ref_i = _ref_forward(params, cfgs, xr_in, xi_in)
    np.testing.assert_allclose(np.asarray(yr), np.asarray(ref_r), rtol=0.1, atol=0.1)
    np.testing.assert_allclose(np.asarray(yi), np.asarray(ref_i), rtol=0.1, atol=0.1)

    y = yr + 1j * yi                       # complex output (N, 128, H_out, W)
    jax.block_until_ready(y)
    print("KERNEL_OK")
</pallas_src>

<mosaic_0001>
module attributes {stable_mosaic.version = 11 : i64} {
  func.func @_bn_stats_kernel(%arg0: i32, %arg1: memref<32x128xf32, #tpu.memory_space<vmem>>, %arg2: memref<8x128xf32, #tpu.memory_space<vmem>>) attributes {dimension_semantics = [#tpu.dimension_semantics<arbitrary>], iteration_bounds = array<i64: 4>, scalar_prefetch = 0 : i64, scratch_operands = 0 : i64, tpu.core_type = #tpu.core_type<tc>, window_params = [{transform_indices = @transform_0, window_bounds = array<i64: 32, 128>}, {pipeline_mode = #tpu.pipeline_mode<synchronous>, transform_indices = @transform_1, window_bounds = array<i64: 8, 128>}]} {
    %c0_i32 = arith.constant 0 : i32
    %0 = arith.cmpi eq, %arg0, %c0_i32 : i32
    %1 = arith.extui %0 : i1 to i32
    %c0_i32_0 = arith.constant 0 : i32
    %2 = arith.cmpi ne, %1, %c0_i32_0 : i32
    scf.if %2 {
      %cst_14 = arith.constant 0.000000e+00 : f32
      %22 = vector.broadcast %cst_14 : f32 to vector<8x128xf32>
      %c0_15 = arith.constant 0 : index
      %c0_16 = arith.constant 0 : index
      %23 = vector.load %arg2[%c0_15, %c0_16] : memref<8x128xf32, #tpu.memory_space<vmem>>, vector<8x128xf32>
      tpu.vector_store %arg2[%c0_15, %c0_16], %22 {strides = array<i32>} : memref<8x128xf32, #tpu.memory_space<vmem>>, vector<8x128xf32>,
    } else {
    }
    %c0 = arith.constant 0 : index
    %c0_1 = arith.constant 0 : index
    %3 = vector.load %arg1[%c0, %c0_1] : memref<32x128xf32, #tpu.memory_space<vmem>>, vector<32x128xf32>
    %c64_i32 = arith.constant 64 : i32
    %4 = tpu.dynamic_rotate %3 by %c64_i32 dim 1 : vector<32x128xf32>, i32 -> vector<32x128xf32>
    %c0_2 = arith.constant 0 : index
    %c0_3 = arith.constant 0 : index
    %5 = vector.load %arg2[%c0_2, %c0_3] : memref<8x128xf32, #tpu.memory_space<vmem>>, vector<1x128xf32>
    %cst = arith.constant dense<0.000000e+00> : vector<128xf32>
    %6 = vector.multi_reduction <add>, %3, %cst [0] : vector<32x128xf32> to vector<128xf32>
    %7 = vector.shape_cast %6 : vector<128xf32> to vector<1x128xf32>
    %8 = arith.addf %5, %7 : vector<1x128xf32>
    %c0_4 = arith.constant 0 : index
    %c0_5 = arith.constant 0 : index
    %9 = vector.load %arg2[%c0_4, %c0_5] : memref<8x128xf32, #tpu.memory_space<vmem>>, vector<1x128xf32>
    tpu.vector_store %arg2[%c0_4, %c0_5], %8 {strides = array<i32>} : memref<8x128xf32, #tpu.memory_space<vmem>>, vector<1x128xf32>,
    %c1 = arith.constant 1 : index
    %c0_6 = arith.constant 0 : index
    %10 = vector.load %arg2[%c1, %c0_6] : memref<8x128xf32, #tpu.memory_space<vmem>>, vector<1x128xf32>
    %11 = arith.mulf %3, %3 : vector<32x128xf32>
    %cst_7 = arith.constant dense<0.000000e+00> : vector<128xf32>
    %12 = vector.multi_reduction <add>, %11, %cst_7 [0] : vector<32x128xf32> to vector<128xf32>
    %13 = vector.shape_cast %12 : vector<128xf32> to vector<1x128xf32>
    %14 = arith.addf %10, %13 : vector<1x128xf32>
    %c1_8 = arith.constant 1 : index
    %c0_9 = arith.constant 0 : index
    %15 = vector.load %arg2[%c1_8, %c0_9] : memref<8x128xf32, #tpu.memory_space<vmem>>, vector<1x128xf32>
    tpu.vector_store %arg2[%c1_8, %c0_9], %14 {strides = array<i32>} : memref<8x128xf32, #tpu.memory_space<vmem>>, vector<1x128xf32>,
    %c2 = arith.constant 2 : index
    %c0_10 = arith.constant 0 : index
    %16 = vector.load %arg2[%c2, %c0_10] : memref<8x128xf32, #tpu.memory_space<vmem>>, vector<1x128xf32>
    %17 = arith.mulf %3, %4 : vector<32x128xf32>
    %cst_11 = arith.constant dense<0.000000e+00> : vector<128xf32>
    %18 = vector.multi_reduction <add>, %17, %cst_11 [0] : vector<32x128xf32> to vector<128xf32>
    %19 = vector.shape_cast %18 : vector<128xf32> to vector<1x128xf32>
    %20 = arith.addf %16, %19 : vector<1x128xf32>
    %c2_12 = arith.constant 2 : index
    %c0_13 = arith.constant 0 : index
    %21 = vector.load %arg2[%c2_12, %c0_13] : memref<8x128xf32, #tpu.memory_space<vmem>>, vector<1x128xf32>
    tpu.vector_store %arg2[%c2_12, %c0_13], %20 {strides = array<i32>} : memref<8x128xf32, #tpu.memory_space<vmem>>, vector<1x128xf32>,
    return
  }
  func.func @transform_0(%arg0: i32) -> (i32, i32) {
    %c0_i32 = arith.constant 0 : i32
    %c0_i32_0 = arith.constant 0 : i32
    return %arg0, %c0_i32 : i32, i32
  }
  func.func @transform_1(%arg0: i32) -> (i32, i32) {
    %c0_i32 = arith.constant 0 : i32
    %c0_i32_0 = arith.constant 0 : i32
    %c0_i32_1 = arith.constant 0 : i32
    return %c0_i32, %c0_i32_0 : i32, i32
  }
}

module attributes {stable_mosaic.version = 11 : i64} {
  func.func @_conv_gauss_kernel(%arg0: i32, %arg1: memref<1x76x8xbf16, #tpu.memory_space<vmem>>, %arg2: memref<1x76x8xbf16, #tpu.memory_space<vmem>>, %arg3: memref<4x8x64xbf16, #tpu.memory_space<vmem>>, %arg4: memref<4x8x64xbf16, #tpu.memory_space<vmem>>, %arg5: memref<4x8x64xbf16, #tpu.memory_space<vmem>>, %arg6: memref<1x64x128xf32, #tpu.memory_space<vmem>>) attributes {dimension_semantics = [#tpu.dimension_semantics<parallel>], iteration_bounds = array<i64: 2>, scalar_prefetch = 0 : i64, scratch_operands = 0 : i64, tpu.core_type = #tpu.core_type<tc>, window_params = [{transform_indices = @transform_0, window_bounds = array<i64: 1, 76, 8>}, {transform_indices = @transform_1, window_bounds = array<i64: 1, 76, 8>}, {pipeline_mode = #tpu.pipeline_mode<synchronous>, transform_indices = @transform_2, window_bounds = array<i64: 4, 8, 64>}, {pipeline_mode = #tpu.pipeline_mode<synchronous>, transform_indices = @transform_3, window_bounds = array<i64: 4, 8, 64>}, {pipeline_mode = #tpu.pipeline_mode<synchronous>, transform_indices = @transform_4, window_bounds = array<i64: 4, 8, 64>}, {transform_indices = @transform_5, window_bounds = array<i64: 1, 64, 128>}]} {
    %cst = arith.constant 0.000000e+00 : f32
    %0 = vector.broadcast %cst : f32 to vector<64x64xf32>
    %cst_0 = arith.constant 0.000000e+00 : f32
    %1 = vector.broadcast %cst_0 : f32 to vector<64x64xf32>
    %cst_1 = arith.constant 0.000000e+00 : f32
    %2 = vector.broadcast %cst_1 : f32 to vector<64x64xf32>
    %c0 = arith.constant 0 : index
    %c0_2 = arith.constant 0 : index
    %c0_3 = arith.constant 0 : index
    %3 = vector.load %arg1[%c0, %c0_2, %c0_3] : memref<1x76x8xbf16, #tpu.memory_space<vmem>>, vector<1x64x8xbf16>
    %4 = vector.shape_cast %3 : vector<1x64x8xbf16> to vector<64x8xbf16>
    %c0_4 = arith.constant 0 : index
    %c0_5 = arith.constant 0 : index
    %c0_6 = arith.constant 0 : index
    %5 = vector.load %arg2[%c0_4, %c0_5, %c0_6] : memref<1x76x8xbf16, #tpu.memory_space<vmem>>, vector<1x64x8xbf16>
    %6 = vector.shape_cast %5 : vector<1x64x8xbf16> to vector<64x8xbf16>
    %7 = arith.extf %4 : vector<64x8xbf16> to vector<64x8xf32>
    %8 = arith.extf %6 : vector<64x8xbf16> to vector<64x8xf32>
    %9 = arith.addf %7, %8 : vector<64x8xf32>
    %10 = arith.truncf %9 : vector<64x8xf32> to vector<64x8xbf16>
    %c0_7 = arith.constant 0 : index
    %c0_8 = arith.constant 0 : index
    %c0_9 = arith.constant 0 : index
    %11 = vector.load %arg3[%c0_7, %c0_8, %c0_9] : memref<4x8x64xbf16, #tpu.memory_space<vmem>>, vector<1x8x64xbf16>
    %12 = vector.shape_cast %11 : vector<1x8x64xbf16> to vector<8x64xbf16>
    %cst_10 = arith.constant dense<0.000000e+00> : vector<64x64xf32>
    %13 = tpu.matmul %4, %12, %cst_10 {dimension_numbers = #tpu.dot_dimension_numbers<[1], [0], [0], [1], [0, 0, 1, 1], [], []>} : vector<64x8xbf16>, vector<8x64xbf16>, vector<64x64xf32> -> vector<64x64xf32>
    %14 = arith.addf %0, %13 : vector<64x64xf32>
    %c0_11 = arith.constant 0 : index
    %c0_12 = arith.constant 0 : index
    %c0_13 = arith.constant 0 : index
    %15 = vector.load %arg4[%c0_11, %c0_12, %c0_13] : memref<4x8x64xbf16, #tpu.memory_space<vmem>>, vector<1x8x64xbf16>
    %16 = vector.shape_cast %15 : vector<1x8x64xbf16> to vector<8x64xbf16>
    %cst_14 = arith.constant dense<0.000000e+00> : vector<64x64xf32>
    %17 = tpu.matmul %6, %16, %cst_14 {dimension_numbers = #tpu.dot_dimension_numbers<[1], [0], [0], [1], [0, 0, 1, 1], [], []>} : vector<64x8xbf16>, vector<8x64xbf16>, vector<64x64xf32> -> vector<64x64xf32>
    %18 = arith.addf %1, %17 : vector<64x64xf32>
    %c0_15 = arith.constant 0 : index
    %c0_16 = arith.constant 0 : index
    %c0_17 = arith.constant 0 : index
    %19 = vector.load %arg5[%c0_15, %c0_16, %c0_17] : memref<4x8x64xbf16, #tpu.memory_space<vmem>>, vector<1x8x64xbf16>
    %20 = vector.shape_cast %19 : vector<1x8x64xbf16> to vector<8x64xbf16>
    %cst_18 = arith.constant dense<0.000000e+00> : vector<64x64xf32>
    %21 = tpu.matmul %10, %20, %cst_18 {dimension_numbers = #tpu.dot_dimension_numbers<[1], [0], [0], [1], [0, 0, 1, 1], [], []>} : vector<64x8xbf16>, vector<8x64xbf16>, vector<64x64xf32> -> vector<64x64xf32>
    %22 = arith.addf %2, %21 : vector<64x64xf32>
    %c0_19 = arith.constant 0 : index
    %c4 = arith.constant 4 : index
    %c0_20 = arith.constant 0 : index
    %23 = vector.load %arg1[%c0_19, %c4, %c0_20] : memref<1x76x8xbf16, #tpu.memory_space<vmem>>, vector<1x64x8xbf16>
    %24 = vector.shape_cast %23 : vector<1x64x8xbf16> to vector<64x8xbf16>
    %c0_21 = arith.constant 0 : index
    %c4_22 = arith.constant 4 : index
    %c0_23 = arith.constant 0 : index
    %25 = vector.load %arg2[%c0_21, %c4_22, %c0_23] : memref<1x76x8xbf16, #tpu.memory_space<vmem>>, vector<1x64x8xbf16>
    %26 = vector.shape_cast %25 : vector<1x64x8xbf16> to vector<64x8xbf16>
    %27 = arith.extf %24 : vector<64x8xbf16> to vector<64x8xf32>
    %28 = arith.extf %26 : vector<64x8xbf16> to vector<64x8xf32>
    %29 = arith.addf %27, %28 : vector<64x8xf32>
    %30 = arith.truncf %29 : vector<64x8xf32> to vector<64x8xbf16>
    %c1 = arith.constant 1 : index
    %c0_24 = arith.constant 0 : index
    %c0_25 = arith.constant 0 : index
    %31 = vector.load %arg3[%c1, %c0_24, %c0_25] : memref<4x8x64xbf16, #tpu.memory_space<vmem>>, vector<1x8x64xbf16>
    %32 = vector.shape_cast %31 : vector<1x8x64xbf16> to vector<8x64xbf16>
    %cst_26 = arith.constant dense<0.000000e+00> : vector<64x64xf32>
    %33 = tpu.matmul %24, %32, %cst_26 {dimension_numbers = #tpu.dot_dimension_numbers<[1], [0], [0], [1], [0, 0, 1, 1], [], []>} : vector<64x8xbf16>, vector<8x64xbf16>, vector<64x64xf32> -> vector<64x64xf32>
    %34 = arith.addf %14, %33 : vector<64x64xf32>
    %c1_27 = arith.constant 1 : index
    %c0_28 = arith.constant 0 : index
    %c0_29 = arith.constant 0 : index
    %35 = vector.load %arg4[%c1_27, %c0_28, %c0_29] : memref<4x8x64xbf16, #tpu.memory_space<vmem>>, vector<1x8x64xbf16>
    %36 = vector.shape_cast %35 : vector<1x8x64xbf16> to vector<8x64xbf16>
    %cst_30 = arith.constant dense<0.000000e+00> : vector<64x64xf32>
    %37 = tpu.matmul %26, %36, %cst_30 {dimension_numbers = #tpu.dot_dimension_numbers<[1], [0], [0], [1], [0, 0, 1, 1], [], []>} : vector<64x8xbf16>, vector<8x64xbf16>, vector<64x64xf32> -> vector<64x64xf32>
    %38 = arith.addf %18, %37 : vector<64x64xf32>
    %c1_31 = arith.constant 1 : index
    %c0_32 = arith.constant 0 : index
    %c0_33 = arith.constant 0 : index
    %39 = vector.load %arg5[%c1_31, %c0_32, %c0_33] : memref<4x8x64xbf16, #tpu.memory_space<vmem>>, vector<1x8x64xbf16>
    %40 = vector.shape_cast %39 : vector<1x8x64xbf16> to vector<8x64xbf16>
    %cst_34 = arith.constant dense<0.000000e+00> : vector<64x64xf32>
    %41 = tpu.matmul %30, %40, %cst_34 {dimension_numbers = #tpu.dot_dimension_numbers<[1], [0], [0], [1], [0, 0, 1, 1], [], []>} : vector<64x8xbf16>, vector<8x64xbf16>, vector<64x64xf32> -> vector<64x64xf32>
    %42 = arith.addf %22, %41 : vector<64x64xf32>
    %c0_35 = arith.constant 0 : index
    %c8 = arith.constant 8 : index
    %c0_36 = arith.constant 0 : index
    %43 = vector.load %arg1[%c0_35, %c8, %c0_36] : memref<1x76x8xbf16, #tpu.memory_space<vmem>>, vector<1x64x8xbf16>
    %44 = vector.shape_cast %43 : vector<1x64x8xbf16> to vector<64x8xbf16>
    %c0_37 = arith.constant 0 : index
    %c8_38 = arith.constant 8 : index
    %c0_39 = arith.constant 0 : index
    %45 = vector.load %arg2[%c0_37, %c8_38, %c0_39] : memref<1x76x8xbf16, #tpu.memory_space<vmem>>, vector<1x64x8xbf16>
    %46 = vector.shape_cast %45 : vector<1x64x8xbf16> to vector<64x8xbf16>
    %47 = arith.extf %44 : vector<64x8xbf16> to vector<64x8xf32>
    %48 = arith.extf %46 : vector<64x8xbf16> to vector<64x8xf32>
    %49 = arith.addf %47, %48 : vector<64x8xf32>
    %50 = arith.truncf %49 : vector<64x8xf32> to vector<64x8xbf16>
    %c2 = arith.constant 2 : index
    %c0_40 = arith.constant 0 : index
    %c0_41 = arith.constant 0 : index
    %51 = vector.load %arg3[%c2, %c0_40, %c0_41] : memref<4x8x64xbf16, #tpu.memory_space<vmem>>, vector<1x8x64xbf16>
    %52 = vector.shape_cast %51 : vector<1x8x64xbf16> to vector<8x64xbf16>
    %cst_42 = arith.constant dense<0.000000e+00> : vector<64x64xf32>
    %53 = tpu.matmul %44, %52, %cst_42 {dimension_numbers = #tpu.dot_dimension_numbers<[1], [0], [0], [1], [0, 0, 1, 1], [], []>} : vector<64x8xbf16>, vector<8x64xbf16>, vector<64x64xf32> -> vector<64x64xf32>
    %54 = arith.addf %34, %53 : vector<64x64xf32>
    %c2_43 = arith.constant 2 : index
    %c0_44 = arith.constant 0 : index
    %c0_45 = arith.constant 0 : index
    %55 = vector.load %arg4[%c2_43, %c0_44, %c0_45] : memref<4x8x64xbf16, #tpu.memory_space<vmem>>, vector<1x8x64xbf16>
    %56 = vector.shape_cast %55 : vector<1x8x64xbf16> to vector<8x64xbf16>
    %cst_46 = arith.constant dense<0.000000e+00> : vector<64x64xf32>
    %57 = tpu.matmul %46, %56, %cst_46 {dimension_numbers = #tpu.dot_dimension_numbers<[1], [0], [0], [1], [0, 0, 1, 1], [], []>} : vector<64x8xbf16>, vector<8x64xbf16>, vector<64x64xf32> -> vector<64x64xf32>
    %58 = arith.addf %38, %57 : vector<64x64xf32>
    %c2_47 = arith.constant 2 : index
    %c0_48 = arith.constant 0 : index
    %c0_49 = arith.constant 0 : index
    %59 = vector.load %arg5[%c2_47, %c0_48, %c0_49] : memref<4x8x64xbf16, #tpu.memory_space<vmem>>, vector<1x8x64xbf16>
    %60 = vector.shape_cast %59 : vector<1x8x64xbf16> to vector<8x64xbf16>
    %cst_50 = arith.constant dense<0.000000e+00> : vector<64x64xf32>
    %61 = tpu.matmul %50, %60, %cst_50 {dimension_numbers = #tpu.dot_dimension_numbers<[1], [0], [0], [1], [0, 0, 1, 1], [], []>} : vector<64x8xbf16>, vector<8x64xbf16>, vector<64x64xf32> -> vector<64x64xf32>
    %62 = arith.addf %42, %61 : vector<64x64xf32>
    %c0_51 = arith.constant 0 : index
    %c12 = arith.constant 12 : index
    %c0_52 = arith.constant 0 : index
    %63 = vector.load %arg1[%c0_51, %c12, %c0_52] : memref<1x76x8xbf16, #tpu.memory_space<vmem>>, vector<1x64x8xbf16>
    %64 = vector.shape_cast %63 : vector<1x64x8xbf16> to vector<64x8xbf16>
    %c0_53 = arith.constant 0 : index
    %c12_54 = arith.constant 12 : index
    %c0_55 = arith.constant 0 : index
    %65 = vector.load %arg2[%c0_53, %c12_54, %c0_55] : memref<1x76x8xbf16, #tpu.memory_space<vmem>>, vector<1x64x8xbf16>
    %66 = vector.shape_cast %65 : vector<1x64x8xbf16> to vector<64x8xbf16>
    %67 = arith.extf %64 : vector<64x8xbf16> to vector<64x8xf32>
    %68 = arith.extf %66 : vector<64x8xbf16> to vector<64x8xf32>
    %69 = arith.addf %67, %68 : vector<64x8xf32>
    %70 = arith.truncf %69 : vector<64x8xf32> to vector<64x8xbf16>
    %c3 = arith.constant 3 : index
    %c0_56 = arith.constant 0 : index
    %c0_57 = arith.constant 0 : index
    %71 = vector.load %arg3[%c3, %c0_56, %c0_57] : memref<4x8x64xbf16, #tpu.memory_space<vmem>>, vector<1x8x64xbf16>
    %72 = vector.shape_cast %71 : vector<1x8x64xbf16> to vector<8x64xbf16>
    %cst_58 = arith.constant dense<0.000000e+00> : vector<64x64xf32>
    %73 = tpu.matmul %64, %72, %cst_58 {dimension_numbers = #tpu.dot_dimension_numbers<[1], [0], [0], [1], [0, 0, 1, 1], [], []>} : vector<64x8xbf16>, vector<8x64xbf16>, vector<64x64xf32> -> vector<64x64xf32>
    %74 = arith.addf %54, %73 : vector<64x64xf32>
    %c3_59 = arith.constant 3 : index
    %c0_60 = arith.constant 0 : index
    %c0_61 = arith.constant 0 : index
    %75 = vector.load %arg4[%c3_59, %c0_60, %c0_61] : memref<4x8x64xbf16, #tpu.memory_space<vmem>>, vector<1x8x64xbf16>
    %76 = vector.shape_cast %75 : vector<1x8x64xbf16> to vector<8x64xbf16>
    %cst_62 = arith.constant dense<0.000000e+00> : vector<64x64xf32>
    %77 = tpu.matmul %66, %76, %cst_62 {dimension_numbers = #tpu.dot_dimension_numbers<[1], [0], [0], [1], [0, 0, 1, 1], [], []>} : vector<64x8xbf16>, vector<8x64xbf16>, vector<64x64xf32> -> vector<64x64xf32>
    %78 = arith.addf %58, %77 : vector<64x64xf32>
    %c3_63 = arith.constant 3 : index
    %c0_64 = arith.constant 0 : index
    %c0_65 = arith.constant 0 : index
    %79 = vector.load %arg5[%c3_63, %c0_64, %c0_65] : memref<4x8x64xbf16, #tpu.memory_space<vmem>>, vector<1x8x64xbf16>
    %80 = vector.shape_cast %79 : vector<1x8x64xbf16> to vector<8x64xbf16>
    %cst_66 = arith.constant dense<0.000000e+00> : vector<64x64xf32>
    %81 = tpu.matmul %70, %80, %cst_66 {dimension_numbers = #tpu.dot_dimension_numbers<[1], [0], [0], [1], [0, 0, 1, 1], [], []>} : vector<64x8xbf16>, vector<8x64xbf16>, vector<64x64xf32> -> vector<64x64xf32>
    %82 = arith.addf %62, %81 : vector<64x64xf32>
    %83 = arith.subf %74, %78 : vector<64x64xf32>
    %84 = arith.subf %82, %74 : vector<64x64xf32>
    %85 = arith.subf %84, %78 : vector<64x64xf32>
    %86 = tpu.concatenate %83, %85 in 1 : vector<64x64xf32>, vector<64x64xf32> -> vector<64x128xf32>
    %c0_67 = arith.constant 0 : index
    %c0_68 = arith.constant 0 : index
    %c0_69 = arith.constant 0 : index
    %87 = vector.load %arg6[%c0_67, %c0_68, %c0_69] : memref<1x64x128xf32, #tpu.memory_space<vmem>>, vector<1x64x128xf32>
    %88 = vector.shape_cast %87 : vector<1x64x128xf32> to vector<64x128xf32>
    %89 = vector.shape_cast %86 : vector<64x128xf32> to vector<1x64x128xf32>
    tpu.vector_store %arg6[%c0_67, %c0_68, %c0_69], %89 {strides = array<i32>} : memref<1x64x128xf32, #tpu.memory_space<vmem>>, vector<1x64x128xf32>,
    return
  }
  func.func @transform_0(%arg0: i32) -> (i32, i32, i32) {
    %c0_i32 = arith.constant 0 : i32
    %c0_i32_0 = arith.constant 0 : i32
    %c0_i32_1 = arith.constant 0 : i32
    return %arg0, %c0_i32, %c0_i32_0 : i32, i32, i32
  }
  func.func @transform_1(%arg0: i32) -> (i32, i32, i32) {
    %c0_i32 = arith.constant 0 : i32
    %c0_i32_0 = arith.constant 0 : i32
    %c0_i32_1 = arith.constant 0 : i32
    return %arg0, %c0_i32, %c0_i32_0 : i32, i32, i32
  }
  func.func @transform_2(%arg0: i32) -> (i32, i32, i32) {
    %c0_i32 = arith.constant 0 : i32
    %c0_i32_0 = arith.constant 0 : i32
    %c0_i32_1 = arith.constant 0 : i32
    %c0_i32_2 = arith.constant 0 : i32
    return %c0_i32, %c0_i32_0, %c0_i32_1 : i32, i32, i32
  }
  func.func @transform_3(%arg0: i32) -> (i32, i32, i32) {
    %c0_i32 = arith.constant 0 : i32
    %c0_i32_0 = arith.constant 0 : i32
    %c0_i32_1 = arith.constant 0 : i32
    %c0_i32_2 = arith.constant 0 : i32
    return %c0_i32, %c0_i32_0, %c0_i32_1 : i32, i32, i32
  }
  func.func @transform_4(%arg0: i32) -> (i32, i32, i32) {
    %c0_i32 = arith.constant 0 : i32
    %c0_i32_0 = arith.constant 0 : i32
    %c0_i32_1 = arith.constant 0 : i32
    %c0_i32_2 = arith.constant 0 : i32
    return %c0_i32, %c0_i32_0, %c0_i32_1 : i32, i32, i32
  }
  func.func @transform_5(%arg0: i32) -> (i32, i32, i32) {
    %c0_i32 = arith.constant 0 : i32
    %c0_i32_0 = arith.constant 0 : i32
    %c0_i32_1 = arith.constant 0 : i32
    return %arg0, %c0_i32, %c0_i32_0 : i32, i32, i32
  }
}

module attributes {stable_mosaic.version = 11 : i64} {
  func.func @_bn_apply_kernel(%arg0: i32, %arg1: memref<32x128xf32, #tpu.memory_space<vmem>>, %arg2: memref<1x128xf32, #tpu.memory_space<vmem>>, %arg3: memref<1x128xf32, #tpu.memory_space<vmem>>, %arg4: memref<1x128xf32, #tpu.memory_space<vmem>>, %arg5: memref<32x128xbf16, #tpu.memory_space<vmem>>) attributes {dimension_semantics = [#tpu.dimension_semantics<parallel>], iteration_bounds = array<i64: 4>, scalar_prefetch = 0 : i64, scratch_operands = 0 : i64, tpu.core_type = #tpu.core_type<tc>, window_params = [{transform_indices = @transform_0, window_bounds = array<i64: 32, 128>}, {pipeline_mode = #tpu.pipeline_mode<synchronous>, transform_indices = @transform_1, window_bounds = array<i64: 1, 128>}, {pipeline_mode = #tpu.pipeline_mode<synchronous>, transform_indices = @transform_2, window_bounds = array<i64: 1, 128>}, {pipeline_mode = #tpu.pipeline_mode<synchronous>, transform_indices = @transform_3, window_bounds = array<i64: 1, 128>}, {transform_indices = @transform_4, window_bounds = array<i64: 32, 128>}]} {
    %c0 = arith.constant 0 : index
    %c0_0 = arith.constant 0 : index
    %0 = vector.load %arg1[%c0, %c0_0] : memref<32x128xf32, #tpu.memory_space<vmem>>, vector<32x128xf32>
    %c64_i32 = arith.constant 64 : i32
    %1 = tpu.dynamic_rotate %0 by %c64_i32 dim 1 : vector<32x128xf32>, i32 -> vector<32x128xf32>
    %c0_1 = arith.constant 0 : index
    %c0_2 = arith.constant 0 : index
    %2 = vector.load %arg2[%c0_1, %c0_2] : memref<1x128xf32, #tpu.memory_space<vmem>>, vector<1x128xf32>
    %3 = vector.broadcast %2 : vector<1x128xf32> to vector<32x128xf32>
    %4 = arith.mulf %3, %0 : vector<32x128xf32>
    %c0_3 = arith.constant 0 : index
    %c0_4 = arith.constant 0 : index
    %5 = vector.load %arg3[%c0_3, %c0_4] : memref<1x128xf32, #tpu.memory_space<vmem>>, vector<1x128xf32>
    %6 = vector.broadcast %5 : vector<1x128xf32> to vector<32x128xf32>
    %7 = arith.mulf %6, %1 : vector<32x128xf32>
    %8 = arith.addf %4, %7 : vector<32x128xf32>
    %c0_5 = arith.constant 0 : index
    %c0_6 = arith.constant 0 : index
    %9 = vector.load %arg4[%c0_5, %c0_6] : memref<1x128xf32, #tpu.memory_space<vmem>>, vector<1x128xf32>
    %10 = vector.broadcast %9 : vector<1x128xf32> to vector<32x128xf32>
    %11 = arith.addf %8, %10 : vector<32x128xf32>
    %cst = arith.constant 0.000000e+00 : f32
    %12 = vector.broadcast %cst : f32 to vector<32x128xf32>
    %13 = arith.maximumf %11, %12 : vector<32x128xf32>
    %14 = arith.truncf %13 : vector<32x128xf32> to vector<32x128xbf16>
    %c0_7 = arith.constant 0 : index
    %c0_8 = arith.constant 0 : index
    %15 = vector.load %arg5[%c0_7, %c0_8] : memref<32x128xbf16, #tpu.memory_space<vmem>>, vector<32x128xbf16>
    tpu.vector_store %arg5[%c0_7, %c0_8], %14 {strides = array<i32>} : memref<32x128xbf16, #tpu.memory_space<vmem>>, vector<32x128xbf16>,
    return
  }
  func.func @transform_0(%arg0: i32) -> (i32, i32) {
    %c0_i32 = arith.constant 0 : i32
    %c0_i32_0 = arith.constant 0 : i32
    return %arg0, %c0_i32 : i32, i32
  }
  func.func @transform_1(%arg0: i32) -> (i32, i32) {
    %c0_i32 = arith.constant 0 : i32
    %c0_i32_0 = arith.constant 0 : i32
    %c0_i32_1 = arith.constant 0 : i32
    return %c0_i32, %c0_i32_0 : i32, i32
  }
  func.func @transform_2(%arg0: i32) -> (i32, i32) {
    %c0_i32 = arith.constant 0 : i32
    %c0_i32_0 = arith.constant 0 : i32
    %c0_i32_1 = arith.constant 0 : i32
    return %c0_i32, %c0_i32_0 : i32, i32
  }
  func.func @transform_3(%arg0: i32) -> (i32, i32) {
    %c0_i32 = arith.constant 0 : i32
    %c0_i32_0 = arith.constant 0 : i32
    %c0_i32_1 = arith.constant 0 : i32
    return %c0_i32, %c0_i32_0 : i32, i32
  }
  func.func @transform_4(%arg0: i32) -> (i32, i32) {
    %c0_i32 = arith.constant 0 : i32
    %c0_i32_0 = arith.constant 0 : i32
    return %arg0, %c0_i32 : i32, i32
  }
}

module attributes {stable_mosaic.version = 11 : i64} {
  func.func @_conv_gauss_kernel(%arg0: i32, %arg1: memref<1x44x128xbf16, #tpu.memory_space<vmem>>, %arg2: memref<1x44x128xbf16, #tpu.memory_space<vmem>>, %arg3: memref<4x128x64xbf16, #tpu.memory_space<vmem>>, %arg4: memref<4x128x64xbf16, #tpu.memory_space<vmem>>, %arg5: memref<4x128x64xbf16, #tpu.memory_space<vmem>>, %arg6: memref<1x32x128xf32, #tpu.memory_space<vmem>>) attributes {dimension_semantics = [#tpu.dimension_semantics<parallel>], iteration_bounds = array<i64: 2>, scalar_prefetch = 0 : i64, scratch_operands = 0 : i64, tpu.core_type = #tpu.core_type<tc>, window_params = [{transform_indices = @transform_0, window_bounds = array<i64: 1, 44, 128>}, {transform_indices = @transform_1, window_bounds = array<i64: 1, 44, 128>}, {pipeline_mode = #tpu.pipeline_mode<synchronous>, transform_indices = @transform_2, window_bounds = array<i64: 4, 128, 64>}, {pipeline_mode = #tpu.pipeline_mode<synchronous>, transform_indices = @transform_3, window_bounds = array<i64: 4, 128, 64>}, {pipeline_mode = #tpu.pipeline_mode<synchronous>, transform_indices = @transform_4, window_bounds = array<i64: 4, 128, 64>}, {transform_indices = @transform_5, window_bounds = array<i64: 1, 32, 128>}]} {
    %cst = arith.constant 0.000000e+00 : f32
    %0 = vector.broadcast %cst : f32 to vector<32x64xf32>
    %cst_0 = arith.constant 0.000000e+00 : f32
    %1 = vector.broadcast %cst_0 : f32 to vector<32x64xf32>
    %cst_1 = arith.constant 0.000000e+00 : f32
    %2 = vector.broadcast %cst_1 : f32 to vector<32x64xf32>
    %c0 = arith.constant 0 : index
    %c0_2 = arith.constant 0 : index
    %c0_3 = arith.constant 0 : index
    %3 = vector.load %arg1[%c0, %c0_2, %c0_3] : memref<1x44x128xbf16, #tpu.memory_space<vmem>>, vector<1x32x128xbf16>
    %4 = vector.shape_cast %3 : vector<1x32x128xbf16> to vector<32x128xbf16>
    %c0_4 = arith.constant 0 : index
    %c0_5 = arith.constant 0 : index
    %c0_6 = arith.constant 0 : index
    %5 = vector.load %arg2[%c0_4, %c0_5, %c0_6] : memref<1x44x128xbf16, #tpu.memory_space<vmem>>, vector<1x32x128xbf16>
    %6 = vector.shape_cast %5 : vector<1x32x128xbf16> to vector<32x128xbf16>
    %7 = arith.extf %4 : vector<32x128xbf16> to vector<32x128xf32>
    %8 = arith.extf %6 : vector<32x128xbf16> to vector<32x128xf32>
    %9 = arith.addf %7, %8 : vector<32x128xf32>
    %10 = arith.truncf %9 : vector<32x128xf32> to vector<32x128xbf16>
    %c0_7 = arith.constant 0 : index
    %c0_8 = arith.constant 0 : index
    %c0_9 = arith.constant 0 : index
    %11 = vector.load %arg3[%c0_7, %c0_8, %c0_9] : memref<4x128x64xbf16, #tpu.memory_space<vmem>>, vector<1x128x64xbf16>
    %12 = vector.shape_cast %11 : vector<1x128x64xbf16> to vector<128x64xbf16>
    %cst_10 = arith.constant dense<0.000000e+00> : vector<32x64xf32>
    %13 = tpu.matmul %4, %12, %cst_10 {dimension_numbers = #tpu.dot_dimension_numbers<[1], [0], [0], [1], [0, 0, 1, 1], [], []>} : vector<32x128xbf16>, vector<128x64xbf16>, vector<32x64xf32> -> vector<32x64xf32>
    %14 = arith.addf %0, %13 : vector<32x64xf32>
    %c0_11 = arith.constant 0 : index
    %c0_12 = arith.constant 0 : index
    %c0_13 = arith.constant 0 : index
    %15 = vector.load %arg4[%c0_11, %c0_12, %c0_13] : memref<4x128x64xbf16, #tpu.memory_space<vmem>>, vector<1x128x64xbf16>
    %16 = vector.shape_cast %15 : vector<1x128x64xbf16> to vector<128x64xbf16>
    %cst_14 = arith.constant dense<0.000000e+00> : vector<32x64xf32>
    %17 = tpu.matmul %6, %16, %cst_14 {dimension_numbers = #tpu.dot_dimension_numbers<[1], [0], [0], [1], [0, 0, 1, 1], [], []>} : vector<32x128xbf16>, vector<128x64xbf16>, vector<32x64xf32> -> vector<32x64xf32>
    %18 = arith.addf %1, %17 : vector<32x64xf32>
    %c0_15 = arith.constant 0 : index
    %c0_16 = arith.constant 0 : index
    %c0_17 = arith.constant 0 : index
    %19 = vector.load %arg5[%c0_15, %c0_16, %c0_17] : memref<4x128x64xbf16, #tpu.memory_space<vmem>>, vector<1x128x64xbf16>
    %20 = vector.shape_cast %19 : vector<1x128x64xbf16> to vector<128x64xbf16>
    %cst_18 = arith.constant dense<0.000000e+00> : vector<32x64xf32>
    %21 = tpu.matmul %10, %20, %cst_18 {dimension_numbers = #tpu.dot_dimension_numbers<[1], [0], [0], [1], [0, 0, 1, 1], [], []>} : vector<32x128xbf16>, vector<128x64xbf16>, vector<32x64xf32> -> vector<32x64xf32>
    %22 = arith.addf %2, %21 : vector<32x64xf32>
    %c0_19 = arith.constant 0 : index
    %c4 = arith.constant 4 : index
    %c0_20 = arith.constant 0 : index
    %23 = vector.load %arg1[%c0_19, %c4, %c0_20] : memref<1x44x128xbf16, #tpu.memory_space<vmem>>, vector<1x32x128xbf16>
    %24 = vector.shape_cast %23 : vector<1x32x128xbf16> to vector<32x128xbf16>
    %c0_21 = arith.constant 0 : index
    %c4_22 = arith.constant 4 : index
    %c0_23 = arith.constant 0 : index
    %25 = vector.load %arg2[%c0_21, %c4_22, %c0_23] : memref<1x44x128xbf16, #tpu.memory_space<vmem>>, vector<1x32x128xbf16>
    %26 = vector.shape_cast %25 : vector<1x32x128xbf16> to vector<32x128xbf16>
    %27 = arith.extf %24 : vector<32x128xbf16> to vector<32x128xf32>
    %28 = arith.extf %26 : vector<32x128xbf16> to vector<32x128xf32>
    %29 = arith.addf %27, %28 : vector<32x128xf32>
    %30 = arith.truncf %29 : vector<32x128xf32> to vector<32x128xbf16>
    %c1 = arith.constant 1 : index
    %c0_24 = arith.constant 0 : index
    %c0_25 = arith.constant 0 : index
    %31 = vector.load %arg3[%c1, %c0_24, %c0_25] : memref<4x128x64xbf16, #tpu.memory_space<vmem>>, vector<1x128x64xbf16>
    %32 = vector.shape_cast %31 : vector<1x128x64xbf16> to vector<128x64xbf16>
    %cst_26 = arith.constant dense<0.000000e+00> : vector<32x64xf32>
    %33 = tpu.matmul %24, %32, %cst_26 {dimension_numbers = #tpu.dot_dimension_numbers<[1], [0], [0], [1], [0, 0, 1, 1], [], []>} : vector<32x128xbf16>, vector<128x64xbf16>, vector<32x64xf32> -> vector<32x64xf32>
    %34 = arith.addf %14, %33 : vector<32x64xf32>
    %c1_27 = arith.constant 1 : index
    %c0_28 = arith.constant 0 : index
    %c0_29 = arith.constant 0 : index
    %35 = vector.load %arg4[%c1_27, %c0_28, %c0_29] : memref<4x128x64xbf16, #tpu.memory_space<vmem>>, vector<1x128x64xbf16>
    %36 = vector.shape_cast %35 : vector<1x128x64xbf16> to vector<128x64xbf16>
    %cst_30 = arith.constant dense<0.000000e+00> : vector<32x64xf32>
    %37 = tpu.matmul %26, %36, %cst_30 {dimension_numbers = #tpu.dot_dimension_numbers<[1], [0], [0], [1], [0, 0, 1, 1], [], []>} : vector<32x128xbf16>, vector<128x64xbf16>, vector<32x64xf32> -> vector<32x64xf32>
    %38 = arith.addf %18, %37 : vector<32x64xf32>
    %c1_31 = arith.constant 1 : index
    %c0_32 = arith.constant 0 : index
    %c0_33 = arith.constant 0 : index
    %39 = vector.load %arg5[%c1_31, %c0_32, %c0_33] : memref<4x128x64xbf16, #tpu.memory_space<vmem>>, vector<1x128x64xbf16>
    %40 = vector.shape_cast %39 : vector<1x128x64xbf16> to vector<128x64xbf16>
    %cst_34 = arith.constant dense<0.000000e+00> : vector<32x64xf32>
    %41 = tpu.matmul %30, %40, %cst_34 {dimension_numbers = #tpu.dot_dimension_numbers<[1], [0], [0], [1], [0, 0, 1, 1], [], []>} : vector<32x128xbf16>, vector<128x64xbf16>, vector<32x64xf32> -> vector<32x64xf32>
    %42 = arith.addf %22, %41 : vector<32x64xf32>
    %c0_35 = arith.constant 0 : index
    %c8 = arith.constant 8 : index
    %c0_36 = arith.constant 0 : index
    %43 = vector.load %arg1[%c0_35, %c8, %c0_36] : memref<1x44x128xbf16, #tpu.memory_space<vmem>>, vector<1x32x128xbf16>
    %44 = vector.shape_cast %43 : vector<1x32x128xbf16> to vector<32x128xbf16>
    %c0_37 = arith.constant 0 : index
    %c8_38 = arith.constant 8 : index
    %c0_39 = arith.constant 0 : index
    %45 = vector.load %arg2[%c0_37, %c8_38, %c0_39] : memref<1x44x128xbf16, #tpu.memory_space<vmem>>, vector<1x32x128xbf16>
    %46 = vector.shape_cast %45 : vector<1x32x128xbf16> to vector<32x128xbf16>
    %47 = arith.extf %44 : vector<32x128xbf16> to vector<32x128xf32>
    %48 = arith.extf %46 : vector<32x128xbf16> to vector<32x128xf32>
    %49 = arith.addf %47, %48 : vector<32x128xf32>
    %50 = arith.truncf %49 : vector<32x128xf32> to vector<32x128xbf16>
    %c2 = arith.constant 2 : index
    %c0_40 = arith.constant 0 : index
    %c0_41 = arith.constant 0 : index
    %51 = vector.load %arg3[%c2, %c0_40, %c0_41] : memref<4x128x64xbf16, #tpu.memory_space<vmem>>, vector<1x128x64xbf16>
    %52 = vector.shape_cast %51 : vector<1x128x64xbf16> to vector<128x64xbf16>
    %cst_42 = arith.constant dense<0.000000e+00> : vector<32x64xf32>
    %53 = tpu.matmul %44, %52, %cst_42 {dimension_numbers = #tpu.dot_dimension_numbers<[1], [0], [0], [1], [0, 0, 1, 1], [], []>} : vector<32x128xbf16>, vector<128x64xbf16>, vector<32x64xf32> -> vector<32x64xf32>
    %54 = arith.addf %34, %53 : vector<32x64xf32>
    %c2_43 = arith.constant 2 : index
    %c0_44 = arith.constant 0 : index
    %c0_45 = arith.constant 0 : index
    %55 = vector.load %arg4[%c2_43, %c0_44, %c0_45] : memref<4x128x64xbf16, #tpu.memory_space<vmem>>, vector<1x128x64xbf16>
    %56 = vector.shape_cast %55 : vector<1x128x64xbf16> to vector<128x64xbf16>
    %cst_46 = arith.constant dense<0.000000e+00> : vector<32x64xf32>
    %57 = tpu.matmul %46, %56, %cst_46 {dimension_numbers = #tpu.dot_dimension_numbers<[1], [0], [0], [1], [0, 0, 1, 1], [], []>} : vector<32x128xbf16>, vector<128x64xbf16>, vector<32x64xf32> -> vector<32x64xf32>
    %58 = arith.addf %38, %57 : vector<32x64xf32>
    %c2_47 = arith.constant 2 : index
    %c0_48 = arith.constant 0 : index
    %c0_49 = arith.constant 0 : index
    %59 = vector.load %arg5[%c2_47, %c0_48, %c0_49] : memref<4x128x64xbf16, #tpu.memory_space<vmem>>, vector<1x128x64xbf16>
    %60 = vector.shape_cast %59 : vector<1x128x64xbf16> to vector<128x64xbf16>
    %cst_50 = arith.constant dense<0.000000e+00> : vector<32x64xf32>
    %61 = tpu.matmul %50, %60, %cst_50 {dimension_numbers = #tpu.dot_dimension_numbers<[1], [0], [0], [1], [0, 0, 1, 1], [], []>} : vector<32x128xbf16>, vector<128x64xbf16>, vector<32x64xf32> -> vector<32x64xf32>
    %62 = arith.addf %42, %61 : vector<32x64xf32>
    %c0_51 = arith.constant 0 : index
    %c12 = arith.constant 12 : index
    %c0_52 = arith.constant 0 : index
    %63 = vector.load %arg1[%c0_51, %c12, %c0_52] : memref<1x44x128xbf16, #tpu.memory_space<vmem>>, vector<1x32x128xbf16>
    %64 = vector.shape_cast %63 : vector<1x32x128xbf16> to vector<32x128xbf16>
    %c0_53 = arith.constant 0 : index
    %c12_54 = arith.constant 12 : index
    %c0_55 = arith.constant 0 : index
    %65 = vector.load %arg2[%c0_53, %c12_54, %c0_55] : memref<1x44x128xbf16, #tpu.memory_space<vmem>>, vector<1x32x128xbf16>
    %66 = vector.shape_cast %65 : vector<1x32x128xbf16> to vector<32x128xbf16>
    %67 = arith.extf %64 : vector<32x128xbf16> to vector<32x128xf32>
    %68 = arith.extf %66 : vector<32x128xbf16> to vector<32x128xf32>
    %69 = arith.addf %67, %68 : vector<32x128xf32>
    %70 = arith.truncf %69 : vector<32x128xf32> to vector<32x128xbf16>
    %c3 = arith.constant 3 : index
    %c0_56 = arith.constant 0 : index
    %c0_57 = arith.constant 0 : index
    %71 = vector.load %arg3[%c3, %c0_56, %c0_57] : memref<4x128x64xbf16, #tpu.memory_space<vmem>>, vector<1x128x64xbf16>
    %72 = vector.shape_cast %71 : vector<1x128x64xbf16> to vector<128x64xbf16>
    %cst_58 = arith.constant dense<0.000000e+00> : vector<32x64xf32>
    %73 = tpu.matmul %64, %72, %cst_58 {dimension_numbers = #tpu.dot_dimension_numbers<[1], [0], [0], [1], [0, 0, 1, 1], [], []>} : vector<32x128xbf16>, vector<128x64xbf16>, vector<32x64xf32> -> vector<32x64xf32>
    %74 = arith.addf %54, %73 : vector<32x64xf32>
    %c3_59 = arith.constant 3 : index
    %c0_60 = arith.constant 0 : index
    %c0_61 = arith.constant 0 : index
    %75 = vector.load %arg4[%c3_59, %c0_60, %c0_61] : memref<4x128x64xbf16, #tpu.memory_space<vmem>>, vector<1x128x64xbf16>
    %76 = vector.shape_cast %75 : vector<1x128x64xbf16> to vector<128x64xbf16>
    %cst_62 = arith.constant dense<0.000000e+00> : vector<32x64xf32>
    %77 = tpu.matmul %66, %76, %cst_62 {dimension_numbers = #tpu.dot_dimension_numbers<[1], [0], [0], [1], [0, 0, 1, 1], [], []>} : vector<32x128xbf16>, vector<128x64xbf16>, vector<32x64xf32> -> vector<32x64xf32>
    %78 = arith.addf %58, %77 : vector<32x64xf32>
    %c3_63 = arith.constant 3 : index
    %c0_64 = arith.constant 0 : index
    %c0_65 = arith.constant 0 : index
    %79 = vector.load %arg5[%c3_63, %c0_64, %c0_65] : memref<4x128x64xbf16, #tpu.memory_space<vmem>>, vector<1x128x64xbf16>
    %80 = vector.shape_cast %79 : vector<1x128x64xbf16> to vector<128x64xbf16>
    %cst_66 = arith.constant dense<0.000000e+00> : vector<32x64xf32>
    %81 = tpu.matmul %70, %80, %cst_66 {dimension_numbers = #tpu.dot_dimension_numbers<[1], [0], [0], [1], [0, 0, 1, 1], [], []>} : vector<32x128xbf16>, vector<128x64xbf16>, vector<32x64xf32> -> vector<32x64xf32>
    %82 = arith.addf %62, %81 : vector<32x64xf32>
    %83 = arith.subf %74, %78 : vector<32x64xf32>
    %84 = arith.subf %82, %74 : vector<32x64xf32>
    %85 = arith.subf %84, %78 : vector<32x64xf32>
    %86 = tpu.concatenate %83, %85 in 1 : vector<32x64xf32>, vector<32x64xf32> -> vector<32x128xf32>
    %c0_67 = arith.constant 0 : index
    %c0_68 = arith.constant 0 : index
    %c0_69 = arith.constant 0 : index
    %87 = vector.load %arg6[%c0_67, %c0_68, %c0_69] : memref<1x32x128xf32, #tpu.memory_space<vmem>>, vector<1x32x128xf32>
    %88 = vector.shape_cast %87 : vector<1x32x128xf32> to vector<32x128xf32>
    %89 = vector.shape_cast %86 : vector<32x128xf32> to vector<1x32x128xf32>
    tpu.vector_store %arg6[%c0_67, %c0_68, %c0_69], %89 {strides = array<i32>} : memref<1x32x128xf32, #tpu.memory_space<vmem>>, vector<1x32x128xf32>,
    return
  }
  func.func @transform_0(%arg0: i32) -> (i32, i32, i32) {
    %c0_i32 = arith.constant 0 : i32
    %c0_i32_0 = arith.constant 0 : i32
    %c0_i32_1 = arith.constant 0 : i32
    return %arg0, %c0_i32, %c0_i32_0 : i32, i32, i32
  }
  func.func @transform_1(%arg0: i32) -> (i32, i32, i32) {
    %c0_i32 = arith.constant 0 : i32
    %c0_i32_0 = arith.constant 0 : i32
    %c0_i32_1 = arith.constant 0 : i32
    return %arg0, %c0_i32, %c0_i32_0 : i32, i32, i32
  }
  func.func @transform_2(%arg0: i32) -> (i32, i32, i32) {
    %c0_i32 = arith.constant 0 : i32
    %c0_i32_0 = arith.constant 0 : i32
    %c0_i32_1 = arith.constant 0 : i32
    %c0_i32_2 = arith.constant 0 : i32
    return %c0_i32, %c0_i32_0, %c0_i32_1 : i32, i32, i32
  }
  func.func @transform_3(%arg0: i32) -> (i32, i32, i32) {
    %c0_i32 = arith.constant 0 : i32
    %c0_i32_0 = arith.constant 0 : i32
    %c0_i32_1 = arith.constant 0 : i32
    %c0_i32_2 = arith.constant 0 : i32
    return %c0_i32, %c0_i32_0, %c0_i32_1 : i32, i32, i32
  }
  func.func @transform_4(%arg0: i32) -> (i32, i32, i32) {
    %c0_i32 = arith.constant 0 : i32
    %c0_i32_0 = arith.constant 0 : i32
    %c0_i32_1 = arith.constant 0 : i32
    %c0_i32_2 = arith.constant 0 : i32
    return %c0_i32, %c0_i32_0, %c0_i32_1 : i32, i32, i32
  }
  func.func @transform_5(%arg0: i32) -> (i32, i32, i32) {
    %c0_i32 = arith.constant 0 : i32
    %c0_i32_0 = arith.constant 0 : i32
    %c0_i32_1 = arith.constant 0 : i32
    return %arg0, %c0_i32, %c0_i32_0 : i32, i32, i32
  }
}

module attributes {stable_mosaic.version = 11 : i64} {
  func.func @_bn_stats_kernel(%arg0: i32, %arg1: memref<32x128xf32, #tpu.memory_space<vmem>>, %arg2: memref<8x128xf32, #tpu.memory_space<vmem>>) attributes {dimension_semantics = [#tpu.dimension_semantics<arbitrary>], iteration_bounds = array<i64: 2>, scalar_prefetch = 0 : i64, scratch_operands = 0 : i64, tpu.core_type = #tpu.core_type<tc>, window_params = [{transform_indices = @transform_0, window_bounds = array<i64: 32, 128>}, {pipeline_mode = #tpu.pipeline_mode<synchronous>, transform_indices = @transform_1, window_bounds = array<i64: 8, 128>}]} {
    %c0_i32 = arith.constant 0 : i32
    %0 = arith.cmpi eq, %arg0, %c0_i32 : i32
    %1 = arith.extui %0 : i1 to i32
    %c0_i32_0 = arith.constant 0 : i32
    %2 = arith.cmpi ne, %1, %c0_i32_0 : i32
    scf.if %2 {
      %cst_14 = arith.constant 0.000000e+00 : f32
      %22 = vector.broadcast %cst_14 : f32 to vector<8x128xf32>
      %c0_15 = arith.constant 0 : index
      %c0_16 = arith.constant 0 : index
      %23 = vector.load %arg2[%c0_15, %c0_16] : memref<8x128xf32, #tpu.memory_space<vmem>>, vector<8x128xf32>
      tpu.vector_store %arg2[%c0_15, %c0_16], %22 {strides = array<i32>} : memref<8x128xf32, #tpu.memory_space<vmem>>, vector<8x128xf32>,
    } else {
    }
    %c0 = arith.constant 0 : index
    %c0_1 = arith.constant 0 : index
    %3 = vector.load %arg1[%c0, %c0_1] : memref<32x128xf32, #tpu.memory_space<vmem>>, vector<32x128xf32>
    %c64_i32 = arith.constant 64 : i32
    %4 = tpu.dynamic_rotate %3 by %c64_i32 dim 1 : vector<32x128xf32>, i32 -> vector<32x128xf32>
    %c0_2 = arith.constant 0 : index
    %c0_3 = arith.constant 0 : index
    %5 = vector.load %arg2[%c0_2, %c0_3] : memref<8x128xf32, #tpu.memory_space<vmem>>, vector<1x128xf32>
    %cst = arith.constant dense<0.000000e+00> : vector<128xf32>
    %6 = vector.multi_reduction <add>, %3, %cst [0] : vector<32x128xf32> to vector<128xf32>
    %7 = vector.shape_cast %6 : vector<128xf32> to vector<1x128xf32>
    %8 = arith.addf %5, %7 : vector<1x128xf32>
    %c0_4 = arith.constant 0 : index
    %c0_5 = arith.constant 0 : index
    %9 = vector.load %arg2[%c0_4, %c0_5] : memref<8x128xf32, #tpu.memory_space<vmem>>, vector<1x128xf32>
    tpu.vector_store %arg2[%c0_4, %c0_5], %8 {strides = array<i32>} : memref<8x128xf32, #tpu.memory_space<vmem>>, vector<1x128xf32>,
    %c1 = arith.constant 1 : index
    %c0_6 = arith.constant 0 : index
    %10 = vector.load %arg2[%c1, %c0_6] : memref<8x128xf32, #tpu.memory_space<vmem>>, vector<1x128xf32>
    %11 = arith.mulf %3, %3 : vector<32x128xf32>
    %cst_7 = arith.constant dense<0.000000e+00> : vector<128xf32>
    %12 = vector.multi_reduction <add>, %11, %cst_7 [0] : vector<32x128xf32> to vector<128xf32>
    %13 = vector.shape_cast %12 : vector<128xf32> to vector<1x128xf32>
    %14 = arith.addf %10, %13 : vector<1x128xf32>
    %c1_8 = arith.constant 1 : index
    %c0_9 = arith.constant 0 : index
    %15 = vector.load %arg2[%c1_8, %c0_9] : memref<8x128xf32, #tpu.memory_space<vmem>>, vector<1x128xf32>
    tpu.vector_store %arg2[%c1_8, %c0_9], %14 {strides = array<i32>} : memref<8x128xf32, #tpu.memory_space<vmem>>, vector<1x128xf32>,
    %c2 = arith.constant 2 : index
    %c0_10 = arith.constant 0 : index
    %16 = vector.load %arg2[%c2, %c0_10] : memref<8x128xf32, #tpu.memory_space<vmem>>, vector<1x128xf32>
    %17 = arith.mulf %3, %4 : vector<32x128xf32>
    %cst_11 = arith.constant dense<0.000000e+00> : vector<128xf32>
    %18 = vector.multi_reduction <add>, %17, %cst_11 [0] : vector<32x128xf32> to vector<128xf32>
    %19 = vector.shape_cast %18 : vector<128xf32> to vector<1x128xf32>
    %20 = arith.addf %16, %19 : vector<1x128xf32>
    %c2_12 = arith.constant 2 : index
    %c0_13 = arith.constant 0 : index
    %21 = vector.load %arg2[%c2_12, %c0_13] : memref<8x128xf32, #tpu.memory_space<vmem>>, vector<1x128xf32>
    tpu.vector_store %arg2[%c2_12, %c0_13], %20 {strides = array<i32>} : memref<8x128xf32, #tpu.memory_space<vmem>>, vector<1x128xf32>,
    return
  }
  func.func @transform_0(%arg0: i32) -> (i32, i32) {
    %c0_i32 = arith.constant 0 : i32
    %c0_i32_0 = arith.constant 0 : i32
    return %arg0, %c0_i32 : i32, i32
  }
  func.func @transform_1(%arg0: i32) -> (i32, i32) {
    %c0_i32 = arith.constant 0 : i32
    %c0_i32_0 = arith.constant 0 : i32
    %c0_i32_1 = arith.constant 0 : i32
    return %c0_i32, %c0_i32_0 : i32, i32
  }
}

module attributes {stable_mosaic.version = 11 : i64} {
  func.func @_bn_apply_kernel(%arg0: i32, %arg1: memref<32x128xf32, #tpu.memory_space<vmem>>, %arg2: memref<1x128xf32, #tpu.memory_space<vmem>>, %arg3: memref<1x128xf32, #tpu.memory_space<vmem>>, %arg4: memref<1x128xf32, #tpu.memory_space<vmem>>, %arg5: memref<32x128xbf16, #tpu.memory_space<vmem>>) attributes {dimension_semantics = [#tpu.dimension_semantics<parallel>], iteration_bounds = array<i64: 2>, scalar_prefetch = 0 : i64, scratch_operands = 0 : i64, tpu.core_type = #tpu.core_type<tc>, window_params = [{transform_indices = @transform_0, window_bounds = array<i64: 32, 128>}, {pipeline_mode = #tpu.pipeline_mode<synchronous>, transform_indices = @transform_1, window_bounds = array<i64: 1, 128>}, {pipeline_mode = #tpu.pipeline_mode<synchronous>, transform_indices = @transform_2, window_bounds = array<i64: 1, 128>}, {pipeline_mode = #tpu.pipeline_mode<synchronous>, transform_indices = @transform_3, window_bounds = array<i64: 1, 128>}, {transform_indices = @transform_4, window_bounds = array<i64: 32, 128>}]} {
    %c0 = arith.constant 0 : index
    %c0_0 = arith.constant 0 : index
    %0 = vector.load %arg1[%c0, %c0_0] : memref<32x128xf32, #tpu.memory_space<vmem>>, vector<32x128xf32>
    %c64_i32 = arith.constant 64 : i32
    %1 = tpu.dynamic_rotate %0 by %c64_i32 dim 1 : vector<32x128xf32>, i32 -> vector<32x128xf32>
    %c0_1 = arith.constant 0 : index
    %c0_2 = arith.constant 0 : index
    %2 = vector.load %arg2[%c0_1, %c0_2] : memref<1x128xf32, #tpu.memory_space<vmem>>, vector<1x128xf32>
    %3 = vector.broadcast %2 : vector<1x128xf32> to vector<32x128xf32>
    %4 = arith.mulf %3, %0 : vector<32x128xf32>
    %c0_3 = arith.constant 0 : index
    %c0_4 = arith.constant 0 : index
    %5 = vector.load %arg3[%c0_3, %c0_4] : memref<1x128xf32, #tpu.memory_space<vmem>>, vector<1x128xf32>
    %6 = vector.broadcast %5 : vector<1x128xf32> to vector<32x128xf32>
    %7 = arith.mulf %6, %1 : vector<32x128xf32>
    %8 = arith.addf %4, %7 : vector<32x128xf32>
    %c0_5 = arith.constant 0 : index
    %c0_6 = arith.constant 0 : index
    %9 = vector.load %arg4[%c0_5, %c0_6] : memref<1x128xf32, #tpu.memory_space<vmem>>, vector<1x128xf32>
    %10 = vector.broadcast %9 : vector<1x128xf32> to vector<32x128xf32>
    %11 = arith.addf %8, %10 : vector<32x128xf32>
    %cst = arith.constant 0.000000e+00 : f32
    %12 = vector.broadcast %cst : f32 to vector<32x128xf32>
    %13 = arith.maximumf %11, %12 : vector<32x128xf32>
    %14 = arith.truncf %13 : vector<32x128xf32> to vector<32x128xbf16>
    %c0_7 = arith.constant 0 : index
    %c0_8 = arith.constant 0 : index
    %15 = vector.load %arg5[%c0_7, %c0_8] : memref<32x128xbf16, #tpu.memory_space<vmem>>, vector<32x128xbf16>
    tpu.vector_store %arg5[%c0_7, %c0_8], %14 {strides = array<i32>} : memref<32x128xbf16, #tpu.memory_space<vmem>>, vector<32x128xbf16>,
    return
  }
  func.func @transform_0(%arg0: i32) -> (i32, i32) {
    %c0_i32 = arith.constant 0 : i32
    %c0_i32_0 = arith.constant 0 : i32
    return %arg0, %c0_i32 : i32, i32
  }
  func.func @transform_1(%arg0: i32) -> (i32, i32) {
    %c0_i32 = arith.constant 0 : i32
    %c0_i32_0 = arith.constant 0 : i32
    %c0_i32_1 = arith.constant 0 : i32
    return %c0_i32, %c0_i32_0 : i32, i32
  }
  func.func @transform_2(%arg0: i32) -> (i32, i32) {
    %c0_i32 = arith.constant 0 : i32
    %c0_i32_0 = arith.constant 0 : i32
    %c0_i32_1 = arith.constant 0 : i32
    return %c0_i32, %c0_i32_0 : i32, i32
  }
  func.func @transform_3(%arg0: i32) -> (i32, i32) {
    %c0_i32 = arith.constant 0 : i32
    %c0_i32_0 = arith.constant 0 : i32
    %c0_i32_1 = arith.constant 0 : i32
    return %c0_i32, %c0_i32_0 : i32, i32
  }
  func.func @transform_4(%arg0: i32) -> (i32, i32) {
    %c0_i32 = arith.constant 0 : i32
    %c0_i32_0 = arith.constant 0 : i32
    return %arg0, %c0_i32 : i32, i32
  }
}

module attributes {stable_mosaic.version = 11 : i64} {
  func.func @_conv_gauss_kernel(%arg0: i32, %arg1: memref<1x12x256xbf16, #tpu.memory_space<vmem>>, %arg2: memref<1x12x256xbf16, #tpu.memory_space<vmem>>, %arg3: memref<2x256x128xbf16, #tpu.memory_space<vmem>>, %arg4: memref<2x256x128xbf16, #tpu.memory_space<vmem>>, %arg5: memref<2x256x128xbf16, #tpu.memory_space<vmem>>, %arg6: memref<1x8x256xf32, #tpu.memory_space<vmem>>) attributes {dimension_semantics = [#tpu.dimension_semantics<parallel>], iteration_bounds = array<i64: 2>, scalar_prefetch = 0 : i64, scratch_operands = 0 : i64, tpu.core_type = #tpu.core_type<tc>, window_params = [{transform_indices = @transform_0, window_bounds = array<i64: 1, 12, 256>}, {transform_indices = @transform_1, window_bounds = array<i64: 1, 12, 256>}, {pipeline_mode = #tpu.pipeline_mode<synchronous>, transform_indices = @transform_2, window_bounds = array<i64: 2, 256, 128>}, {pipeline_mode = #tpu.pipeline_mode<synchronous>, transform_indices = @transform_3, window_bounds = array<i64: 2, 256, 128>}, {pipeline_mode = #tpu.pipeline_mode<synchronous>, transform_indices = @transform_4, window_bounds = array<i64: 2, 256, 128>}, {transform_indices = @transform_5, window_bounds = array<i64: 1, 8, 256>}]} {
    %cst = arith.constant 0.000000e+00 : f32
    %0 = vector.broadcast %cst : f32 to vector<8x128xf32>
    %cst_0 = arith.constant 0.000000e+00 : f32
    %1 = vector.broadcast %cst_0 : f32 to vector<8x128xf32>
    %cst_1 = arith.constant 0.000000e+00 : f32
    %2 = vector.broadcast %cst_1 : f32 to vector<8x128xf32>
    %c0 = arith.constant 0 : index
    %c0_2 = arith.constant 0 : index
    %c0_3 = arith.constant 0 : index
    %3 = vector.load %arg1[%c0, %c0_2, %c0_3] : memref<1x12x256xbf16, #tpu.memory_space<vmem>>, vector<1x8x256xbf16>
    %4 = vector.shape_cast %3 : vector<1x8x256xbf16> to vector<8x256xbf16>
    %c0_4 = arith.constant 0 : index
    %c0_5 = arith.constant 0 : index
    %c0_6 = arith.constant 0 : index
    %5 = vector.load %arg2[%c0_4, %c0_5, %c0_6] : memref<1x12x256xbf16, #tpu.memory_space<vmem>>, vector<1x8x256xbf16>
    %6 = vector.shape_cast %5 : vector<1x8x256xbf16> to vector<8x256xbf16>
    %7 = arith.extf %4 : vector<8x256xbf16> to vector<8x256xf32>
    %8 = arith.extf %6 : vector<8x256xbf16> to vector<8x256xf32>
    %9 = arith.addf %7, %8 : vector<8x256xf32>
    %10 = arith.truncf %9 : vector<8x256xf32> to vector<8x256xbf16>
    %c0_7 = arith.constant 0 : index
    %c0_8 = arith.constant 0 : index
    %c0_9 = arith.constant 0 : index
    %11 = vector.load %arg3[%c0_7, %c0_8, %c0_9] : memref<2x256x128xbf16, #tpu.memory_space<vmem>>, vector<1x256x128xbf16>
    %12 = vector.shape_cast %11 : vector<1x256x128xbf16> to vector<256x128xbf16>
    %cst_10 = arith.constant dense<0.000000e+00> : vector<8x128xf32>
    %13 = tpu.matmul %4, %12, %cst_10 {dimension_numbers = #tpu.dot_dimension_numbers<[1], [0], [0], [1], [0, 0, 1, 1], [], []>} : vector<8x256xbf16>, vector<256x128xbf16>, vector<8x128xf32> -> vector<8x128xf32>
    %14 = arith.addf %0, %13 : vector<8x128xf32>
    %c0_11 = arith.constant 0 : index
    %c0_12 = arith.constant 0 : index
    %c0_13 = arith.constant 0 : index
    %15 = vector.load %arg4[%c0_11, %c0_12, %c0_13] : memref<2x256x128xbf16, #tpu.memory_space<vmem>>, vector<1x256x128xbf16>
    %16 = vector.shape_cast %15 : vector<1x256x128xbf16> to vector<256x128xbf16>
    %cst_14 = arith.constant dense<0.000000e+00> : vector<8x128xf32>
    %17 = tpu.matmul %6, %16, %cst_14 {dimension_numbers = #tpu.dot_dimension_numbers<[1], [0], [0], [1], [0, 0, 1, 1], [], []>} : vector<8x256xbf16>, vector<256x128xbf16>, vector<8x128xf32> -> vector<8x128xf32>
    %18 = arith.addf %1, %17 : vector<8x128xf32>
    %c0_15 = arith.constant 0 : index
    %c0_16 = arith.constant 0 : index
    %c0_17 = arith.constant 0 : index
    %19 = vector.load %arg5[%c0_15, %c0_16, %c0_17] : memref<2x256x128xbf16, #tpu.memory_space<vmem>>, vector<1x256x128xbf16>
    %20 = vector.shape_cast %19 : vector<1x256x128xbf16> to vector<256x128xbf16>
    %cst_18 = arith.constant dense<0.000000e+00> : vector<8x128xf32>
    %21 = tpu.matmul %10, %20, %cst_18 {dimension_numbers = #tpu.dot_dimension_numbers<[1], [0], [0], [1], [0, 0, 1, 1], [], []>} : vector<8x256xbf16>, vector<256x128xbf16>, vector<8x128xf32> -> vector<8x128xf32>
    %22 = arith.addf %2, %21 : vector<8x128xf32>
    %c0_19 = arith.constant 0 : index
    %c4 = arith.constant 4 : index
    %c0_20 = arith.constant 0 : index
    %23 = vector.load %arg1[%c0_19, %c4, %c0_20] : memref<1x12x256xbf16, #tpu.memory_space<vmem>>, vector<1x8x256xbf16>
    %24 = vector.shape_cast %23 : vector<1x8x256xbf16> to vector<8x256xbf16>
    %c0_21 = arith.constant 0 : index
    %c4_22 = arith.constant 4 : index
    %c0_23 = arith.constant 0 : index
    %25 = vector.load %arg2[%c0_21, %c4_22, %c0_23] : memref<1x12x256xbf16, #tpu.memory_space<vmem>>, vector<1x8x256xbf16>
    %26 = vector.shape_cast %25 : vector<1x8x256xbf16> to vector<8x256xbf16>
    %27 = arith.extf %24 : vector<8x256xbf16> to vector<8x256xf32>
    %28 = arith.extf %26 : vector<8x256xbf16> to vector<8x256xf32>
    %29 = arith.addf %27, %28 : vector<8x256xf32>
    %30 = arith.truncf %29 : vector<8x256xf32> to vector<8x256xbf16>
    %c1 = arith.constant 1 : index
    %c0_24 = arith.constant 0 : index
    %c0_25 = arith.constant 0 : index
    %31 = vector.load %arg3[%c1, %c0_24, %c0_25] : memref<2x256x128xbf16, #tpu.memory_space<vmem>>, vector<1x256x128xbf16>
    %32 = vector.shape_cast %31 : vector<1x256x128xbf16> to vector<256x128xbf16>
    %cst_26 = arith.constant dense<0.000000e+00> : vector<8x128xf32>
    %33 = tpu.matmul %24, %32, %cst_26 {dimension_numbers = #tpu.dot_dimension_numbers<[1], [0], [0], [1], [0, 0, 1, 1], [], []>} : vector<8x256xbf16>, vector<256x128xbf16>, vector<8x128xf32> -> vector<8x128xf32>
    %34 = arith.addf %14, %33 : vector<8x128xf32>
    %c1_27 = arith.constant 1 : index
    %c0_28 = arith.constant 0 : index
    %c0_29 = arith.constant 0 : index
    %35 = vector.load %arg4[%c1_27, %c0_28, %c0_29] : memref<2x256x128xbf16, #tpu.memory_space<vmem>>, vector<1x256x128xbf16>
    %36 = vector.shape_cast %35 : vector<1x256x128xbf16> to vector<256x128xbf16>
    %cst_30 = arith.constant dense<0.000000e+00> : vector<8x128xf32>
    %37 = tpu.matmul %26, %36, %cst_30 {dimension_numbers = #tpu.dot_dimension_numbers<[1], [0], [0], [1], [0, 0, 1, 1], [], []>} : vector<8x256xbf16>, vector<256x128xbf16>, vector<8x128xf32> -> vector<8x128xf32>
    %38 = arith.addf %18, %37 : vector<8x128xf32>
    %c1_31 = arith.constant 1 : index
    %c0_32 = arith.constant 0 : index
    %c0_33 = arith.constant 0 : index
    %39 = vector.load %arg5[%c1_31, %c0_32, %c0_33] : memref<2x256x128xbf16, #tpu.memory_space<vmem>>, vector<1x256x128xbf16>
    %40 = vector.shape_cast %39 : vector<1x256x128xbf16> to vector<256x128xbf16>
    %cst_34 = arith.constant dense<0.000000e+00> : vector<8x128xf32>
    %41 = tpu.matmul %30, %40, %cst_34 {dimension_numbers = #tpu.dot_dimension_numbers<[1], [0], [0], [1], [0, 0, 1, 1], [], []>} : vector<8x256xbf16>, vector<256x128xbf16>, vector<8x128xf32> -> vector<8x128xf32>
    %42 = arith.addf %22, %41 : vector<8x128xf32>
    %43 = arith.subf %34, %38 : vector<8x128xf32>
    %44 = arith.subf %42, %34 : vector<8x128xf32>
    %45 = arith.subf %44, %38 : vector<8x128xf32>
    %46 = tpu.concatenate %43, %45 in 1 : vector<8x128xf32>, vector<8x128xf32> -> vector<8x256xf32>
    %c0_35 = arith.constant 0 : index
    %c0_36 = arith.constant 0 : index
    %c0_37 = arith.constant 0 : index
    %47 = vector.load %arg6[%c0_35, %c0_36, %c0_37] : memref<1x8x256xf32, #tpu.memory_space<vmem>>, vector<1x8x256xf32>
    %48 = vector.shape_cast %47 : vector<1x8x256xf32> to vector<8x256xf32>
    %49 = vector.shape_cast %46 : vector<8x256xf32> to vector<1x8x256xf32>
    tpu.vector_store %arg6[%c0_35, %c0_36, %c0_37], %49 {strides = array<i32>} : memref<1x8x256xf32, #tpu.memory_space<vmem>>, vector<1x8x256xf32>,
    return
  }
  func.func @transform_0(%arg0: i32) -> (i32, i32, i32) {
    %c0_i32 = arith.constant 0 : i32
    %c0_i32_0 = arith.constant 0 : i32
    %c0_i32_1 = arith.constant 0 : i32
    return %arg0, %c0_i32, %c0_i32_0 : i32, i32, i32
  }
  func.func @transform_1(%arg0: i32) -> (i32, i32, i32) {
    %c0_i32 = arith.constant 0 : i32
    %c0_i32_0 = arith.constant 0 : i32
    %c0_i32_1 = arith.constant 0 : i32
    return %arg0, %c0_i32, %c0_i32_0 : i32, i32, i32
  }
  func.func @transform_2(%arg0: i32) -> (i32, i32, i32) {
    %c0_i32 = arith.constant 0 : i32
    %c0_i32_0 = arith.constant 0 : i32
    %c0_i32_1 = arith.constant 0 : i32
    %c0_i32_2 = arith.constant 0 : i32
    return %c0_i32, %c0_i32_0, %c0_i32_1 : i32, i32, i32
  }
  func.func @transform_3(%arg0: i32) -> (i32, i32, i32) {
    %c0_i32 = arith.constant 0 : i32
    %c0_i32_0 = arith.constant 0 : i32
    %c0_i32_1 = arith.constant 0 : i32
    %c0_i32_2 = arith.constant 0 : i32
    return %c0_i32, %c0_i32_0, %c0_i32_1 : i32, i32, i32
  }
  func.func @transform_4(%arg0: i32) -> (i32, i32, i32) {
    %c0_i32 = arith.constant 0 : i32
    %c0_i32_0 = arith.constant 0 : i32
    %c0_i32_1 = arith.constant 0 : i32
    %c0_i32_2 = arith.constant 0 : i32
    return %c0_i32, %c0_i32_0, %c0_i32_1 : i32, i32, i32
  }
  func.func @transform_5(%arg0: i32) -> (i32, i32, i32) {
    %c0_i32 = arith.constant 0 : i32
    %c0_i32_0 = arith.constant 0 : i32
    %c0_i32_1 = arith.constant 0 : i32
    return %arg0, %c0_i32, %c0_i32_0 : i32, i32, i32
  }
}

module attributes {stable_mosaic.version = 11 : i64} {
  func.func @_bn_stats_kernel(%arg0: i32, %arg1: memref<16x256xf32, #tpu.memory_space<vmem>>, %arg2: memref<8x256xf32, #tpu.memory_space<vmem>>) attributes {dimension_semantics = [#tpu.dimension_semantics<arbitrary>], iteration_bounds = array<i64: 1>, scalar_prefetch = 0 : i64, scratch_operands = 0 : i64, tpu.core_type = #tpu.core_type<tc>, window_params = [{transform_indices = @transform_0, window_bounds = array<i64: 16, 256>}, {pipeline_mode = #tpu.pipeline_mode<synchronous>, transform_indices = @transform_1, window_bounds = array<i64: 8, 256>}]} {
    %c0_i32 = arith.constant 0 : i32
    %0 = arith.cmpi eq, %arg0, %c0_i32 : i32
    %1 = arith.extui %0 : i1 to i32
    %c0_i32_0 = arith.constant 0 : i32
    %2 = arith.cmpi ne, %1, %c0_i32_0 : i32
    scf.if %2 {
      %cst_14 = arith.constant 0.000000e+00 : f32
      %22 = vector.broadcast %cst_14 : f32 to vector<8x256xf32>
      %c0_15 = arith.constant 0 : index
      %c0_16 = arith.constant 0 : index
      %23 = vector.load %arg2[%c0_15, %c0_16] : memref<8x256xf32, #tpu.memory_space<vmem>>, vector<8x256xf32>
      tpu.vector_store %arg2[%c0_15, %c0_16], %22 {strides = array<i32>} : memref<8x256xf32, #tpu.memory_space<vmem>>, vector<8x256xf32>,
    } else {
    }
    %c0 = arith.constant 0 : index
    %c0_1 = arith.constant 0 : index
    %3 = vector.load %arg1[%c0, %c0_1] : memref<16x256xf32, #tpu.memory_space<vmem>>, vector<16x256xf32>
    %c128_i32 = arith.constant 128 : i32
    %4 = tpu.dynamic_rotate %3 by %c128_i32 dim 1 : vector<16x256xf32>, i32 -> vector<16x256xf32>
    %c0_2 = arith.constant 0 : index
    %c0_3 = arith.constant 0 : index
    %5 = vector.load %arg2[%c0_2, %c0_3] : memref<8x256xf32, #tpu.memory_space<vmem>>, vector<1x256xf32>
    %cst = arith.constant dense<0.000000e+00> : vector<256xf32>
    %6 = vector.multi_reduction <add>, %3, %cst [0] : vector<16x256xf32> to vector<256xf32>
    %7 = vector.shape_cast %6 : vector<256xf32> to vector<1x256xf32>
    %8 = arith.addf %5, %7 : vector<1x256xf32>
    %c0_4 = arith.constant 0 : index
    %c0_5 = arith.constant 0 : index
    %9 = vector.load %arg2[%c0_4, %c0_5] : memref<8x256xf32, #tpu.memory_space<vmem>>, vector<1x256xf32>
    tpu.vector_store %arg2[%c0_4, %c0_5], %8 {strides = array<i32>} : memref<8x256xf32, #tpu.memory_space<vmem>>, vector<1x256xf32>,
    %c1 = arith.constant 1 : index
    %c0_6 = arith.constant 0 : index
    %10 = vector.load %arg2[%c1, %c0_6] : memref<8x256xf32, #tpu.memory_space<vmem>>, vector<1x256xf32>
    %11 = arith.mulf %3, %3 : vector<16x256xf32>
    %cst_7 = arith.constant dense<0.000000e+00> : vector<256xf32>
    %12 = vector.multi_reduction <add>, %11, %cst_7 [0] : vector<16x256xf32> to vector<256xf32>
    %13 = vector.shape_cast %12 : vector<256xf32> to vector<1x256xf32>
    %14 = arith.addf %10, %13 : vector<1x256xf32>
    %c1_8 = arith.constant 1 : index
    %c0_9 = arith.constant 0 : index
    %15 = vector.load %arg2[%c1_8, %c0_9] : memref<8x256xf32, #tpu.memory_space<vmem>>, vector<1x256xf32>
    tpu.vector_store %arg2[%c1_8, %c0_9], %14 {strides = array<i32>} : memref<8x256xf32, #tpu.memory_space<vmem>>, vector<1x256xf32>,
    %c2 = arith.constant 2 : index
    %c0_10 = arith.constant 0 : index
    %16 = vector.load %arg2[%c2, %c0_10] : memref<8x256xf32, #tpu.memory_space<vmem>>, vector<1x256xf32>
    %17 = arith.mulf %3, %4 : vector<16x256xf32>
    %cst_11 = arith.constant dense<0.000000e+00> : vector<256xf32>
    %18 = vector.multi_reduction <add>, %17, %cst_11 [0] : vector<16x256xf32> to vector<256xf32>
    %19 = vector.shape_cast %18 : vector<256xf32> to vector<1x256xf32>
    %20 = arith.addf %16, %19 : vector<1x256xf32>
    %c2_12 = arith.constant 2 : index
    %c0_13 = arith.constant 0 : index
    %21 = vector.load %arg2[%c2_12, %c0_13] : memref<8x256xf32, #tpu.memory_space<vmem>>, vector<1x256xf32>
    tpu.vector_store %arg2[%c2_12, %c0_13], %20 {strides = array<i32>} : memref<8x256xf32, #tpu.memory_space<vmem>>, vector<1x256xf32>,
    return
  }
  func.func @transform_0(%arg0: i32) -> (i32, i32) {
    %c0_i32 = arith.constant 0 : i32
    %c0_i32_0 = arith.constant 0 : i32
    return %arg0, %c0_i32 : i32, i32
  }
  func.func @transform_1(%arg0: i32) -> (i32, i32) {
    %c0_i32 = arith.constant 0 : i32
    %c0_i32_0 = arith.constant 0 : i32
    %c0_i32_1 = arith.constant 0 : i32
    return %c0_i32, %c0_i32_0 : i32, i32
  }
}

module attributes {stable_mosaic.version = 11 : i64} {
  func.func @_bn_apply_kernel(%arg0: i32, %arg1: memref<16x256xf32, #tpu.memory_space<vmem>>, %arg2: memref<1x256xf32, #tpu.memory_space<vmem>>, %arg3: memref<1x256xf32, #tpu.memory_space<vmem>>, %arg4: memref<1x256xf32, #tpu.memory_space<vmem>>, %arg5: memref<16x256xf32, #tpu.memory_space<vmem>>) attributes {dimension_semantics = [#tpu.dimension_semantics<parallel>], iteration_bounds = array<i64: 1>, scalar_prefetch = 0 : i64, scratch_operands = 0 : i64, tpu.core_type = #tpu.core_type<tc>, window_params = [{transform_indices = @transform_0, window_bounds = array<i64: 16, 256>}, {pipeline_mode = #tpu.pipeline_mode<synchronous>, transform_indices = @transform_1, window_bounds = array<i64: 1, 256>}, {pipeline_mode = #tpu.pipeline_mode<synchronous>, transform_indices = @transform_2, window_bounds = array<i64: 1, 256>}, {pipeline_mode = #tpu.pipeline_mode<synchronous>, transform_indices = @transform_3, window_bounds = array<i64: 1, 256>}, {transform_indices = @transform_4, window_bounds = array<i64: 16, 256>}]} {
    %c0 = arith.constant 0 : index
    %c0_0 = arith.constant 0 : index
    %0 = vector.load %arg1[%c0, %c0_0] : memref<16x256xf32, #tpu.memory_space<vmem>>, vector<16x256xf32>
    %c128_i32 = arith.constant 128 : i32
    %1 = tpu.dynamic_rotate %0 by %c128_i32 dim 1 : vector<16x256xf32>, i32 -> vector<16x256xf32>
    %c0_1 = arith.constant 0 : index
    %c0_2 = arith.constant 0 : index
    %2 = vector.load %arg2[%c0_1, %c0_2] : memref<1x256xf32, #tpu.memory_space<vmem>>, vector<1x256xf32>
    %3 = vector.broadcast %2 : vector<1x256xf32> to vector<16x256xf32>
    %4 = arith.mulf %3, %0 : vector<16x256xf32>
    %c0_3 = arith.constant 0 : index
    %c0_4 = arith.constant 0 : index
    %5 = vector.load %arg3[%c0_3, %c0_4] : memref<1x256xf32, #tpu.memory_space<vmem>>, vector<1x256xf32>
    %6 = vector.broadcast %5 : vector<1x256xf32> to vector<16x256xf32>
    %7 = arith.mulf %6, %1 : vector<16x256xf32>
    %8 = arith.addf %4, %7 : vector<16x256xf32>
    %c0_5 = arith.constant 0 : index
    %c0_6 = arith.constant 0 : index
    %9 = vector.load %arg4[%c0_5, %c0_6] : memref<1x256xf32, #tpu.memory_space<vmem>>, vector<1x256xf32>
    %10 = vector.broadcast %9 : vector<1x256xf32> to vector<16x256xf32>
    %11 = arith.addf %8, %10 : vector<16x256xf32>
    %cst = arith.constant 0.000000e+00 : f32
    %12 = vector.broadcast %cst : f32 to vector<16x256xf32>
    %13 = arith.maximumf %11, %12 : vector<16x256xf32>
    %c0_7 = arith.constant 0 : index
    %c0_8 = arith.constant 0 : index
    %14 = vector.load %arg5[%c0_7, %c0_8] : memref<16x256xf32, #tpu.memory_space<vmem>>, vector<16x256xf32>
    tpu.vector_store %arg5[%c0_7, %c0_8], %13 {strides = array<i32>} : memref<16x256xf32, #tpu.memory_space<vmem>>, vector<16x256xf32>,
    return
  }
  func.func @transform_0(%arg0: i32) -> (i32, i32) {
    %c0_i32 = arith.constant 0 : i32
    %c0_i32_0 = arith.constant 0 : i32
    return %arg0, %c0_i32 : i32, i32
  }
  func.func @transform_1(%arg0: i32) -> (i32, i32) {
    %c0_i32 = arith.constant 0 : i32
    %c0_i32_0 = arith.constant 0 : i32
    %c0_i32_1 = arith.constant 0 : i32
    return %c0_i32, %c0_i32_0 : i32, i32
  }
  func.func @transform_2(%arg0: i32) -> (i32, i32) {
    %c0_i32 = arith.constant 0 : i32
    %c0_i32_0 = arith.constant 0 : i32
    %c0_i32_1 = arith.constant 0 : i32
    return %c0_i32, %c0_i32_0 : i32, i32
  }
  func.func @transform_3(%arg0: i32) -> (i32, i32) {
    %c0_i32 = arith.constant 0 : i32
    %c0_i32_0 = arith.constant 0 : i32
    %c0_i32_1 = arith.constant 0 : i32
    return %c0_i32, %c0_i32_0 : i32, i32
  }
  func.func @transform_4(%arg0: i32) -> (i32, i32) {
    %c0_i32 = arith.constant 0 : i32
    %c0_i32_0 = arith.constant 0 : i32
    return %arg0, %c0_i32 : i32, i32
  }
}

</mosaic_0001>

<llo_original>
// kernel: base_encoder_forward.10
$region0: #{base_encoder_forward.10}
  #allocation0 [shape = 'u32[]', space=smem, size = 0x4, offset = 0x4, fixed_abs, tag = 'smem constant byte address 0x4 - core index']
  #allocation1 [shape = 'u32[72,128]{1,0:T(1,128)}', space=vmem, size = 0x9000, scoped, tag = 'internal scratch']
  %s0 = inlined_call_operand.vmem [shape: f32[128,128], index: 0, kind: input, shape index: {}]
  %s1 = inlined_call_operand.vmem [shape: f32[8,128], index: 1, kind: output, shape index: {}]
  %s2 = sld [smem:[#allocation0]]
  $region41: #{base_encoder_forward.10} parent=0
    _
  %s4 = ssub.s32 1, %s2
  %s5 = scalar_select 0, %s4, %s2
  loop: start=0, step=1, limit=6
  $region2: #{base_encoder_forward.10} parent=0 // loop_pre_header
    _
  $region3: #{base_encoder_forward.10} parent=0 // loop_header
    %s7 = sphi 0, %s11
    %p8 = scmp.ge.s32.totalorder %s7, 6
    %s17 = sphi 0, %s19
    %s20 = sphi 0, %s17
    %s21 = sphi 0, %s20
    %s37 = sphi 0, %s21
    %s41 = sphi 0, %s41
    %s43 = sphi 0, %s41
    %s44 = sphi 0, %s43
    %s58 = sphi 0, %s44
  $region4: #{base_encoder_forward.10} parent=0 // loop_header_branch
    %10 = sbr.rel (%p8) target = $region8
  $region5: #{base_encoder_forward.10} parent=0 // loop_body
    %s12 = ssub.s32 %s7, 1
    %s13 = ssub.s32 %s7, 2
    %s14 = sadd.s32 %s7, 1
    %s15 = ssub.s32 %s7, %s14
    %p16 = scmp.eq.s32.totalorder %s15, 0
    %s18 = sadd.s32 %s17, 1
    %s19 = scalar_select %p16, %s17, %s18
    %p22 = pneg %p16
    %p23 = scmp.eq.s32.totalorder %s7, 3
    %p24 = por %p22, %p23
    %p25 = scmp.ne.s32.totalorder %s17, %s20
    %p26 = scmp.eq.s32.totalorder %s7, 0
    %p27 = por %p25, %p26
    %p28 = scmp.ne.s32.totalorder %s17, %s20
    %p29 = scmp.eq.s32.totalorder %s12, 3
    %p30 = por %p28, %p29
    %p31 = scmp.ne.s32.totalorder %s20, %s21
    %p32 = scmp.eq.s32.totalorder %s12, 0
    %p33 = por %p31, %p32
    %p34 = scmp.ne.s32.totalorder %s20, %s21
    %p35 = scmp.eq.s32.totalorder %s13, 3
    %p36 = por %p34, %p35
    %p38 = scmp.ne.s32.totalorder %s21, %s37
    %p39 = scmp.eq.s32.totalorder %s13, 0
    %p40 = por %p38, %p39
    %s42 = sadd.s32 %s41, 1
    %p45 = scmp.eq.s32.totalorder %s7, 3
    %p46 = scmp.ne.s32.totalorder %s41, %s43
    %p47 = scmp.eq.s32.totalorder %s7, 0
    %p48 = por %p46, %p47
    %p49 = scmp.ne.s32.totalorder %s41, %s43
    %p50 = scmp.eq.s32.totalorder %s12, 3
    %p51 = por %p49, %p50
    %p52 = scmp.ne.s32.totalorder %s43, %s44
    %p53 = scmp.eq.s32.totalorder %s12, 0
    %p54 = por %p52, %p53
    %p55 = scmp.ne.s32.totalorder %s43, %s44
    %p56 = scmp.eq.s32.totalorder %s13, 3
    %p57 = por %p55, %p56
    %p59 = scmp.ne.s32.totalorder %s44, %s58
    %p60 = scmp.eq.s32.totalorder %s13, 0
    %p61 = por %p59, %p60
    %p62 = scmp.le.s32.totalorder 1, %s7
    %p63 = scmp.lt.s32.totalorder %s7, 5
    %p64 = pnand %p62, %p63
    %p65 = pneg %p64
    // Predicated region
    $region9: #{base_encoder_forward.10} parent=5 // pred_check
      _
    $region10: #{base_encoder_forward.10} parent=5 // pred_check_branch
      %67 = sbr.rel (%p64) target = $region12
    $region11: #{base_encoder_forward.10} parent=5 // pred_region
      %s68 = ssub.s32 %s7, 1
    $region12: #{base_encoder_forward.10} parent=5 // pred_fallthru
      _
    %p69 = scmp.lt.s32.totalorder %s7, 4
    // Predicated region
    $region13: #{base_encoder_forward.10} parent=5 // pred_check
      %p70 = pneg %p69
    $region14: #{base_encoder_forward.10} parent=5 // pred_check_branch
      %72 = sbr.rel (%p70) target = $region16
    $region15: #{base_encoder_forward.10} parent=5 // pred_region
      // Predicated region
      $region17: #{base_encoder_forward.10} parent=15 // pred_check
        %p73 = pneg %p27
      $region18: #{base_encoder_forward.10} parent=15 // pred_check_branch
        %75 = sbr.rel (%p73) target = $region20
      $region19: #{base_encoder_forward.10} parent=15 // pred_region
        %s76 = smul.u32 4, %s7
        %p77 = scmp.lt.s32.totalorder %s76, 15
        %s78 = scalar_select %p77, %s76, 15
        %s79 = smul.addr %s78, 8
        %s80 = scalar_lea.vmem %s0, %s79
        %s81 = smul.u32 4, %s7
      $region20: #{base_encoder_forward.10} parent=15 // pred_fallthru
        _
    $region16: #{base_encoder_forward.10} parent=5 // pred_fallthru
      _
    %p82 = scmp.le.s32.totalorder 1, %s7
    %p83 = scmp.lt.s32.totalorder %s7, 5
    %p84 = pnand %p82, %p83
    %p85 = pneg %p84
    // Predicated region
    $region21: #{base_encoder_forward.10} parent=5 // pred_check
      _
    $region22: #{base_encoder_forward.10} parent=5 // pred_check_branch
      %87 = sbr.rel (%p84) target = $region24
    $region23: #{base_encoder_forward.10} parent=5 // pred_region
      %s88 = ssub.s32 %s7, 1
      %s89 = smul.u32 4, %s12
      %p90 = scmp.lt.s32.totalorder %s89, 15
      %s91 = scalar_select %p90, %s89, 15
      %s92 = smul.addr %s91, 8
      %s93 = scalar_lea.vmem %s0, %s92
      %p94 = pneg %p33
      %p95 = pneg %p30
      %p96 = pneg %p54
      %p97 = pneg %p51
      %s98 = smul.u32 4, %s12
      %p99 = scmp.lt.s32.totalorder %s98, 15
      %s100 = scalar_select %p99, %s98, 15
      %s101 = smul.addr %s100, 8
      %s102 = scalar_lea.vmem %s0, %s101
      %s103 = smul.u32 4, %s12
      %p104 = scmp.eq.s32.totalorder %s12, 0
      // Predicated region
      $region25: #{base_encoder_forward.10} parent=23 // pred_check
        %p105 = pneg %p104
      $region26: #{base_encoder_forward.10} parent=23 // pred_check_branch
        %107 = sbr.rel (%p105) target = $region28
      $region27: #{base_encoder_forward.10} parent=23 // pred_region
        %108 = vst [vmem:[%s1] sm:$0xff] 0.0
      $region28: #{base_encoder_forward.10} parent=23 // pred_fallthru
        _
      %v109 = vld [vmem:[%s102] sm:$0xff]
      %v110 = vld [vmem:[%s102 + $0x8] sm:$0xff]
      %v111 = vld [vmem:[%s102 + $0x10] sm:$0xff]
      %v112 = vld [vmem:[%s102 + $0x18] sm:$0xff]
      %113 = vrot.lane.b32.xlu0 %v109, 64
      %v114 = vpop.permute.xlu0 %113
      %115 = vrot.lane.b32.xlu0 %v110, 64
      %v116 = vpop.permute.xlu0 %115
      %117 = vrot.lane.b32.xlu0 %v111, 64
      %v118 = vpop.permute.xlu0 %117
      %119 = vrot.lane.b32.xlu0 %v112, 64
      %v120 = vpop.permute.xlu0 %119
      %v121 = vld [vmem:[%s1] sm:$0x1]
      %v122 = vadd.f32 %v109, %v110
      %v123 = vadd.f32 %v122, %v111
      %v124 = vadd.f32 %v123, %v112
      %v125 = vrot.slane %v124, 4
      %v126 = vadd.f32 %v124, %v125
      %v127 = vrot.slane %v126, 2
      %v128 = vadd.f32 %v126, %v127
      %v129 = vrot.slane %v128, 1
      %v130 = vadd.f32 %v128, %v129
      %v131 = vadd.f32 %v121, %v130
      %132 = vst [vmem:[%s1] sm:$0x1] %v131
      %v133 = vld [vmem:[%s1 + $0x1] sm:$0x1]
      %v134 = vmul.f32 %v109, %v109
      %v135 = vmul.f32 %v110, %v110
      %v136 = vmul.f32 %v111, %v111
      %v137 = vmul.f32 %v112, %v112
      %v138 = vadd.f32 %v134, %v135
      %v139 = vadd.f32 %v138, %v136
      %v140 = vadd.f32 %v139, %v137
      %v141 = vrot.slane %v140, 4
      %v142 = vadd.f32 %v140, %v141
      %v143 = vrot.slane %v142, 2
      %v144 = vadd.f32 %v142, %v143
      %v145 = vrot.slane %v144, 1
      %v146 = vadd.f32 %v144, %v145
      %v147 = vadd.f32 %v133, %v146
      %148 = vst [vmem:[%s1 + $0x1] sm:$0x1] %v147
      %v149 = vld [vmem:[%s1 + $0x2] sm:$0x1]
      %v150 = vmul.f32 %v109, %v114
      %v151 = vmul.f32 %v110, %v116
      %v152 = vmul.f32 %v111, %v118
      %v153 = vmul.f32 %v112, %v120
      %v154 = vadd.f32 %v150, %v151
      %v155 = vadd.f32 %v154, %v152
      %v156 = vadd.f32 %v155, %v153
      %v157 = vrot.slane %v156, 4
      %v158 = vadd.f32 %v156, %v157
      %v159 = vrot.slane %v158, 2
      %v160 = vadd.f32 %v158, %v159
      %v161 = vrot.slane %v160, 1
      %v162 = vadd.f32 %v160, %v161
      %v163 = vadd.f32 %v149, %v162
      %164 = vst [vmem:[%s1 + $0x2] sm:$0x1] %v163
      // Predicated region
      $region29: #{base_encoder_forward.10} parent=23 // pred_check
        %p165 = pneg %p51
      $region30: #{base_encoder_forward.10} parent=23 // pred_check_branch
        %167 = sbr.rel (%p165) target = $region32
      $region31: #{base_encoder_forward.10} parent=23 // pred_region
        _
      $region32: #{base_encoder_forward.10} parent=23 // pred_fallthru
        _
      // Predicated region
      $region33: #{base_encoder_forward.10} parent=23 // pred_check
        %p168 = pneg %p51
      $region34: #{base_encoder_forward.10} parent=23 // pred_check_branch
        %170 = sbr.rel (%p168) target = $region36
      $region35: #{base_encoder_forward.10} parent=23 // pred_region
        _
      $region36: #{base_encoder_forward.10} parent=23 // pred_fallthru
        _
    $region24: #{base_encoder_forward.10} parent=5 // pred_fallthru
      _
    %p171 = scmp.le.s32.totalorder 2, %s7
    // Predicated region
    $region37: #{base_encoder_forward.10} parent=5 // pred_check
      %p172 = pneg %p171
    $region38: #{base_encoder_forward.10} parent=5 // pred_check_branch
      %174 = sbr.rel (%p172) target = $region40
    $region39: #{base_encoder_forward.10} parent=5 // pred_region
      %s175 = ssub.s32 %s7, 2
    $region40: #{base_encoder_forward.10} parent=5 // pred_fallthru
      _
  $region6: #{base_encoder_forward.10} parent=0 // loop_footer
    %s11 = sadd.s32 1, %s7
  $region7: #{base_encoder_forward.10} parent=0 // loop_footer_branch
    %6 = sbr.rel target = $region3
  $region8: #{base_encoder_forward.10} parent=0 // loop_exit
    _

// kernel: base_encoder_forward.11
$region0: #{base_encoder_forward.11}
  #allocation0 [shape = 'u32[]', space=smem, size = 0x4, offset = 0x4, fixed_abs, tag = 'smem constant byte address 0x4 - core index']
  #allocation1 [shape = 'u32[72,128]{1,0:T(1,128)}', space=vmem, size = 0x9000, scoped, tag = 'internal scratch']
  %s0 = inlined_call_operand.vmem [shape: f32[128,128], index: 0, kind: input, shape index: {}]
  %s1 = inlined_call_operand.vmem [shape: f32[1,128], index: 1, kind: input, shape index: {}]
  %s2 = inlined_call_operand.vmem [shape: f32[1,128], index: 2, kind: input, shape index: {}]
  %s3 = inlined_call_operand.vmem [shape: f32[1,128], index: 3, kind: input, shape index: {}]
  %s4 = inlined_call_operand.vmem [shape: bf16[128,128], index: 4, kind: output, shape index: {}]
  %s5 = sld [smem:[#allocation0]]
  $region49: #{base_encoder_forward.11} parent=0
    _
  %s7 = ssub.s32 1, %s5
  %s8 = scalar_select 0, %s7, %s5
  loop: start=0, step=1, limit=6
  $region2: #{base_encoder_forward.11} parent=0 // loop_pre_header
    _
  $region3: #{base_encoder_forward.11} parent=0 // loop_header
    %s10 = sphi 0, %s14
    %p11 = scmp.ge.s32.totalorder %s10, 6
    %s20 = sphi 0, %s22
    %s23 = sphi 0, %s20
    %s24 = sphi 0, %s23
    %s40 = sphi 0, %s24
    %s44 = sphi 0, %s44
    %s46 = sphi 0, %s44
    %s47 = sphi 0, %s46
    %s61 = sphi 0, %s47
    %s65 = sphi 0, %s65
    %s67 = sphi 0, %s65
    %s68 = sphi 0, %s67
    %s82 = sphi 0, %s68
    %s86 = sphi 0, %s86
    %s88 = sphi 0, %s86
    %s89 = sphi 0, %s88
    %s103 = sphi 0, %s89
    %s109 = sphi 0, %s111
    %s112 = sphi 0, %s109
    %s113 = sphi 0, %s112
    %s129 = sphi 0, %s113
  $region4: #{base_encoder_forward.11} parent=0 // loop_header_branch
    %13 = sbr.rel (%p11) target = $region8
  $region5: #{base_encoder_forward.11} parent=0 // loop_body
    %s15 = ssub.s32 %s10, 1
    %s16 = ssub.s32 %s10, 2
    %s17 = sadd.s32 %s10, 1
    %s18 = ssub.s32 %s10, %s17
    %p19 = scmp.eq.s32.totalorder %s18, 0
    %s21 = sadd.s32 %s20, 1
    %s22 = scalar_select %p19, %s20, %s21
    %p25 = pneg %p19
    %p26 = scmp.eq.s32.totalorder %s10, 3
    %p27 = por %p25, %p26
    %p28 = scmp.ne.s32.totalorder %s20, %s23
    %p29 = scmp.eq.s32.totalorder %s10, 0
    %p30 = por %p28, %p29
    %p31 = scmp.ne.s32.totalorder %s20, %s23
    %p32 = scmp.eq.s32.totalorder %s15, 3
    %p33 = por %p31, %p32
    %p34 = scmp.ne.s32.totalorder %s23, %s24
    %p35 = scmp.eq.s32.totalorder %s15, 0
    %p36 = por %p34, %p35
    %p37 = scmp.ne.s32.totalorder %s23, %s24
    %p38 = scmp.eq.s32.totalorder %s16, 3
    %p39 = por %p37, %p38
    %p41 = scmp.ne.s32.totalorder %s24, %s40
    %p42 = scmp.eq.s32.totalorder %s16, 0
    %p43 = por %p41, %p42
    %s45 = sadd.s32 %s44, 1
    %p48 = scmp.eq.s32.totalorder %s10, 3
    %p49 = scmp.ne.s32.totalorder %s44, %s46
    %p50 = scmp.eq.s32.totalorder %s10, 0
    %p51 = por %p49, %p50
    %p52 = scmp.ne.s32.totalorder %s44, %s46
    %p53 = scmp.eq.s32.totalorder %s15, 3
    %p54 = por %p52, %p53
    %p55 = scmp.ne.s32.totalorder %s46, %s47
    %p56 = scmp.eq.s32.totalorder %s15, 0
    %p57 = por %p55, %p56
    %p58 = scmp.ne.s32.totalorder %s46, %s47
    %p59 = scmp.eq.s32.totalorder %s16, 3
    %p60 = por %p58, %p59
    %p62 = scmp.ne.s32.totalorder %s47, %s61
    %p63 = scmp.eq.s32.totalorder %s16, 0
    %p64 = por %p62, %p63
    %s66 = sadd.s32 %s65, 1
    %p69 = scmp.eq.s32.totalorder %s10, 3
    %p70 = scmp.ne.s32.totalorder %s65, %s67
    %p71 = scmp.eq.s32.totalorder %s10, 0
    %p72 = por %p70, %p71
    %p73 = scmp.ne.s32.totalorder %s65, %s67
    %p74 = scmp.eq.s32.totalorder %s15, 3
    %p75 = por %p73, %p74
    %p76 = scmp.ne.s32.totalorder %s67, %s68
    %p77 = scmp.eq.s32.totalorder %s15, 0
    %p78 = por %p76, %p77
    %p79 = scmp.ne.s32.totalorder %s67, %s68
    %p80 = scmp.eq.s32.totalorder %s16, 3
    %p81 = por %p79, %p80
    %p83 = scmp.ne.s32.totalorder %s68, %s82
    %p84 = scmp.eq.s32.totalorder %s16, 0
    %p85 = por %p83, %p84
    %s87 = sadd.s32 %s86, 1
    %p90 = scmp.eq.s32.totalorder %s10, 3
    %p91 = scmp.ne.s32.totalorder %s86, %s88
    %p92 = scmp.eq.s32.totalorder %s10, 0
    %p93 = por %p91, %p92
    %p94 = scmp.ne.s32.totalorder %s86, %s88
    %p95 = scmp.eq.s32.totalorder %s15, 3
    %p96 = por %p94, %p95
    %p97 = scmp.ne.s32.totalorder %s88, %s89
    %p98 = scmp.eq.s32.totalorder %s15, 0
    %p99 = por %p97, %p98
    %p100 = scmp.ne.s32.totalorder %s88, %s89
    %p101 = scmp.eq.s32.totalorder %s16, 3
    %p102 = por %p100, %p101
    %p104 = scmp.ne.s32.totalorder %s89, %s103
    %p105 = scmp.eq.s32.totalorder %s16, 0
    %p106 = por %p104, %p105
    %s107 = ssub.s32 %s10, %s17
    %p108 = scmp.eq.s32.totalorder %s107, 0
    %s110 = sadd.s32 %s109, 1
    %s111 = scalar_select %p108, %s109, %s110
    %p114 = pneg %p108
    %p115 = scmp.eq.s32.totalorder %s10, 3
    %p116 = por %p114, %p115
    %p117 = scmp.ne.s32.totalorder %s109, %s112
    %p118 = scmp.eq.s32.totalorder %s10, 0
    %p119 = por %p117, %p118
    %p120 = scmp.ne.s32.totalorder %s109, %s112
    %p121 = scmp.eq.s32.totalorder %s15, 3
    %p122 = por %p120, %p121
    %p123 = scmp.ne.s32.totalorder %s112, %s113
    %p124 = scmp.eq.s32.totalorder %s15, 0
    %p125 = por %p123, %p124
    %p126 = scmp.ne.s32.totalorder %s112, %s113
    %p127 = scmp.eq.s32.totalorder %s16, 3
    %p128 = por %p126, %p127
    %p130 = scmp.ne.s32.totalorder %s113, %s129
    %p131 = scmp.eq.s32.totalorder %s16, 0
    %p132 = por %p130, %p131
    %p133 = scmp.le.s32.totalorder 1, %s10
    %p134 = scmp.lt.s32.totalorder %s10, 5
    %p135 = pnand %p133, %p134
    %p136 = pneg %p135
    // Predicated region
    $region9: #{base_encoder_forward.11} parent=5 // pred_check
      _
    $region10: #{base_encoder_forward.11} parent=5 // pred_check_branch
      %138 = sbr.rel (%p135) target = $region12
    $region11: #{base_encoder_forward.11} parent=5 // pred_region
      %s139 = ssub.s32 %s10, 1
      // Predicated region
      $region13: #{base_encoder_forward.11} parent=11 // pred_check
        %p140 = pneg %p57
      $region14: #{base_encoder_forward.11} parent=11 // pred_check_branch
        %142 = sbr.rel (%p140) target = $region16
      $region15: #{base_encoder_forward.11} parent=11 // pred_region
        _
      $region16: #{base_encoder_forward.11} parent=11 // pred_fallthru
        _
      // Predicated region
      $region17: #{base_encoder_forward.11} parent=11 // pred_check
        %p143 = pneg %p78
      $region18: #{base_encoder_forward.11} parent=11 // pred_check_branch
        %145 = sbr.rel (%p143) target = $region20
      $region19: #{base_encoder_forward.11} parent=11 // pred_region
        _
      $region20: #{base_encoder_forward.11} parent=11 // pred_fallthru
        _
      // Predicated region
      $region21: #{base_encoder_forward.11} parent=11 // pred_check
        %p146 = pneg %p99
      $region22: #{base_encoder_forward.11} parent=11 // pred_check_branch
        %148 = sbr.rel (%p146) target = $region24
      $region23: #{base_encoder_forward.11} parent=11 // pred_region
        _
      $region24: #{base_encoder_forward.11} parent=11 // pred_fallthru
        _
    $region12: #{base_encoder_forward.11} parent=5 // pred_fallthru
      _
    %p149 = scmp.lt.s32.totalorder %s10, 4
    // Predicated region
    $region25: #{base_encoder_forward.11} parent=5 // pred_check
      %p150 = pneg %p149
    $region26: #{base_encoder_forward.11} parent=5 // pred_check_branch
      %152 = sbr.rel (%p150) target = $region28
    $region27: #{base_encoder_forward.11} parent=5 // pred_region
      // Predicated region
      $region29: #{base_encoder_forward.11} parent=27 // pred_check
        %p153 = pneg %p30
      $region30: #{base_encoder_forward.11} parent=27 // pred_check_branch
        %155 = sbr.rel (%p153) target = $region32
      $region31: #{base_encoder_forward.11} parent=27 // pred_region
        %s156 = smul.u32 4, %s10
        %p157 = scmp.lt.s32.totalorder %s156, 15
        %s158 = scalar_select %p157, %s156, 15
        %s159 = smul.addr %s158, 8
        %s160 = scalar_lea.vmem %s0, %s159
        %s161 = smul.u32 4, %s10
      $region32: #{base_encoder_forward.11} parent=27 // pred_fallthru
        _
    $region28: #{base_encoder_forward.11} parent=5 // pred_fallthru
      _
    %p162 = scmp.le.s32.totalorder 1, %s10
    %p163 = scmp.lt.s32.totalorder %s10, 5
    %p164 = pnand %p162, %p163
    %p165 = pneg %p164
    // Predicated region
    $region33: #{base_encoder_forward.11} parent=5 // pred_check
      _
    $region34: #{base_encoder_forward.11} parent=5 // pred_check_branch
      %167 = sbr.rel (%p164) target = $region36
    $region35: #{base_encoder_forward.11} parent=5 // pred_region
      %s168 = ssub.s32 %s10, 1
      %s169 = smul.u32 4, %s15
      %p170 = scmp.lt.s32.totalorder %s169, 15
      %s171 = scalar_select %p170, %s169, 15
      %s172 = smul.addr %s171, 8
      %s173 = scalar_lea.vmem %s0, %s172
      %p174 = pneg %p36
      %p175 = pneg %p33
      %p176 = pneg %p57
      %p177 = pneg %p54
      %p178 = pneg %p78
      %p179 = pneg %p75
      %p180 = pneg %p99
      %p181 = pneg %p96
      %p182 = pneg %p125
      %p183 = pneg %p122
      %s184 = smul.u32 4, %s15
      %p185 = scmp.lt.s32.totalorder %s184, 15
      %s186 = scalar_select %p185, %s184, 15
      %s187 = smul.addr %s186, 4
      %s188 = scalar_lea.vmem %s4, %s187
      %s189 = smul.u32 4, %s15
      %p190 = scmp.lt.s32.totalorder %s189, 15
      %s191 = scalar_select %p190, %s189, 15
      %s192 = smul.addr %s191, 8
      %s193 = scalar_lea.vmem %s0, %s192
      %s194 = smul.u32 4, %s15
      %s195 = smul.u32 4, %s15
      %p196 = scmp.lt.s32.totalorder %s195, 15
      %s197 = scalar_select %p196, %s195, 15
      %s198 = smul.addr %s197, 4
      %s199 = scalar_lea.vmem %s4, %s198
      %s200 = smul.u32 4, %s15
      %v201 = vld [vmem:[%s193] sm:$0xff]
      %v202 = vld [vmem:[%s193 + $0x8] sm:$0xff]
      %v203 = vld [vmem:[%s193 + $0x10] sm:$0xff]
      %v204 = vld [vmem:[%s193 + $0x18] sm:$0xff]
      %205 = vrot.lane.b32.xlu0 %v201, 64
      %v206 = vpop.permute.xlu0 %205
      %207 = vrot.lane.b32.xlu0 %v202, 64
      %v208 = vpop.permute.xlu0 %207
      %209 = vrot.lane.b32.xlu0 %v203, 64
      %v210 = vpop.permute.xlu0 %209
      %211 = vrot.lane.b32.xlu0 %v204, 64
      %v212 = vpop.permute.xlu0 %211
      %v213 = vld [vmem:[%s1] sm:$0x1]
      %v215 = vperm.slane %v213, 0
      %v217 = vmul.f32 %v215, %v201
      %v218 = vmul.f32 %v215, %v202
      %v219 = vmul.f32 %v215, %v203
      %v220 = vmul.f32 %v215, %v204
      %v221 = vld [vmem:[%s2] sm:$0x1]
      %v223 = vperm.slane %v221, 0
      %v225 = vmul.f32 %v223, %v206
      %v226 = vmul.f32 %v223, %v208
      %v227 = vmul.f32 %v223, %v210
      %v228 = vmul.f32 %v223, %v212
      %v229 = vadd.f32 %v217, %v225
      %v230 = vadd.f32 %v218, %v226
      %v231 = vadd.f32 %v219, %v227
      %v232 = vadd.f32 %v220, %v228
      %v233 = vld [vmem:[%s3] sm:$0x1]
      %v235 = vperm.slane %v233, 0
      %v237 = vadd.f32 %v229, %v235
      %v238 = vadd.f32 %v230, %v235
      %v239 = vadd.f32 %v231, %v235
      %v240 = vadd.f32 %v232, %v235
      %v241 = vmax.f32 %v237, 0.0
      %v242 = vmax.f32 %v238, 0.0
      %v243 = vmax.f32 %v239, 0.0
      %v244 = vmax.f32 %v240, 0.0
      %v245 = vpack.c.bf16 %v241, %v241
      %v246 = vpack.c.bf16 %v242, %v242
      %v247 = vpack.c.bf16 %v243, %v243
      %v248 = vpack.c.bf16 %v244, %v244
      %249 = vst [vmem:[%s199] sm:$0xf] %v245
      %250 = vst [vmem:[%s199 + $0x4] sm:$0xf] %v246
      %251 = vst [vmem:[%s199 + $0x8] sm:$0xf] %v247
      %252 = vst [vmem:[%s199 + $0xc] sm:$0xf] %v248
      %s253 = smul.u32 4, %s15
      %p254 = scmp.lt.s32.totalorder %s253, 15
      %s255 = scalar_select %p254, %s253, 15
      %s256 = smul.addr %s255, 4
      %s257 = scalar_lea.vmem %s4, %s256
      // Predicated region
      $region37: #{base_encoder_forward.11} parent=35 // pred_check
        %p258 = pneg %p122
      $region38: #{base_encoder_forward.11} parent=35 // pred_check_branch
        %260 = sbr.rel (%p258) target = $region40
      $region39: #{base_encoder_forward.11} parent=35 // pred_region
        %s261 = smul.u32 4, %s15
      $region40: #{base_encoder_forward.11} parent=35 // pred_fallthru
        _
    $region36: #{base_encoder_forward.11} parent=5 // pred_fallthru
      _
    %p262 = scmp.le.s32.totalorder 2, %s10
    // Predicated region
    $region41: #{base_encoder_forward.11} parent=5 // pred_check
      %p263 = pneg %p262
    $region42: #{base_encoder_forward.11} parent=5 // pred_check_branch
      %265 = sbr.rel (%p263) target = $region44
    $region43: #{base_encoder_forward.11} parent=5 // pred_region
      %s266 = ssub.s32 %s10, 2
      // Predicated region
      $region45: #{base_encoder_forward.11} parent=43 // pred_check
        %p267 = pneg %p128
      $region46: #{base_encoder_forward.11} parent=43 // pred_check_branch
        %269 = sbr.rel (%p267) target = $region48
      $region47: #{base_encoder_forward.11} parent=43 // pred_region
        %s270 = smul.u32 4, %s16
        %p271 = scmp.lt.s32.totalorder %s270, 15
        %s272 = scalar_select %p271, %s270, 15
        %s273 = smul.addr %s272, 4
        %s274 = scalar_lea.vmem %s4, %s273
      $region48: #{base_encoder_forward.11} parent=43 // pred_fallthru
        _
    $region44: #{base_encoder_forward.11} parent=5 // pred_fallthru
      _
  $region6: #{base_encoder_forward.11} parent=0 // loop_footer
    %s14 = sadd.s32 1, %s10
  $region7: #{base_encoder_forward.11} parent=0 // loop_footer_branch
    %9 = sbr.rel target = $region3
  $region8: #{base_encoder_forward.11} parent=0 // loop_exit
    _

// kernel: base_encoder_forward.9
$region0: #{base_encoder_forward.9}
  #allocation0 [shape = 'u32[]', space=smem, size = 0x4, offset = 0x4, fixed_abs, tag = 'smem constant byte address 0x4 - core index']
  #allocation1 [shape = 'u32[72,128]{1,0:T(1,128)}', space=vmem, size = 0x9000, scoped, tag = 'internal scratch']
  %s0 = inlined_call_operand.vmem [shape: bf16[2,76,8], index: 0, kind: input, shape index: {}]
  %s1 = inlined_call_operand.vmem [shape: bf16[2,76,8], index: 1, kind: input, shape index: {}]
  %s2 = inlined_call_operand.vmem [shape: bf16[4,8,64], index: 2, kind: input, shape index: {}]
  %s3 = inlined_call_operand.vmem [shape: bf16[4,8,64], index: 3, kind: input, shape index: {}]
  %s4 = inlined_call_operand.vmem [shape: bf16[4,8,64], index: 4, kind: input, shape index: {}]
  %s5 = inlined_call_operand.vmem [shape: f32[2,64,128], index: 5, kind: output, shape index: {}]
  %s6 = sld [smem:[#allocation0]]
  $region53: #{base_encoder_forward.9} parent=0
    _
  %s8 = ssub.s32 1, %s6
  %s9 = scalar_select 0, %s8, %s6
  loop: start=0, step=1, limit=4
  $region2: #{base_encoder_forward.9} parent=0 // loop_pre_header
    _
  $region3: #{base_encoder_forward.9} parent=0 // loop_header
    %s11 = sphi 0, %s15
    %p12 = scmp.ge.s32.totalorder %s11, 4
    %s21 = sphi 0, %s23
    %s24 = sphi 0, %s21
    %s25 = sphi 0, %s24
    %s41 = sphi 0, %s25
    %s47 = sphi 0, %s49
    %s50 = sphi 0, %s47
    %s51 = sphi 0, %s50
    %s67 = sphi 0, %s51
    %s71 = sphi 0, %s71
    %s73 = sphi 0, %s71
    %s74 = sphi 0, %s73
    %s88 = sphi 0, %s74
    %s92 = sphi 0, %s92
    %s94 = sphi 0, %s92
    %s95 = sphi 0, %s94
    %s109 = sphi 0, %s95
    %s113 = sphi 0, %s113
    %s115 = sphi 0, %s113
    %s116 = sphi 0, %s115
    %s130 = sphi 0, %s116
    %s136 = sphi 0, %s138
    %s139 = sphi 0, %s136
    %s140 = sphi 0, %s139
    %s156 = sphi 0, %s140
  $region4: #{base_encoder_forward.9} parent=0 // loop_header_branch
    %14 = sbr.rel (%p12) target = $region8
  $region5: #{base_encoder_forward.9} parent=0 // loop_body
    %s16 = ssub.s32 %s11, 1
    %s17 = ssub.s32 %s11, 2
    %s18 = sadd.s32 %s11, 1
    %s19 = ssub.s32 %s11, %s18
    %p20 = scmp.eq.s32.totalorder %s19, 0
    %s22 = sadd.s32 %s21, 1
    %s23 = scalar_select %p20, %s21, %s22
    %p26 = pneg %p20
    %p27 = scmp.eq.s32.totalorder %s11, 1
    %p28 = por %p26, %p27
    %p29 = scmp.ne.s32.totalorder %s21, %s24
    %p30 = scmp.eq.s32.totalorder %s11, 0
    %p31 = por %p29, %p30
    %p32 = scmp.ne.s32.totalorder %s21, %s24
    %p33 = scmp.eq.s32.totalorder %s16, 1
    %p34 = por %p32, %p33
    %p35 = scmp.ne.s32.totalorder %s24, %s25
    %p36 = scmp.eq.s32.totalorder %s16, 0
    %p37 = por %p35, %p36
    %p38 = scmp.ne.s32.totalorder %s24, %s25
    %p39 = scmp.eq.s32.totalorder %s17, 1
    %p40 = por %p38, %p39
    %p42 = scmp.ne.s32.totalorder %s25, %s41
    %p43 = scmp.eq.s32.totalorder %s17, 0
    %p44 = por %p42, %p43
    %s45 = ssub.s32 %s11, %s18
    %p46 = scmp.eq.s32.totalorder %s45, 0
    %s48 = sadd.s32 %s47, 1
    %s49 = scalar_select %p46, %s47, %s48
    %p52 = pneg %p46
    %p53 = scmp.eq.s32.totalorder %s11, 1
    %p54 = por %p52, %p53
    %p55 = scmp.ne.s32.totalorder %s47, %s50
    %p56 = scmp.eq.s32.totalorder %s11, 0
    %p57 = por %p55, %p56
    %p58 = scmp.ne.s32.totalorder %s47, %s50
    %p59 = scmp.eq.s32.totalorder %s16, 1
    %p60 = por %p58, %p59
    %p61 = scmp.ne.s32.totalorder %s50, %s51
    %p62 = scmp.eq.s32.totalorder %s16, 0
    %p63 = por %p61, %p62
    %p64 = scmp.ne.s32.totalorder %s50, %s51
    %p65 = scmp.eq.s32.totalorder %s17, 1
    %p66 = por %p64, %p65
    %p68 = scmp.ne.s32.totalorder %s51, %s67
    %p69 = scmp.eq.s32.totalorder %s17, 0
    %p70 = por %p68, %p69
    %s72 = sadd.s32 %s71, 1
    %p75 = scmp.eq.s32.totalorder %s11, 1
    %p76 = scmp.ne.s32.totalorder %s71, %s73
    %p77 = scmp.eq.s32.totalorder %s11, 0
    %p78 = por %p76, %p77
    %p79 = scmp.ne.s32.totalorder %s71, %s73
    %p80 = scmp.eq.s32.totalorder %s16, 1
    %p81 = por %p79, %p80
    %p82 = scmp.ne.s32.totalorder %s73, %s74
    %p83 = scmp.eq.s32.totalorder %s16, 0
    %p84 = por %p82, %p83
    %p85 = scmp.ne.s32.totalorder %s73, %s74
    %p86 = scmp.eq.s32.totalorder %s17, 1
    %p87 = por %p85, %p86
    %p89 = scmp.ne.s32.totalorder %s74, %s88
    %p90 = scmp.eq.s32.totalorder %s17, 0
    %p91 = por %p89, %p90
    %s93 = sadd.s32 %s92, 1
    %p96 = scmp.eq.s32.totalorder %s11, 1
    %p97 = scmp.ne.s32.totalorder %s92, %s94
    %p98 = scmp.eq.s32.totalorder %s11, 0
    %p99 = por %p97, %p98
    %p100 = scmp.ne.s32.totalorder %s92, %s94
    %p101 = scmp.eq.s32.totalorder %s16, 1
    %p102 = por %p100, %p101
    %p103 = scmp.ne.s32.totalorder %s94, %s95
    %p104 = scmp.eq.s32.totalorder %s16, 0
    %p105 = por %p103, %p104
    %p106 = scmp.ne.s32.totalorder %s94, %s95
    %p107 = scmp.eq.s32.totalorder %s17, 1
    %p108 = por %p106, %p107
    %p110 = scmp.ne.s32.totalorder %s95, %s109
    %p111 = scmp.eq.s32.totalorder %s17, 0
    %p112 = por %p110, %p111
    %s114 = sadd.s32 %s113, 1
    %p117 = scmp.eq.s32.totalorder %s11, 1
    %p118 = scmp.ne.s32.totalorder %s113, %s115
    %p119 = scmp.eq.s32.totalorder %s11, 0
    %p120 = por %p118, %p119
    %p121 = scmp.ne.s32.totalorder %s113, %s115
    %p122 = scmp.eq.s32.totalorder %s16, 1
    %p123 = por %p121, %p122
    %p124 = scmp.ne.s32.totalorder %s115, %s116
    %p125 = scmp.eq.s32.totalorder %s16, 0
    %p126 = por %p124, %p125
    %p127 = scmp.ne.s32.totalorder %s115, %s116
    %p128 = scmp.eq.s32.totalorder %s17, 1
    %p129 = por %p127, %p128
    %p131 = scmp.ne.s32.totalorder %s116, %s130
    %p132 = scmp.eq.s32.totalorder %s17, 0
    %p133 = por %p131, %p132
    %s134 = ssub.s32 %s11, %s18
    %p135 = scmp.eq.s32.totalorder %s134, 0
    %s137 = sadd.s32 %s136, 1
    %s138 = scalar_select %p135, %s136, %s137
    %p141 = pneg %p135
    %p142 = scmp.eq.s32.totalorder %s11, 1
    %p143 = por %p141, %p142
    %p144 = scmp.ne.s32.totalorder %s136, %s139
    %p145 = scmp.eq.s32.totalorder %s11, 0
    %p146 = por %p144, %p145
    %p147 = scmp.ne.s32.totalorder %s136, %s139
    %p148 = scmp.eq.s32.totalorder %s16, 1
    %p149 = por %p147, %p148
    %p150 = scmp.ne.s32.totalorder %s139, %s140
    %p151 = scmp.eq.s32.totalorder %s16, 0
    %p152 = por %p150, %p151
    %p153 = scmp.ne.s32.totalorder %s139, %s140
    %p154 = scmp.eq.s32.totalorder %s17, 1
    %p155 = por %p153, %p154
    %p157 = scmp.ne.s32.totalorder %s140, %s156
    %p158 = scmp.eq.s32.totalorder %s17, 0
    %p159 = por %p157, %p158
    %p160 = scmp.le.s32.totalorder 1, %s11
    %p161 = scmp.lt.s32.totalorder %s11, 3
    %p162 = pnand %p160, %p161
    %p163 = pneg %p162
    // Predicated region
    $region9: #{base_encoder_forward.9} parent=5 // pred_check
      _
    $region10: #{base_encoder_forward.9} parent=5 // pred_check_branch
      %165 = sbr.rel (%p162) target = $region12
    $region11: #{base_encoder_forward.9} parent=5 // pred_region
      %s166 = ssub.s32 %s11, 1
      // Predicated region
      $region13: #{base_encoder_forward.9} parent=11 // pred_check
        %p167 = pneg %p84
      $region14: #{base_encoder_forward.9} parent=11 // pred_check_branch
        %169 = sbr.rel (%p167) target = $region16
      $region15: #{base_encoder_forward.9} parent=11 // pred_region
        _
      $region16: #{base_encoder_forward.9} parent=11 // pred_fallthru
        _
      // Predicated region
      $region17: #{base_encoder_forward.9} parent=11 // pred_check
        %p170 = pneg %p105
      $region18: #{base_encoder_forward.9} parent=11 // pred_check_branch
        %172 = sbr.rel (%p170) target = $region20
      $region19: #{base_encoder_forward.9} parent=11 // pred_region
        _
      $region20: #{base_encoder_forward.9} parent=11 // pred_fallthru
        _
      // Predicated region
      $region21: #{base_encoder_forward.9} parent=11 // pred_check
        %p173 = pneg %p126
      $region22: #{base_encoder_forward.9} parent=11 // pred_check_branch
        %175 = sbr.rel (%p173) target = $region24
      $region23: #{base_encoder_forward.9} parent=11 // pred_region
        _
      $region24: #{base_encoder_forward.9} parent=11 // pred_fallthru
        _
    $region12: #{base_encoder_forward.9} parent=5 // pred_fallthru
      _
    %p176 = scmp.lt.s32.totalorder %s11, 2
    // Predicated region
    $region25: #{base_encoder_forward.9} parent=5 // pred_check
      %p177 = pneg %p176
    $region26: #{base_encoder_forward.9} parent=5 // pred_check_branch
      %179 = sbr.rel (%p177) target = $region28
    $region27: #{base_encoder_forward.9} parent=5 // pred_region
      // Predicated region
      $region29: #{base_encoder_forward.9} parent=27 // pred_check
        %p180 = pneg %p31
      $region30: #{base_encoder_forward.9} parent=27 // pred_check_branch
        %182 = sbr.rel (%p180) target = $region32
      $region31: #{base_encoder_forward.9} parent=27 // pred_region
        %p183 = scmp.lt.s32.totalorder %s11, 1
        %s184 = scalar_select %p183, %s11, 1
        %s185 = smul.addr %s184, 10
        %s186 = smul.addr %s185, 4
        %s187 = scalar_lea.vmem %s0, %s186
      $region32: #{base_encoder_forward.9} parent=27 // pred_fallthru
        _
      // Predicated region
      $region33: #{base_encoder_forward.9} parent=27 // pred_check
        %p188 = pneg %p57
      $region34: #{base_encoder_forward.9} parent=27 // pred_check_branch
        %190 = sbr.rel (%p188) target = $region36
      $region35: #{base_encoder_forward.9} parent=27 // pred_region
        %p191 = scmp.lt.s32.totalorder %s11, 1
        %s192 = scalar_select %p191, %s11, 1
        %s193 = smul.addr %s192, 10
        %s194 = smul.addr %s193, 4
        %s195 = scalar_lea.vmem %s1, %s194
      $region36: #{base_encoder_forward.9} parent=27 // pred_fallthru
        _
    $region28: #{base_encoder_forward.9} parent=5 // pred_fallthru
      _
    %p196 = scmp.le.s32.totalorder 1, %s11
    %p197 = scmp.lt.s32.totalorder %s11, 3
    %p198 = pnand %p196, %p197
    %p199 = pneg %p198
    // Predicated region
    $region37: #{base_encoder_forward.9} parent=5 // pred_check
      _
    $region38: #{base_encoder_forward.9} parent=5 // pred_check_branch
      %201 = sbr.rel (%p198) target = $region40
    $region39: #{base_encoder_forward.9} parent=5 // pred_region
      %s202 = ssub.s32 %s11, 1
      %p203 = scmp.lt.s32.totalorder %s16, 1
      %s204 = scalar_select %p203, %s16, 1
      %s205 = smul.addr %s204, 10
      %s206 = smul.addr %s205, 4
      %s207 = scalar_lea.vmem %s0, %s206
      %p208 = pneg %p37
      %p209 = pneg %p34
      %p210 = scmp.lt.s32.totalorder %s16, 1
      %s211 = scalar_select %p210, %s16, 1
      %s212 = smul.addr %s211, 10
      %s213 = smul.addr %s212, 4
      %s214 = scalar_lea.vmem %s1, %s213
      %p215 = pneg %p63
      %p216 = pneg %p60
      %p217 = pneg %p84
      %p218 = pneg %p81
      %p219 = pneg %p105
      %p220 = pneg %p102
      %p221 = pneg %p126
      %p222 = pneg %p123
      %p223 = pneg %p152
      %p224 = pneg %p149
      %p225 = scmp.lt.s32.totalorder %s16, 1
      %s226 = scalar_select %p225, %s16, 1
      %s227 = smul.addr %s226, 8
      %s228 = smul.addr %s227, 8
      %s229 = scalar_lea.vmem %s5, %s228
      %p230 = scmp.lt.s32.totalorder %s16, 1
      %s231 = scalar_select %p230, %s16, 1
      %s232 = smul.addr %s231, 10
      %s233 = smul.addr %s232, 4
      %s234 = scalar_lea.vmem %s0, %s233
      %p235 = scmp.lt.s32.totalorder %s16, 1
      %s236 = scalar_select %p235, %s16, 1
      %s237 = smul.addr %s236, 10
      %s238 = smul.addr %s237, 4
      %s239 = scalar_lea.vmem %s1, %s238
      %p240 = scmp.lt.s32.totalorder %s16, 1
      %s241 = scalar_select %p240, %s16, 1
      %s242 = smul.addr %s241, 8
      %s243 = smul.addr %s242, 8
      %s244 = scalar_lea.vmem %s5, %s243
      %v246 = vld [vmem:[%s234] sm:$0xf]
      %v247 = vld [vmem:[%s234 + $0x4] sm:$0xf]
      %v248 = vld [vmem:[%s234 + $0x8] sm:$0xf]
      %v249 = vld [vmem:[%s234 + $0xc] sm:$0xf]
      %v250 = vld [vmem:[%s234 + $0x10] sm:$0xf]
      %v251 = vld [vmem:[%s234 + $0x14] sm:$0xf]
      %v252 = vld [vmem:[%s234 + $0x18] sm:$0xf]
      %v253 = vld [vmem:[%s234 + $0x1c] sm:$0xf]
      %v254 = vld [vmem:[%s239] sm:$0xf]
      %v255 = vld [vmem:[%s239 + $0x4] sm:$0xf]
      %v256 = vld [vmem:[%s239 + $0x8] sm:$0xf]
      %v257 = vld [vmem:[%s239 + $0xc] sm:$0xf]
      %v258 = vld [vmem:[%s239 + $0x10] sm:$0xf]
      %v259 = vld [vmem:[%s239 + $0x14] sm:$0xf]
      %v260 = vld [vmem:[%s239 + $0x18] sm:$0xf]
      %v261 = vld [vmem:[%s239 + $0x1c] sm:$0xf]
      %v262 = vunpack.c.l.bf16 %v246
      %v263 = vunpack.c.l.bf16 %v247
      %v264 = vunpack.c.l.bf16 %v248
      %v265 = vunpack.c.l.bf16 %v249
      %v266 = vunpack.c.l.bf16 %v250
      %v267 = vunpack.c.l.bf16 %v251
      %v268 = vunpack.c.l.bf16 %v252
      %v269 = vunpack.c.l.bf16 %v253
      %v270 = vunpack.c.l.bf16 %v254
      %v271 = vunpack.c.l.bf16 %v255
      %v272 = vunpack.c.l.bf16 %v256
      %v273 = vunpack.c.l.bf16 %v257
      %v274 = vunpack.c.l.bf16 %v258
      %v275 = vunpack.c.l.bf16 %v259
      %v276 = vunpack.c.l.bf16 %v260
      %v277 = vunpack.c.l.bf16 %v261
      %v278 = vadd.f32 %v262, %v270
      %v279 = vadd.f32 %v263, %v271
      %v280 = vadd.f32 %v264, %v272
      %v281 = vadd.f32 %v265, %v273
      %v282 = vadd.f32 %v266, %v274
      %v283 = vadd.f32 %v267, %v275
      %v284 = vadd.f32 %v268, %v276
      %v285 = vadd.f32 %v269, %v277
      %v286 = vpack.c.bf16 %v279, %v278
      %v287 = vpack.c.bf16 %v281, %v280
      %v288 = vpack.c.bf16 %v283, %v282
      %v289 = vpack.c.bf16 %v285, %v284
      %v290 = vld [vmem:[%s2] sm:$0xf]
      %v291 = vld [vmem:[%s3] sm:$0xf]
      %v292 = vld [vmem:[%s4] sm:$0xf]
      %v293 = vld [vmem:[%s234] sm:$0xc]
      %v294 = vld [vmem:[%s234 + $0x20] sm:$0x3]
      %v295 = vld [vmem:[%s239] sm:$0xc]
      %v296 = vld [vmem:[%s239 + $0x20] sm:$0x3]
      %v297 = vunpack.c.l.bf16 %v293
      %v298 = vunpack.c.l.bf16 %v294
      %v299 = vunpack.c.l.bf16 %v295
      %v300 = vunpack.c.l.bf16 %v296
      %v301 = vadd.f32 %v297, %v299
      %v302 = vadd.f32 %v298, %v300
      %v303 = vpack.c.bf16 %v279, %v301
      %v304 = vpack.c.bf16 %v302, %v302
      %s305 = scalar_lea.vmem %s2, 4
      %v306 = vld [vmem:[%s305] sm:$0xf]
      %v316 = vunpack.c.l.b16 %v293
      %v317 = vunpack.c.l.b16 %v247
      %v318 = vunpack.c.l.b16 %v248
      %v319 = vunpack.c.l.b16 %v249
      %v320 = vunpack.c.l.b16 %v250
      %v321 = vunpack.c.l.b16 %v251
      %v322 = vunpack.c.l.b16 %v252
      %v323 = vunpack.c.l.b16 %v253
      %v324 = vunpack.c.l.b16 %v294
      %v325 = vpack.c.b16 %v317, %v316
      %v326 = vpack.c.b16 %v319, %v318
      %v327 = vpack.c.b16 %v321, %v320
      %v328 = vpack.c.b16 %v323, %v322
      %v329 = vpack.c.b16 %v324, %v324
      %vm330 = vcmask 1045504
      %v331 = vrot.slane %v325, 2
      %v332 = vrot.slane %v326, 2
      %v333 = vsel %vm330, %v331, %v332
      %v334 = vrot.slane %v327, 2
      %v335 = vsel %vm330, %v332, %v334
      %v336 = vrot.slane %v328, 2
      %v337 = vsel %vm330, %v334, %v336
      %v338 = vrot.slane %v329, 2
      %v339 = vsel %vm330, %v336, %v338
      %vm340 = vcmask 64512
      %v342 = vsel %vm340, %v333, 0
      %v345 = vsel %vm340, %v335, 0
      %v348 = vsel %vm340, %v337, 0
      %v351 = vsel %vm340, %v339, 0
      %vm353 = vcmask 1043456
      %v355 = vsel %vm353, %v306, 0
      %357 = vmatpush.bf16.msra.mxu0 0
      %358 = vmatpush.bf16.msra.mxu0 0
      %359 = vmatpush.bf16.msra.mxu0 0
      %360 = vmatpush.bf16.msra.mxu0 0
      %361 = vmatpush.bf16.msra.mxu0 0
      %362 = vmatpush.bf16.msra.mxu0 0
      %363 = vmatpush.bf16.msra.mxu0 0
      %364 = vmatpush.bf16.msra.mxu0 %v355
      %365 = vmatmul.bf16.gmra.mxu0 %v342
      %v366 = vpop.f32.mrf.mxu0
      %v367 = vadd.f32 0.0, %v366
      %v368 = vpop.f32.mrf.mxu0
      %v369 = vadd.f32 0.0, %v368
      %370 = vmatmul.bf16.gmra.mxu0 %v345
      %v371 = vpop.f32.mrf.mxu0
      %v372 = vadd.f32 0.0, %v371
      %v373 = vpop.f32.mrf.mxu0
      %v374 = vadd.f32 0.0, %v373
      %375 = vmatmul.bf16.gmra.mxu0 %v348
      %v376 = vpop.f32.mrf.mxu0
      %v377 = vadd.f32 0.0, %v376
      %v378 = vpop.f32.mrf.mxu0
      %v379 = vadd.f32 0.0, %v378
      %380 = vmatmul.bf16.gmra.mxu0 %v351
      %v381 = vpop.f32.mrf.mxu0
      %v382 = vadd.f32 0.0, %v381
      %v383 = vpop.f32.mrf.mxu0
      %v384 = vadd.f32 0.0, %v383
      %385 = vdwg.mxu0
      %v387 = vunpack.c.l.b16 %v246
      %v388 = vpack.c.b16 %v317, %v387
      %v390 = vsel %vm340, %v388, 0
      %v393 = vsel %vm340, %v326, 0
      %v396 = vsel %vm340, %v327, 0
      %v399 = vsel %vm340, %v328, 0
      %v402 = vsel %vm353, %v290, 0
      %404 = vmatpush.bf16.msra.mxu0 0
      %405 = vmatpush.bf16.msra.mxu0 0
      %406 = vmatpush.bf16.msra.mxu0 0
      %407 = vmatpush.bf16.msra.mxu0 0
      %408 = vmatpush.bf16.msra.mxu0 0
      %409 = vmatpush.bf16.msra.mxu0 0
      %410 = vmatpush.bf16.msra.mxu0 0
      %411 = vmatpush.bf16.msra.mxu0 %v402
      %412 = vmatmul.bf16.gmra.mxu0 %v390
      %v413 = vpop.f32.mrf.mxu0
      %v414 = vadd.f32 %v367, %v413
      %v415 = vpop.f32.mrf.mxu0
      %v416 = vadd.f32 %v369, %v415
      %417 = vmatmul.bf16.gmra.mxu0 %v393
      %v418 = vpop.f32.mrf.mxu0
      %v419 = vadd.f32 %v372, %v418
      %v420 = vpop.f32.mrf.mxu0
      %v421 = vadd.f32 %v374, %v420
      %422 = vmatmul.bf16.gmra.mxu0 %v396
      %v423 = vpop.f32.mrf.mxu0
      %v424 = vadd.f32 %v377, %v423
      %v425 = vpop.f32.mrf.mxu0
      %v426 = vadd.f32 %v379, %v425
      %427 = vmatmul.bf16.gmra.mxu0 %v399
      %v428 = vpop.f32.mrf.mxu0
      %v429 = vadd.f32 %v382, %v428
      %v430 = vpop.f32.mrf.mxu0
      %v431 = vadd.f32 %v384, %v430
      %432 = vdwg.mxu0
      %s433 = scalar_lea.vmem %s3, 4
      %v434 = vld [vmem:[%s433] sm:$0xf]
      %v444 = vunpack.c.l.b16 %v295
      %v445 = vunpack.c.l.b16 %v255
      %v446 = vunpack.c.l.b16 %v256
      %v447 = vunpack.c.l.b16 %v257
      %v448 = vunpack.c.l.b16 %v258
      %v449 = vunpack.c.l.b16 %v259
      %v450 = vunpack.c.l.b16 %v260
      %v451 = vunpack.c.l.b16 %v261
      %v452 = vunpack.c.l.b16 %v296
      %v453 = vpack.c.b16 %v445, %v444
      %v454 = vpack.c.b16 %v447, %v446
      %v455 = vpack.c.b16 %v449, %v448
      %v456 = vpack.c.b16 %v451, %v450
      %v457 = vpack.c.b16 %v452, %v452
      %v458 = vrot.slane %v453, 2
      %v459 = vrot.slane %v454, 2
      %v460 = vsel %vm330, %v458, %v459
      %v461 = vrot.slane %v455, 2
      %v462 = vsel %vm330, %v459, %v461
      %v463 = vrot.slane %v456, 2
      %v464 = vsel %vm330, %v461, %v463
      %v465 = vrot.slane %v457, 2
      %v466 = vsel %vm330, %v463, %v465
      %v468 = vsel %vm340, %v460, 0
      %v471 = vsel %vm340, %v462, 0
      %v474 = vsel %vm340, %v464, 0
      %v477 = vsel %vm340, %v466, 0
      %v480 = vsel %vm353, %v434, 0
      %482 = vmatpush.bf16.msra.mxu0 0
      %483 = vmatpush.bf16.msra.mxu0 0
      %484 = vmatpush.bf16.msra.mxu0 0
      %485 = vmatpush.bf16.msra.mxu0 0
      %486 = vmatpush.bf16.msra.mxu0 0
      %487 = vmatpush.bf16.msra.mxu0 0
      %488 = vmatpush.bf16.msra.mxu0 0
      %489 = vmatpush.bf16.msra.mxu0 %v480
      %490 = vmatmul.bf16.gmra.mxu0 %v468
      %v491 = vpop.f32.mrf.mxu0
      %v492 = vadd.f32 0.0, %v491
      %v493 = vpop.f32.mrf.mxu0
      %v494 = vadd.f32 0.0, %v493
      %495 = vmatmul.bf16.gmra.mxu0 %v471
      %v496 = vpop.f32.mrf.mxu0
      %v497 = vadd.f32 0.0, %v496
      %v498 = vpop.f32.mrf.mxu0
      %v499 = vadd.f32 0.0, %v498
      %500 = vmatmul.bf16.gmra.mxu0 %v474
      %v501 = vpop.f32.mrf.mxu0
      %v502 = vadd.f32 0.0, %v501
      %v503 = vpop.f32.mrf.mxu0
      %v504 = vadd.f32 0.0, %v503
      %505 = vmatmul.bf16.gmra.mxu0 %v477
      %v506 = vpop.f32.mrf.mxu0
      %v507 = vadd.f32 0.0, %v506
      %v508 = vpop.f32.mrf.mxu0
      %v509 = vadd.f32 0.0, %v508
      %510 = vdwg.mxu0
      %v512 = vunpack.c.l.b16 %v254
      %v513 = vpack.c.b16 %v445, %v512
      %v515 = vsel %vm340, %v513, 0
      %v518 = vsel %vm340, %v454, 0
      %v521 = vsel %vm340, %v455, 0
      %v524 = vsel %vm340, %v456, 0
      %v527 = vsel %vm353, %v291, 0
      %529 = vmatpush.bf16.msra.mxu0 0
      %530 = vmatpush.bf16.msra.mxu0 0
      %531 = vmatpush.bf16.msra.mxu0 0
      %532 = vmatpush.bf16.msra.mxu0 0
      %533 = vmatpush.bf16.msra.mxu0 0
      %534 = vmatpush.bf16.msra.mxu0 0
      %535 = vmatpush.bf16.msra.mxu0 0
      %536 = vmatpush.bf16.msra.mxu0 %v527
      %537 = vmatmul.bf16.gmra.mxu0 %v515
      %v538 = vpop.f32.mrf.mxu0
      %v539 = vadd.f32 %v492, %v538
      %v540 = vpop.f32.mrf.mxu0
      %v541 = vadd.f32 %v494, %v540
      %542 = vmatmul.bf16.gmra.mxu0 %v518
      %v543 = vpop.f32.mrf.mxu0
      %v544 = vadd.f32 %v497, %v543
      %v545 = vpop.f32.mrf.mxu0
      %v546 = vadd.f32 %v499, %v545
      %547 = vmatmul.bf16.gmra.mxu0 %v521
      %v548 = vpop.f32.mrf.mxu0
      %v549 = vadd.f32 %v502, %v548
      %v550 = vpop.f32.mrf.mxu0
      %v551 = vadd.f32 %v504, %v550
      %552 = vmatmul.bf16.gmra.mxu0 %v524
      %v553 = vpop.f32.mrf.mxu0
      %v554 = vadd.f32 %v507, %v553
      %v555 = vpop.f32.mrf.mxu0
      %v556 = vadd.f32 %v509, %v555
      %557 = vdwg.mxu0
      %s558 = scalar_lea.vmem %s4, 4
      %v559 = vld [vmem:[%s558] sm:$0xf]
      %v565 = vrot.slane %v303, 2
      %v566 = vrot.slane %v287, 2
      %v567 = vsel %vm330, %v565, %v566
      %v568 = vrot.slane %v288, 2
      %v569 = vsel %vm330, %v566, %v568
      %v570 = vrot.slane %v289, 2
      %v571 = vsel %vm330, %v568, %v570
      %v572 = vrot.slane %v304, 2
      %v573 = vsel %vm330, %v570, %v572
      %v575 = vsel %vm340, %v567, 0
      %v578 = vsel %vm340, %v569, 0
      %v581 = vsel %vm340, %v571, 0
      %v584 = vsel %vm340, %v573, 0
      %v587 = vsel %vm353, %v559, 0
      %589 = vmatpush.bf16.msra.mxu0 0
      %590 = vmatpush.bf16.msra.mxu0 0
      %591 = vmatpush.bf16.msra.mxu0 0
      %592 = vmatpush.bf16.msra.mxu0 0
      %593 = vmatpush.bf16.msra.mxu0 0
      %594 = vmatpush.bf16.msra.mxu0 0
      %595 = vmatpush.bf16.msra.mxu0 0
      %596 = vmatpush.bf16.msra.mxu0 %v587
      %597 = vmatmul.bf16.gmra.mxu0 %v575
      %v598 = vpop.f32.mrf.mxu0
      %v599 = vadd.f32 0.0, %v598
      %v600 = vpop.f32.mrf.mxu0
      %v601 = vadd.f32 0.0, %v600
      %602 = vmatmul.bf16.gmra.mxu0 %v578
      %v603 = vpop.f32.mrf.mxu0
      %v604 = vadd.f32 0.0, %v603
      %v605 = vpop.f32.mrf.mxu0
      %v606 = vadd.f32 0.0, %v605
      %607 = vmatmul.bf16.gmra.mxu0 %v581
      %v608 = vpop.f32.mrf.mxu0
      %v609 = vadd.f32 0.0, %v608
      %v610 = vpop.f32.mrf.mxu0
      %v611 = vadd.f32 0.0, %v610
      %612 = vmatmul.bf16.gmra.mxu0 %v584
      %v613 = vpop.f32.mrf.mxu0
      %v614 = vadd.f32 0.0, %v613
      %v615 = vpop.f32.mrf.mxu0
      %v616 = vadd.f32 0.0, %v615
      %617 = vdwg.mxu0
      %v619 = vsel %vm340, %v286, 0
      %v622 = vsel %vm340, %v287, 0
      %v625 = vsel %vm340, %v288, 0
      %v628 = vsel %vm340, %v289, 0
      %v631 = vsel %vm353, %v292, 0
      %633 = vmatpush.bf16.msra.mxu0 0
      %634 = vmatpush.bf16.msra.mxu0 0
      %635 = vmatpush.bf16.msra.mxu0 0
      %636 = vmatpush.bf16.msra.mxu0 0
      %637 = vmatpush.bf16.msra.mxu0 0
      %638 = vmatpush.bf16.msra.mxu0 0
      %639 = vmatpush.bf16.msra.mxu0 0
      %640 = vmatpush.bf16.msra.mxu0 %v631
      %641 = vmatmul.bf16.gmra.mxu0 %v619
      %v642 = vpop.f32.mrf.mxu0
      %v643 = vadd.f32 %v599, %v642
      %v644 = vpop.f32.mrf.mxu0
      %v645 = vadd.f32 %v601, %v644
      %646 = vmatmul.bf16.gmra.mxu0 %v622
      %v647 = vpop.f32.mrf.mxu0
      %v648 = vadd.f32 %v604, %v647
      %v649 = vpop.f32.mrf.mxu0
      %v650 = vadd.f32 %v606, %v649
      %651 = vmatmul.bf16.gmra.mxu0 %v625
      %v652 = vpop.f32.mrf.mxu0
      %v653 = vadd.f32 %v609, %v652
      %v654 = vpop.f32.mrf.mxu0
      %v655 = vadd.f32 %v611, %v654
      %656 = vmatmul.bf16.gmra.mxu0 %v628
      %v657 = vpop.f32.mrf.mxu0
      %v658 = vadd.f32 %v614, %v657
      %v659 = vpop.f32.mrf.mxu0
      %v660 = vadd.f32 %v616, %v659
      %661 = vdwg.mxu0
      %v662 = vld [vmem:[%s234 + $0x20] sm:$0xf]
      %v663 = vld [vmem:[%s239 + $0x20] sm:$0xf]
      %v664 = vunpack.c.l.bf16 %v662
      %v665 = vunpack.c.l.bf16 %v663
      %v666 = vadd.f32 %v664, %v665
      %v667 = vpack.c.bf16 %v280, %v279
      %v668 = vpack.c.bf16 %v282, %v281
      %v669 = vpack.c.bf16 %v284, %v283
      %v670 = vpack.c.bf16 %v666, %v285
      %s671 = scalar_lea.vmem %s2, 8
      %v672 = vld [vmem:[%s671] sm:$0xf]
      %v674 = vunpack.c.l.b16 %v662
      %v675 = vpack.c.b16 %v318, %v317
      %v676 = vpack.c.b16 %v320, %v319
      %v677 = vpack.c.b16 %v322, %v321
      %v678 = vpack.c.b16 %v674, %v323
      %v680 = vsel %vm340, %v675, 0
      %v683 = vsel %vm340, %v676, 0
      %v686 = vsel %vm340, %v677, 0
      %v689 = vsel %vm340, %v678, 0
      %v692 = vsel %vm353, %v672, 0
      %694 = vmatpush.bf16.msra.mxu0 0
      %695 = vmatpush.bf16.msra.mxu0 0
      %696 = vmatpush.bf16.msra.mxu0 0
      %697 = vmatpush.bf16.msra.mxu0 0
      %698 = vmatpush.bf16.msra.mxu0 0
      %699 = vmatpush.bf16.msra.mxu0 0
      %700 = vmatpush.bf16.msra.mxu0 0
      %701 = vmatpush.bf16.msra.mxu0 %v692
      %702 = vmatmul.bf16.gmra.mxu0 %v680
      %v703 = vpop.f32.mrf.mxu0
      %v704 = vadd.f32 0.0, %v703
      %v705 = vpop.f32.mrf.mxu0
      %v706 = vadd.f32 0.0, %v705
      %707 = vmatmul.bf16.gmra.mxu0 %v683
      %v708 = vpop.f32.mrf.mxu0
      %v709 = vadd.f32 0.0, %v708
      %v710 = vpop.f32.mrf.mxu0
      %v711 = vadd.f32 0.0, %v710
      %712 = vmatmul.bf16.gmra.mxu0 %v686
      %v713 = vpop.f32.mrf.mxu0
      %v714 = vadd.f32 0.0, %v713
      %v715 = vpop.f32.mrf.mxu0
      %v716 = vadd.f32 0.0, %v715
      %717 = vmatmul.bf16.gmra.mxu0 %v689
      %v718 = vpop.f32.mrf.mxu0
      %v719 = vadd.f32 0.0, %v718
      %v720 = vpop.f32.mrf.mxu0
      %v721 = vadd.f32 0.0, %v720
      %722 = vdwg.mxu0
      %v723 = vadd.f32 %v414, %v704
      %v724 = vadd.f32 %v416, %v706
      %v725 = vadd.f32 %v419, %v709
      %v726 = vadd.f32 %v421, %v711
      %v727 = vadd.f32 %v424, %v714
      %v728 = vadd.f32 %v426, %v716
      %v729 = vadd.f32 %v429, %v719
      %v730 = vadd.f32 %v431, %v721
      %s731 = scalar_lea.vmem %s3, 8
      %v732 = vld [vmem:[%s731] sm:$0xf]
      %v734 = vunpack.c.l.b16 %v663
      %v735 = vpack.c.b16 %v446, %v445
      %v736 = vpack.c.b16 %v448, %v447
      %v737 = vpack.c.b16 %v450, %v449
      %v738 = vpack.c.b16 %v734, %v451
      %v740 = vsel %vm340, %v735, 0
      %v743 = vsel %vm340, %v736, 0
      %v746 = vsel %vm340, %v737, 0
      %v749 = vsel %vm340, %v738, 0
      %v752 = vsel %vm353, %v732, 0
      %754 = vmatpush.bf16.msra.mxu0 0
      %755 = vmatpush.bf16.msra.mxu0 0
      %756 = vmatpush.bf16.msra.mxu0 0
      %757 = vmatpush.bf16.msra.mxu0 0
      %758 = vmatpush.bf16.msra.mxu0 0
      %759 = vmatpush.bf16.msra.mxu0 0
      %760 = vmatpush.bf16.msra.mxu0 0
      %761 = vmatpush.bf16.msra.mxu0 %v752
      %762 = vmatmul.bf16.gmra.mxu0 %v740
      %v763 = vpop.f32.mrf.mxu0
      %v764 = vadd.f32 0.0, %v763
      %v765 = vpop.f32.mrf.mxu0
      %v766 = vadd.f32 0.0, %v765
      %767 = vmatmul.bf16.gmra.mxu0 %v743
      %v768 = vpop.f32.mrf.mxu0
      %v769 = vadd.f32 0.0, %v768
      %v770 = vpop.f32.mrf.mxu0
      %v771 = vadd.f32 0.0, %v770
      %772 = vmatmul.bf16.gmra.mxu0 %v746
      %v773 = vpop.f32.mrf.mxu0
      %v774 = vadd.f32 0.0, %v773
      %v775 = vpop.f32.mrf.mxu0
      %v776 = vadd.f32 0.0, %v775
      %777 = vmatmul.bf16.gmra.mxu0 %v749
      %v778 = vpop.f32.mrf.mxu0
      %v779 = vadd.f32 0.0, %v778
      %v780 = vpop.f32.mrf.mxu0
      %v781 = vadd.f32 0.0, %v780
      %782 = vdwg.mxu0
      %v783 = vadd.f32 %v539, %v764
      %v784 = vadd.f32 %v541, %v766
      %v785 = vadd.f32 %v544, %v769
      %v786 = vadd.f32 %v546, %v771
      %v787 = vadd.f32 %v549, %v774
      %v788 = vadd.f32 %v551, %v776
      %v789 = vadd.f32 %v554, %v779
      %v790 = vadd.f32 %v556, %v781
      %s791 = scalar_lea.vmem %s4, 8
      %v792 = vld [vmem:[%s791] sm:$0xf]
      %v794 = vsel %vm340, %v667, 0
      %v797 = vsel %vm340, %v668, 0
      %v800 = vsel %vm340, %v669, 0
      %v803 = vsel %vm340, %v670, 0
      %v806 = vsel %vm353, %v792, 0
      %808 = vmatpush.bf16.msra.mxu0 0
      %809 = vmatpush.bf16.msra.mxu0 0
      %810 = vmatpush.bf16.msra.mxu0 0
      %811 = vmatpush.bf16.msra.mxu0 0
      %812 = vmatpush.bf16.msra.mxu0 0
      %813 = vmatpush.bf16.msra.mxu0 0
      %814 = vmatpush.bf16.msra.mxu0 0
      %815 = vmatpush.bf16.msra.mxu0 %v806
      %816 = vmatmul.bf16.gmra.mxu0 %v794
      %v817 = vpop.f32.mrf.mxu0
      %v818 = vadd.f32 0.0, %v817
      %v819 = vpop.f32.mrf.mxu0
      %v820 = vadd.f32 0.0, %v819
      %821 = vmatmul.bf16.gmra.mxu0 %v797
      %v822 = vpop.f32.mrf.mxu0
      %v823 = vadd.f32 0.0, %v822
      %v824 = vpop.f32.mrf.mxu0
      %v825 = vadd.f32 0.0, %v824
      %826 = vmatmul.bf16.gmra.mxu0 %v800
      %v827 = vpop.f32.mrf.mxu0
      %v828 = vadd.f32 0.0, %v827
      %v829 = vpop.f32.mrf.mxu0
      %v830 = vadd.f32 0.0, %v829
      %831 = vmatmul.bf16.gmra.mxu0 %v803
      %v832 = vpop.f32.mrf.mxu0
      %v833 = vadd.f32 0.0, %v832
      %v834 = vpop.f32.mrf.mxu0
      %v835 = vadd.f32 0.0, %v834
      %836 = vdwg.mxu0
      %v837 = vadd.f32 %v643, %v818
      %v838 = vadd.f32 %v645, %v820
      %v839 = vadd.f32 %v648, %v823
      %v840 = vadd.f32 %v650, %v825
      %v841 = vadd.f32 %v653, %v828
      %v842 = vadd.f32 %v655, %v830
      %v843 = vadd.f32 %v658, %v833
      %v844 = vadd.f32 %v660, %v835
      %v845 = vld [vmem:[%s234 + $0x4] sm:$0xc]
      %v846 = vld [vmem:[%s234 + $0x8] sm:$0xf]
      %v847 = vld [vmem:[%s234 + $0xc] sm:$0xf]
      %v848 = vld [vmem:[%s234 + $0x10] sm:$0xf]
      %v849 = vld [vmem:[%s234 + $0x14] sm:$0xf]
      %v850 = vld [vmem:[%s234 + $0x18] sm:$0xf]
      %v851 = vld [vmem:[%s234 + $0x1c] sm:$0xf]
      %v852 = vld [vmem:[%s234 + $0x20] sm:$0xf]
      %v853 = vld [vmem:[%s234 + $0x24] sm:$0x3]
      %v854 = vld [vmem:[%s239 + $0x4] sm:$0xc]
      %v855 = vld [vmem:[%s239 + $0x8] sm:$0xf]
      %v856 = vld [vmem:[%s239 + $0xc] sm:$0xf]
      %v857 = vld [vmem:[%s239 + $0x10] sm:$0xf]
      %v858 = vld [vmem:[%s239 + $0x14] sm:$0xf]
      %v859 = vld [vmem:[%s239 + $0x18] sm:$0xf]
      %v860 = vld [vmem:[%s239 + $0x1c] sm:$0xf]
      %v861 = vld [vmem:[%s239 + $0x20] sm:$0xf]
      %v862 = vld [vmem:[%s239 + $0x24] sm:$0x3]
      %v863 = vunpack.c.l.bf16 %v845
      %v864 = vunpack.c.l.bf16 %v846
      %v865 = vunpack.c.l.bf16 %v847
      %v866 = vunpack.c.l.bf16 %v848
      %v867 = vunpack.c.l.bf16 %v849
      %v868 = vunpack.c.l.bf16 %v850
      %v869 = vunpack.c.l.bf16 %v851
      %v870 = vunpack.c.l.bf16 %v852
      %v871 = vunpack.c.l.bf16 %v853
      %v872 = vunpack.c.l.bf16 %v854
      %v873 = vunpack.c.l.bf16 %v855
      %v874 = vunpack.c.l.bf16 %v856
      %v875 = vunpack.c.l.bf16 %v857
      %v876 = vunpack.c.l.bf16 %v858
      %v877 = vunpack.c.l.bf16 %v859
      %v878 = vunpack.c.l.bf16 %v860
      %v879 = vunpack.c.l.bf16 %v861
      %v880 = vunpack.c.l.bf16 %v862
      %v881 = vadd.f32 %v863, %v872
      %v882 = vadd.f32 %v864, %v873
      %v883 = vadd.f32 %v865, %v874
      %v884 = vadd.f32 %v866, %v875
      %v885 = vadd.f32 %v867, %v876
      %v886 = vadd.f32 %v868, %v877
      %v887 = vadd.f32 %v869, %v878
      %v888 = vadd.f32 %v870, %v879
      %v889 = vadd.f32 %v871, %v880
      %v890 = vpack.c.bf16 %v882, %v881
      %v891 = vpack.c.bf16 %v884, %v883
      %v892 = vpack.c.bf16 %v886, %v885
      %v893 = vpack.c.bf16 %v888, %v887
      %v894 = vpack.c.bf16 %v889, %v889
      %s895 = scalar_lea.vmem %s2, 12
      %v896 = vld [vmem:[%s895] sm:$0xf]
      %v906 = vunpack.c.l.b16 %v845
      %v907 = vunpack.c.l.b16 %v846
      %v908 = vunpack.c.l.b16 %v847
      %v909 = vunpack.c.l.b16 %v848
      %v910 = vunpack.c.l.b16 %v849
      %v911 = vunpack.c.l.b16 %v850
      %v912 = vunpack.c.l.b16 %v851
      %v913 = vunpack.c.l.b16 %v852
      %v914 = vunpack.c.l.b16 %v853
      %v915 = vpack.c.b16 %v907, %v906
      %v916 = vpack.c.b16 %v909, %v908
      %v917 = vpack.c.b16 %v911, %v910
      %v918 = vpack.c.b16 %v913, %v912
      %v919 = vpack.c.b16 %v914, %v914
      %v920 = vrot.slane %v915, 2
      %v921 = vrot.slane %v916, 2
      %v922 = vsel %vm330, %v920, %v921
      %v923 = vrot.slane %v917, 2
      %v924 = vsel %vm330, %v921, %v923
      %v925 = vrot.slane %v918, 2
      %v926 = vsel %vm330, %v923, %v925
      %v927 = vrot.slane %v919, 2
      %v928 = vsel %vm330, %v925, %v927
      %v930 = vsel %vm340, %v922, 0
      %v933 = vsel %vm340, %v924, 0
      %v936 = vsel %vm340, %v926, 0
      %v939 = vsel %vm340, %v928, 0
      %v942 = vsel %vm353, %v896, 0
      %944 = vmatpush.bf16.msra.mxu0 0
      %945 = vmatpush.bf16.msra.mxu0 0
      %946 = vmatpush.bf16.msra.mxu0 0
      %947 = vmatpush.bf16.msra.mxu0 0
      %948 = vmatpush.bf16.msra.mxu0 0
      %949 = vmatpush.bf16.msra.mxu0 0
      %950 = vmatpush.bf16.msra.mxu0 0
      %951 = vmatpush.bf16.msra.mxu0 %v942
      %952 = vmatmul.bf16.gmra.mxu0 %v930
      %v953 = vpop.f32.mrf.mxu0
      %v954 = vadd.f32 0.0, %v953
      %v955 = vpop.f32.mrf.mxu0
      %v956 = vadd.f32 0.0, %v955
      %957 = vmatmul.bf16.gmra.mxu0 %v933
      %v958 = vpop.f32.mrf.mxu0
      %v959 = vadd.f32 0.0, %v958
      %v960 = vpop.f32.mrf.mxu0
      %v961 = vadd.f32 0.0, %v960
      %962 = vmatmul.bf16.gmra.mxu0 %v936
      %v963 = vpop.f32.mrf.mxu0
      %v964 = vadd.f32 0.0, %v963
      %v965 = vpop.f32.mrf.mxu0
      %v966 = vadd.f32 0.0, %v965
      %967 = vmatmul.bf16.gmra.mxu0 %v939
      %v968 = vpop.f32.mrf.mxu0
      %v969 = vadd.f32 0.0, %v968
      %v970 = vpop.f32.mrf.mxu0
      %v971 = vadd.f32 0.0, %v970
      %972 = vdwg.mxu0
      %v973 = vadd.f32 %v723, %v954
      %v974 = vadd.f32 %v724, %v956
      %v975 = vadd.f32 %v725, %v959
      %v976 = vadd.f32 %v726, %v961
      %v977 = vadd.f32 %v727, %v964
      %v978 = vadd.f32 %v728, %v966
      %v979 = vadd.f32 %v729, %v969
      %v980 = vadd.f32 %v730, %v971
      %s981 = scalar_lea.vmem %s3, 12
      %v982 = vld [vmem:[%s981] sm:$0xf]
      %v992 = vunpack.c.l.b16 %v854
      %v993 = vunpack.c.l.b16 %v855
      %v994 = vunpack.c.l.b16 %v856
      %v995 = vunpack.c.l.b16 %v857
      %v996 = vunpack.c.l.b16 %v858
      %v997 = vunpack.c.l.b16 %v859
      %v998 = vunpack.c.l.b16 %v860
      %v999 = vunpack.c.l.b16 %v861
      %v1000 = vunpack.c.l.b16 %v862
      %v1001 = vpack.c.b16 %v993, %v992
      %v1002 = vpack.c.b16 %v995, %v994
      %v1003 = vpack.c.b16 %v997, %v996
      %v1004 = vpack.c.b16 %v999, %v998
      %v1005 = vpack.c.b16 %v1000, %v1000
      %v1006 = vrot.slane %v1001, 2
      %v1007 = vrot.slane %v1002, 2
      %v1008 = vsel %vm330, %v1006, %v1007
      %v1009 = vrot.slane %v1003, 2
      %v1010 = vsel %vm330, %v1007, %v1009
      %v1011 = vrot.slane %v1004, 2
      %v1012 = vsel %vm330, %v1009, %v1011
      %v1013 = vrot.slane %v1005, 2
      %v1014 = vsel %vm330, %v1011, %v1013
      %v1016 = vsel %vm340, %v1008, 0
      %v1019 = vsel %vm340, %v1010, 0
      %v1022 = vsel %vm340, %v1012, 0
      %v1025 = vsel %vm340, %v1014, 0
      %v1028 = vsel %vm353, %v982, 0
      %1030 = vmatpush.bf16.msra.mxu0 0
      %1031 = vmatpush.bf16.msra.mxu0 0
      %1032 = vmatpush.bf16.msra.mxu0 0
      %1033 = vmatpush.bf16.msra.mxu0 0
      %1034 = vmatpush.bf16.msra.mxu0 0
      %1035 = vmatpush.bf16.msra.mxu0 0
      %1036 = vmatpush.bf16.msra.mxu0 0
      %1037 = vmatpush.bf16.msra.mxu0 %v1028
      %1038 = vmatmul.bf16.gmra.mxu0 %v1016
      %v1039 = vpop.f32.mrf.mxu0
      %v1040 = vadd.f32 0.0, %v1039
      %v1041 = vpop.f32.mrf.mxu0
      %v1042 = vadd.f32 0.0, %v1041
      %1043 = vmatmul.bf16.gmra.mxu0 %v1019
      %v1044 = vpop.f32.mrf.mxu0
      %v1045 = vadd.f32 0.0, %v1044
      %v1046 = vpop.f32.mrf.mxu0
      %v1047 = vadd.f32 0.0, %v1046
      %1048 = vmatmul.bf16.gmra.mxu0 %v1022
      %v1049 = vpop.f32.mrf.mxu0
      %v1050 = vadd.f32 0.0, %v1049
      %v1051 = vpop.f32.mrf.mxu0
      %v1052 = vadd.f32 0.0, %v1051
      %1053 = vmatmul.bf16.gmra.mxu0 %v1025
      %v1054 = vpop.f32.mrf.mxu0
      %v1055 = vadd.f32 0.0, %v1054
      %v1056 = vpop.f32.mrf.mxu0
      %v1057 = vadd.f32 0.0, %v1056
      %1058 = vdwg.mxu0
      %v1059 = vadd.f32 %v783, %v1040
      %v1060 = vadd.f32 %v784, %v1042
      %v1061 = vadd.f32 %v785, %v1045
      %v1062 = vadd.f32 %v786, %v1047
      %v1063 = vadd.f32 %v787, %v1050
      %v1064 = vadd.f32 %v788, %v1052
      %v1065 = vadd.f32 %v789, %v1055
      %v1066 = vadd.f32 %v790, %v1057
      %s1067 = scalar_lea.vmem %s4, 12
      %v1068 = vld [vmem:[%s1067] sm:$0xf]
      %v1074 = vrot.slane %v890, 2
      %v1075 = vrot.slane %v891, 2
      %v1076 = vsel %vm330, %v1074, %v1075
      %v1077 = vrot.slane %v892, 2
      %v1078 = vsel %vm330, %v1075, %v1077
      %v1079 = vrot.slane %v893, 2
      %v1080 = vsel %vm330, %v1077, %v1079
      %v1081 = vrot.slane %v894, 2
      %v1082 = vsel %vm330, %v1079, %v1081
      %v1084 = vsel %vm340, %v1076, 0
      %v1087 = vsel %vm340, %v1078, 0
      %v1090 = vsel %vm340, %v1080, 0
      %v1093 = vsel %vm340, %v1082, 0
      %v1096 = vsel %vm353, %v1068, 0
      %1098 = vmatpush.bf16.msra.mxu0 0
      %1099 = vmatpush.bf16.msra.mxu0 0
      %1100 = vmatpush.bf16.msra.mxu0 0
      %1101 = vmatpush.bf16.msra.mxu0 0
      %1102 = vmatpush.bf16.msra.mxu0 0
      %1103 = vmatpush.bf16.msra.mxu0 0
      %1104 = vmatpush.bf16.msra.mxu0 0
      %1105 = vmatpush.bf16.msra.mxu0 %v1096
      %1106 = vmatmul.bf16.gmra.mxu0 %v1084
      %v1107 = vpop.f32.mrf.mxu0
      %v1108 = vadd.f32 0.0, %v1107
      %v1109 = vpop.f32.mrf.mxu0
      %v1110 = vadd.f32 0.0, %v1109
      %1111 = vmatmul.bf16.gmra.mxu0 %v1087
      %v1112 = vpop.f32.mrf.mxu0
      %v1113 = vadd.f32 0.0, %v1112
      %v1114 = vpop.f32.mrf.mxu0
      %v1115 = vadd.f32 0.0, %v1114
      %1116 = vmatmul.bf16.gmra.mxu0 %v1090
      %v1117 = vpop.f32.mrf.mxu0
      %v1118 = vadd.f32 0.0, %v1117
      %v1119 = vpop.f32.mrf.mxu0
      %v1120 = vadd.f32 0.0, %v1119
      %1121 = vmatmul.bf16.gmra.mxu0 %v1093
      %v1122 = vpop.f32.mrf.mxu0
      %v1123 = vadd.f32 0.0, %v1122
      %v1124 = vpop.f32.mrf.mxu0
      %v1125 = vadd.f32 0.0, %v1124
      %1126 = vdwg.mxu0
      %v1127 = vadd.f32 %v837, %v1108
      %v1128 = vadd.f32 %v838, %v1110
      %v1129 = vadd.f32 %v839, %v1113
      %v1130 = vadd.f32 %v840, %v1115
      %v1131 = vadd.f32 %v841, %v1118
      %v1132 = vadd.f32 %v842, %v1120
      %v1133 = vadd.f32 %v843, %v1123
      %v1134 = vadd.f32 %v844, %v1125
      %v1135 = vsub.f32 %v973, %v1059
      %v1136 = vsub.f32 %v974, %v1060
      %v1137 = vsub.f32 %v975, %v1061
      %v1138 = vsub.f32 %v976, %v1062
      %v1139 = vsub.f32 %v977, %v1063
      %v1140 = vsub.f32 %v978, %v1064
      %v1141 = vsub.f32 %v979, %v1065
      %v1142 = vsub.f32 %v980, %v1066
      %v1143 = vsub.f32 %v1127, %v973
      %v1144 = vsub.f32 %v1128, %v974
      %v1145 = vsub.f32 %v1129, %v975
      %v1146 = vsub.f32 %v1130, %v976
      %v1147 = vsub.f32 %v1131, %v977
      %v1148 = vsub.f32 %v1132, %v978
      %v1149 = vsub.f32 %v1133, %v979
      %v1150 = vsub.f32 %v1134, %v980
      %v1151 = vsub.f32 %v1143, %v1059
      %v1152 = vsub.f32 %v1144, %v1060
      %v1153 = vsub.f32 %v1145, %v1061
      %v1154 = vsub.f32 %v1146, %v1062
      %v1155 = vsub.f32 %v1147, %v1063
      %v1156 = vsub.f32 %v1148, %v1064
      %v1157 = vsub.f32 %v1149, %v1065
      %v1158 = vsub.f32 %v1150, %v1066
      %1167 = vrot.lane.b32.xlu0 %v1151, 64
      %v1168 = vpop.permute.xlu0 %1167
      %1169 = vrot.lane.b32.xlu0 %v1152, 64
      %v1170 = vpop.permute.xlu0 %1169
      %1171 = vrot.lane.b32.xlu0 %v1153, 64
      %v1172 = vpop.permute.xlu0 %1171
      %1173 = vrot.lane.b32.xlu0 %v1154, 64
      %v1174 = vpop.permute.xlu0 %1173
      %1175 = vrot.lane.b32.xlu0 %v1155, 64
      %v1176 = vpop.permute.xlu0 %1175
      %1177 = vrot.lane.b32.xlu0 %v1156, 64
      %v1178 = vpop.permute.xlu0 %1177
      %1179 = vrot.lane.b32.xlu0 %v1157, 64
      %v1180 = vpop.permute.xlu0 %1179
      %1181 = vrot.lane.b32.xlu0 %v1158, 64
      %v1182 = vpop.permute.xlu0 %1181
      %vm1191 = vcmask 523264
      %v1192 = vsel %vm1191, %v1135, %v1168
      %v1193 = vsel %vm1191, %v1136, %v1170
      %v1194 = vsel %vm1191, %v1137, %v1172
      %v1195 = vsel %vm1191, %v1138, %v1174
      %v1196 = vsel %vm1191, %v1139, %v1176
      %v1197 = vsel %vm1191, %v1140, %v1178
      %v1198 = vsel %vm1191, %v1141, %v1180
      %v1199 = vsel %vm1191, %v1142, %v1182
      %1200 = vst [vmem:[%s244] sm:$0xff] %v1192
      %1201 = vst [vmem:[%s244 + $0x8] sm:$0xff] %v1193
      %1202 = vst [vmem:[%s244 + $0x10] sm:$0xff] %v1194
      %1203 = vst [vmem:[%s244 + $0x18] sm:$0xff] %v1195
      %1204 = vst [vmem:[%s244 + $0x20] sm:$0xff] %v1196
      %1205 = vst [vmem:[%s244 + $0x28] sm:$0xff] %v1197
      %1206 = vst [vmem:[%s244 + $0x30] sm:$0xff] %v1198
      %1207 = vst [vmem:[%s244 + $0x38] sm:$0xff] %v1199
      %p1208 = scmp.lt.s32.totalorder %s16, 1
      %s1209 = scalar_select %p1208, %s16, 1
      %s1210 = smul.addr %s1209, 8
      %s1211 = smul.addr %s1210, 8
      %s1212 = scalar_lea.vmem %s5, %s1211
      // Predicated region
      $region41: #{base_encoder_forward.9} parent=39 // pred_check
        %p1213 = pneg %p149
      $region42: #{base_encoder_forward.9} parent=39 // pred_check_branch
        %1215 = sbr.rel (%p1213) target = $region44
      $region43: #{base_encoder_forward.9} parent=39 // pred_region
        _
      $region44: #{base_encoder_forward.9} parent=39 // pred_fallthru
        _
    $region40: #{base_encoder_forward.9} parent=5 // pred_fallthru
      _
    %p1216 = scmp.le.s32.totalorder 2, %s11
    // Predicated region
    $region45: #{base_encoder_forward.9} parent=5 // pred_check
      %p1217 = pneg %p1216
    $region46: #{base_encoder_forward.9} parent=5 // pred_check_branch
      %1219 = sbr.rel (%p1217) target = $region48
    $region47: #{base_encoder_forward.9} parent=5 // pred_region
      %s1220 = ssub.s32 %s11, 2
      // Predicated region
      $region49: #{base_encoder_forward.9} parent=47 // pred_check
        %p1221 = pneg %p155
      $region50: #{base_encoder_forward.9} parent=47 // pred_check_branch
        %1223 = sbr.rel (%p1221) target = $region52
      $region51: #{base_encoder_forward.9} parent=47 // pred_region
        %p1224 = scmp.lt.s32.totalorder %s17, 1
        %s1225 = scalar_select %p1224, %s17, 1
        %s1226 = smul.addr %s1225, 8
        %s1227 = smul.addr %s1226, 8
        %s1228 = scalar_lea.vmem %s5, %s1227
      $region52: #{base_encoder_forward.9} parent=47 // pred_fallthru
        _
    $region48: #{base_encoder_forward.9} parent=5 // pred_fallthru
      _
  $region6: #{base_encoder_forward.9} parent=0 // loop_footer
    %s15 = sadd.s32 1, %s11
  $region7: #{base_encoder_forward.9} parent=0 // loop_footer_branch
    %10 = sbr.rel target = $region3
  $region8: #{base_encoder_forward.9} parent=0 // loop_exit
    _

// kernel: base_encoder_forward.13
$region0: #{base_encoder_forward.13}
  #allocation0 [shape = 'u32[]', space=smem, size = 0x4, offset = 0x4, fixed_abs, tag = 'smem constant byte address 0x4 - core index']
  #allocation1 [shape = 'u32[72,128]{1,0:T(1,128)}', space=vmem, size = 0x9000, scoped, tag = 'internal scratch']
  %s0 = inlined_call_operand.vmem [shape: f32[64,128], index: 0, kind: input, shape index: {}]
  %s1 = inlined_call_operand.vmem [shape: f32[8,128], index: 1, kind: output, shape index: {}]
  %s2 = sld [smem:[#allocation0]]
  $region41: #{base_encoder_forward.13} parent=0
    _
  %s4 = ssub.s32 1, %s2
  %s5 = scalar_select 0, %s4, %s2
  loop: start=0, step=1, limit=4
  $region2: #{base_encoder_forward.13} parent=0 // loop_pre_header
    _
  $region3: #{base_encoder_forward.13} parent=0 // loop_header
    %s7 = sphi 0, %s11
    %p8 = scmp.ge.s32.totalorder %s7, 4
    %s17 = sphi 0, %s19
    %s20 = sphi 0, %s17
    %s21 = sphi 0, %s20
    %s37 = sphi 0, %s21
    %s41 = sphi 0, %s41
    %s43 = sphi 0, %s41
    %s44 = sphi 0, %s43
    %s58 = sphi 0, %s44
  $region4: #{base_encoder_forward.13} parent=0 // loop_header_branch
    %10 = sbr.rel (%p8) target = $region8
  $region5: #{base_encoder_forward.13} parent=0 // loop_body
    %s12 = ssub.s32 %s7, 1
    %s13 = ssub.s32 %s7, 2
    %s14 = sadd.s32 %s7, 1
    %s15 = ssub.s32 %s7, %s14
    %p16 = scmp.eq.s32.totalorder %s15, 0
    %s18 = sadd.s32 %s17, 1
    %s19 = scalar_select %p16, %s17, %s18
    %p22 = pneg %p16
    %p23 = scmp.eq.s32.totalorder %s7, 1
    %p24 = por %p22, %p23
    %p25 = scmp.ne.s32.totalorder %s17, %s20
    %p26 = scmp.eq.s32.totalorder %s7, 0
    %p27 = por %p25, %p26
    %p28 = scmp.ne.s32.totalorder %s17, %s20
    %p29 = scmp.eq.s32.totalorder %s12, 1
    %p30 = por %p28, %p29
    %p31 = scmp.ne.s32.totalorder %s20, %s21
    %p32 = scmp.eq.s32.totalorder %s12, 0
    %p33 = por %p31, %p32
    %p34 = scmp.ne.s32.totalorder %s20, %s21
    %p35 = scmp.eq.s32.totalorder %s13, 1
    %p36 = por %p34, %p35
    %p38 = scmp.ne.s32.totalorder %s21, %s37
    %p39 = scmp.eq.s32.totalorder %s13, 0
    %p40 = por %p38, %p39
    %s42 = sadd.s32 %s41, 1
    %p45 = scmp.eq.s32.totalorder %s7, 1
    %p46 = scmp.ne.s32.totalorder %s41, %s43
    %p47 = scmp.eq.s32.totalorder %s7, 0
    %p48 = por %p46, %p47
    %p49 = scmp.ne.s32.totalorder %s41, %s43
    %p50 = scmp.eq.s32.totalorder %s12, 1
    %p51 = por %p49, %p50
    %p52 = scmp.ne.s32.totalorder %s43, %s44
    %p53 = scmp.eq.s32.totalorder %s12, 0
    %p54 = por %p52, %p53
    %p55 = scmp.ne.s32.totalorder %s43, %s44
    %p56 = scmp.eq.s32.totalorder %s13, 1
    %p57 = por %p55, %p56
    %p59 = scmp.ne.s32.totalorder %s44, %s58
    %p60 = scmp.eq.s32.totalorder %s13, 0
    %p61 = por %p59, %p60
    %p62 = scmp.le.s32.totalorder 1, %s7
    %p63 = scmp.lt.s32.totalorder %s7, 3
    %p64 = pnand %p62, %p63
    %p65 = pneg %p64
    // Predicated region
    $region9: #{base_encoder_forward.13} parent=5 // pred_check
      _
    $region10: #{base_encoder_forward.13} parent=5 // pred_check_branch
      %67 = sbr.rel (%p64) target = $region12
    $region11: #{base_encoder_forward.13} parent=5 // pred_region
      %s68 = ssub.s32 %s7, 1
    $region12: #{base_encoder_forward.13} parent=5 // pred_fallthru
      _
    %p69 = scmp.lt.s32.totalorder %s7, 2
    // Predicated region
    $region13: #{base_encoder_forward.13} parent=5 // pred_check
      %p70 = pneg %p69
    $region14: #{base_encoder_forward.13} parent=5 // pred_check_branch
      %72 = sbr.rel (%p70) target = $region16
    $region15: #{base_encoder_forward.13} parent=5 // pred_region
      // Predicated region
      $region17: #{base_encoder_forward.13} parent=15 // pred_check
        %p73 = pneg %p27
      $region18: #{base_encoder_forward.13} parent=15 // pred_check_branch
        %75 = sbr.rel (%p73) target = $region20
      $region19: #{base_encoder_forward.13} parent=15 // pred_region
        %s76 = smul.u32 4, %s7
        %p77 = scmp.lt.s32.totalorder %s76, 7
        %s78 = scalar_select %p77, %s76, 7
        %s79 = smul.addr %s78, 8
        %s80 = scalar_lea.vmem %s0, %s79
        %s81 = smul.u32 4, %s7
      $region20: #{base_encoder_forward.13} parent=15 // pred_fallthru
        _
    $region16: #{base_encoder_forward.13} parent=5 // pred_fallthru
      _
    %p82 = scmp.le.s32.totalorder 1, %s7
    %p83 = scmp.lt.s32.totalorder %s7, 3
    %p84 = pnand %p82, %p83
    %p85 = pneg %p84
    // Predicated region
    $region21: #{base_encoder_forward.13} parent=5 // pred_check
      _
    $region22: #{base_encoder_forward.13} parent=5 // pred_check_branch
      %87 = sbr.rel (%p84) target = $region24
    $region23: #{base_encoder_forward.13} parent=5 // pred_region
      %s88 = ssub.s32 %s7, 1
      %s89 = smul.u32 4, %s12
      %p90 = scmp.lt.s32.totalorder %s89, 7
      %s91 = scalar_select %p90, %s89, 7
      %s92 = smul.addr %s91, 8
      %s93 = scalar_lea.vmem %s0, %s92
      %p94 = pneg %p33
      %p95 = pneg %p30
      %p96 = pneg %p54
      %p97 = pneg %p51
      %s98 = smul.u32 4, %s12
      %p99 = scmp.lt.s32.totalorder %s98, 7
      %s100 = scalar_select %p99, %s98, 7
      %s101 = smul.addr %s100, 8
      %s102 = scalar_lea.vmem %s0, %s101
      %s103 = smul.u32 4, %s12
      %p104 = scmp.eq.s32.totalorder %s12, 0
      // Predicated region
      $region25: #{base_encoder_forward.13} parent=23 // pred_check
        %p105 = pneg %p104
      $region26: #{base_encoder_forward.13} parent=23 // pred_check_branch
        %107 = sbr.rel (%p105) target = $region28
      $region27: #{base_encoder_forward.13} parent=23 // pred_region
        %108 = vst [vmem:[%s1] sm:$0xff] 0.0
      $region28: #{base_encoder_forward.13} parent=23 // pred_fallthru
        _
      %v109 = vld [vmem:[%s102] sm:$0xff]
      %v110 = vld [vmem:[%s102 + $0x8] sm:$0xff]
      %v111 = vld [vmem:[%s102 + $0x10] sm:$0xff]
      %v112 = vld [vmem:[%s102 + $0x18] sm:$0xff]
      %113 = vrot.lane.b32.xlu0 %v109, 64
      %v114 = vpop.permute.xlu0 %113
      %115 = vrot.lane.b32.xlu0 %v110, 64
      %v116 = vpop.permute.xlu0 %115
      %117 = vrot.lane.b32.xlu0 %v111, 64
      %v118 = vpop.permute.xlu0 %117
      %119 = vrot.lane.b32.xlu0 %v112, 64
      %v120 = vpop.permute.xlu0 %119
      %v121 = vld [vmem:[%s1] sm:$0x1]
      %v122 = vadd.f32 %v109, %v110
      %v123 = vadd.f32 %v122, %v111
      %v124 = vadd.f32 %v123, %v112
      %v125 = vrot.slane %v124, 4
      %v126 = vadd.f32 %v124, %v125
      %v127 = vrot.slane %v126, 2
      %v128 = vadd.f32 %v126, %v127
      %v129 = vrot.slane %v128, 1
      %v130 = vadd.f32 %v128, %v129
      %v131 = vadd.f32 %v121, %v130
      %132 = vst [vmem:[%s1] sm:$0x1] %v131
      %v133 = vld [vmem:[%s1 + $0x1] sm:$0x1]
      %v134 = vmul.f32 %v109, %v109
      %v135 = vmul.f32 %v110, %v110
      %v136 = vmul.f32 %v111, %v111
      %v137 = vmul.f32 %v112, %v112
      %v138 = vadd.f32 %v134, %v135
      %v139 = vadd.f32 %v138, %v136
      %v140 = vadd.f32 %v139, %v137
      %v141 = vrot.slane %v140, 4
      %v142 = vadd.f32 %v140, %v141
      %v143 = vrot.slane %v142, 2
      %v144 = vadd.f32 %v142, %v143
      %v145 = vrot.slane %v144, 1
      %v146 = vadd.f32 %v144, %v145
      %v147 = vadd.f32 %v133, %v146
      %148 = vst [vmem:[%s1 + $0x1] sm:$0x1] %v147
      %v149 = vld [vmem:[%s1 + $0x2] sm:$0x1]
      %v150 = vmul.f32 %v109, %v114
      %v151 = vmul.f32 %v110, %v116
      %v152 = vmul.f32 %v111, %v118
      %v153 = vmul.f32 %v112, %v120
      %v154 = vadd.f32 %v150, %v151
      %v155 = vadd.f32 %v154, %v152
      %v156 = vadd.f32 %v155, %v153
      %v157 = vrot.slane %v156, 4
      %v158 = vadd.f32 %v156, %v157
      %v159 = vrot.slane %v158, 2
      %v160 = vadd.f32 %v158, %v159
      %v161 = vrot.slane %v160, 1
      %v162 = vadd.f32 %v160, %v161
      %v163 = vadd.f32 %v149, %v162
      %164 = vst [vmem:[%s1 + $0x2] sm:$0x1] %v163
      // Predicated region
      $region29: #{base_encoder_forward.13} parent=23 // pred_check
        %p165 = pneg %p51
      $region30: #{base_encoder_forward.13} parent=23 // pred_check_branch
        %167 = sbr.rel (%p165) target = $region32
      $region31: #{base_encoder_forward.13} parent=23 // pred_region
        _
      $region32: #{base_encoder_forward.13} parent=23 // pred_fallthru
        _
      // Predicated region
      $region33: #{base_encoder_forward.13} parent=23 // pred_check
        %p168 = pneg %p51
      $region34: #{base_encoder_forward.13} parent=23 // pred_check_branch
        %170 = sbr.rel (%p168) target = $region36
      $region35: #{base_encoder_forward.13} parent=23 // pred_region
        _
      $region36: #{base_encoder_forward.13} parent=23 // pred_fallthru
        _
    $region24: #{base_encoder_forward.13} parent=5 // pred_fallthru
      _
    %p171 = scmp.le.s32.totalorder 2, %s7
    // Predicated region
    $region37: #{base_encoder_forward.13} parent=5 // pred_check
      %p172 = pneg %p171
    $region38: #{base_encoder_forward.13} parent=5 // pred_check_branch
      %174 = sbr.rel (%p172) target = $region40
    $region39: #{base_encoder_forward.13} parent=5 // pred_region
      %s175 = ssub.s32 %s7, 2
    $region40: #{base_encoder_forward.13} parent=5 // pred_fallthru
      _
  $region6: #{base_encoder_forward.13} parent=0 // loop_footer
    %s11 = sadd.s32 1, %s7
  $region7: #{base_encoder_forward.13} parent=0 // loop_footer_branch
    %6 = sbr.rel target = $region3
  $region8: #{base_encoder_forward.13} parent=0 // loop_exit
    _

// kernel: base_encoder_forward.14
$region0: #{base_encoder_forward.14}
  #allocation0 [shape = 'u32[]', space=smem, size = 0x4, offset = 0x4, fixed_abs, tag = 'smem constant byte address 0x4 - core index']
  #allocation1 [shape = 'u32[72,128]{1,0:T(1,128)}', space=vmem, size = 0x9000, scoped, tag = 'internal scratch']
  %s0 = inlined_call_operand.vmem [shape: f32[64,128], index: 0, kind: input, shape index: {}]
  %s1 = inlined_call_operand.vmem [shape: f32[1,128], index: 1, kind: input, shape index: {}]
  %s2 = inlined_call_operand.vmem [shape: f32[1,128], index: 2, kind: input, shape index: {}]
  %s3 = inlined_call_operand.vmem [shape: f32[1,128], index: 3, kind: input, shape index: {}]
  %s4 = inlined_call_operand.vmem [shape: bf16[64,128], index: 4, kind: output, shape index: {}]
  %s5 = sld [smem:[#allocation0]]
  $region49: #{base_encoder_forward.14} parent=0
    _
  %s7 = ssub.s32 1, %s5
  %s8 = scalar_select 0, %s7, %s5
  loop: start=0, step=1, limit=4
  $region2: #{base_encoder_forward.14} parent=0 // loop_pre_header
    _
  $region3: #{base_encoder_forward.14} parent=0 // loop_header
    %s10 = sphi 0, %s14
    %p11 = scmp.ge.s32.totalorder %s10, 4
    %s20 = sphi 0, %s22
    %s23 = sphi 0, %s20
    %s24 = sphi 0, %s23
    %s40 = sphi 0, %s24
    %s44 = sphi 0, %s44
    %s46 = sphi 0, %s44
    %s47 = sphi 0, %s46
    %s61 = sphi 0, %s47
    %s65 = sphi 0, %s65
    %s67 = sphi 0, %s65
    %s68 = sphi 0, %s67
    %s82 = sphi 0, %s68
    %s86 = sphi 0, %s86
    %s88 = sphi 0, %s86
    %s89 = sphi 0, %s88
    %s103 = sphi 0, %s89
    %s109 = sphi 0, %s111
    %s112 = sphi 0, %s109
    %s113 = sphi 0, %s112
    %s129 = sphi 0, %s113
  $region4: #{base_encoder_forward.14} parent=0 // loop_header_branch
    %13 = sbr.rel (%p11) target = $region8
  $region5: #{base_encoder_forward.14} parent=0 // loop_body
    %s15 = ssub.s32 %s10, 1
    %s16 = ssub.s32 %s10, 2
    %s17 = sadd.s32 %s10, 1
    %s18 = ssub.s32 %s10, %s17
    %p19 = scmp.eq.s32.totalorder %s18, 0
    %s21 = sadd.s32 %s20, 1
    %s22 = scalar_select %p19, %s20, %s21
    %p25 = pneg %p19
    %p26 = scmp.eq.s32.totalorder %s10, 1
    %p27 = por %p25, %p26
    %p28 = scmp.ne.s32.totalorder %s20, %s23
    %p29 = scmp.eq.s32.totalorder %s10, 0
    %p30 = por %p28, %p29
    %p31 = scmp.ne.s32.totalorder %s20, %s23
    %p32 = scmp.eq.s32.totalorder %s15, 1
    %p33 = por %p31, %p32
    %p34 = scmp.ne.s32.totalorder %s23, %s24
    %p35 = scmp.eq.s32.totalorder %s15, 0
    %p36 = por %p34, %p35
    %p37 = scmp.ne.s32.totalorder %s23, %s24
    %p38 = scmp.eq.s32.totalorder %s16, 1
    %p39 = por %p37, %p38
    %p41 = scmp.ne.s32.totalorder %s24, %s40
    %p42 = scmp.eq.s32.totalorder %s16, 0
    %p43 = por %p41, %p42
    %s45 = sadd.s32 %s44, 1
    %p48 = scmp.eq.s32.totalorder %s10, 1
    %p49 = scmp.ne.s32.totalorder %s44, %s46
    %p50 = scmp.eq.s32.totalorder %s10, 0
    %p51 = por %p49, %p50
    %p52 = scmp.ne.s32.totalorder %s44, %s46
    %p53 = scmp.eq.s32.totalorder %s15, 1
    %p54 = por %p52, %p53
    %p55 = scmp.ne.s32.totalorder %s46, %s47
    %p56 = scmp.eq.s32.totalorder %s15, 0
    %p57 = por %p55, %p56
    %p58 = scmp.ne.s32.totalorder %s46, %s47
    %p59 = scmp.eq.s32.totalorder %s16, 1
    %p60 = por %p58, %p59
    %p62 = scmp.ne.s32.totalorder %s47, %s61
    %p63 = scmp.eq.s32.totalorder %s16, 0
    %p64 = por %p62, %p63
    %s66 = sadd.s32 %s65, 1
    %p69 = scmp.eq.s32.totalorder %s10, 1
    %p70 = scmp.ne.s32.totalorder %s65, %s67
    %p71 = scmp.eq.s32.totalorder %s10, 0
    %p72 = por %p70, %p71
    %p73 = scmp.ne.s32.totalorder %s65, %s67
    %p74 = scmp.eq.s32.totalorder %s15, 1
    %p75 = por %p73, %p74
    %p76 = scmp.ne.s32.totalorder %s67, %s68
    %p77 = scmp.eq.s32.totalorder %s15, 0
    %p78 = por %p76, %p77
    %p79 = scmp.ne.s32.totalorder %s67, %s68
    %p80 = scmp.eq.s32.totalorder %s16, 1
    %p81 = por %p79, %p80
    %p83 = scmp.ne.s32.totalorder %s68, %s82
    %p84 = scmp.eq.s32.totalorder %s16, 0
    %p85 = por %p83, %p84
    %s87 = sadd.s32 %s86, 1
    %p90 = scmp.eq.s32.totalorder %s10, 1
    %p91 = scmp.ne.s32.totalorder %s86, %s88
    %p92 = scmp.eq.s32.totalorder %s10, 0
    %p93 = por %p91, %p92
    %p94 = scmp.ne.s32.totalorder %s86, %s88
    %p95 = scmp.eq.s32.totalorder %s15, 1
    %p96 = por %p94, %p95
    %p97 = scmp.ne.s32.totalorder %s88, %s89
    %p98 = scmp.eq.s32.totalorder %s15, 0
    %p99 = por %p97, %p98
    %p100 = scmp.ne.s32.totalorder %s88, %s89
    %p101 = scmp.eq.s32.totalorder %s16, 1
    %p102 = por %p100, %p101
    %p104 = scmp.ne.s32.totalorder %s89, %s103
    %p105 = scmp.eq.s32.totalorder %s16, 0
    %p106 = por %p104, %p105
    %s107 = ssub.s32 %s10, %s17
    %p108 = scmp.eq.s32.totalorder %s107, 0
    %s110 = sadd.s32 %s109, 1
    %s111 = scalar_select %p108, %s109, %s110
    %p114 = pneg %p108
    %p115 = scmp.eq.s32.totalorder %s10, 1
    %p116 = por %p114, %p115
    %p117 = scmp.ne.s32.totalorder %s109, %s112
    %p118 = scmp.eq.s32.totalorder %s10, 0
    %p119 = por %p117, %p118
    %p120 = scmp.ne.s32.totalorder %s109, %s112
    %p121 = scmp.eq.s32.totalorder %s15, 1
    %p122 = por %p120, %p121
    %p123 = scmp.ne.s32.totalorder %s112, %s113
    %p124 = scmp.eq.s32.totalorder %s15, 0
    %p125 = por %p123, %p124
    %p126 = scmp.ne.s32.totalorder %s112, %s113
    %p127 = scmp.eq.s32.totalorder %s16, 1
    %p128 = por %p126, %p127
    %p130 = scmp.ne.s32.totalorder %s113, %s129
    %p131 = scmp.eq.s32.totalorder %s16, 0
    %p132 = por %p130, %p131
    %p133 = scmp.le.s32.totalorder 1, %s10
    %p134 = scmp.lt.s32.totalorder %s10, 3
    %p135 = pnand %p133, %p134
    %p136 = pneg %p135
    // Predicated region
    $region9: #{base_encoder_forward.14} parent=5 // pred_check
      _
    $region10: #{base_encoder_forward.14} parent=5 // pred_check_branch
      %138 = sbr.rel (%p135) target = $region12
    $region11: #{base_encoder_forward.14} parent=5 // pred_region
      %s139 = ssub.s32 %s10, 1
      // Predicated region
      $region13: #{base_encoder_forward.14} parent=11 // pred_check
        %p140 = pneg %p57
      $region14: #{base_encoder_forward.14} parent=11 // pred_check_branch
        %142 = sbr.rel (%p140) target = $region16
      $region15: #{base_encoder_forward.14} parent=11 // pred_region
        _
      $region16: #{base_encoder_forward.14} parent=11 // pred_fallthru
        _
      // Predicated region
      $region17: #{base_encoder_forward.14} parent=11 // pred_check
        %p143 = pneg %p78
      $region18: #{base_encoder_forward.14} parent=11 // pred_check_branch
        %145 = sbr.rel (%p143) target = $region20
      $region19: #{base_encoder_forward.14} parent=11 // pred_region
        _
      $region20: #{base_encoder_forward.14} parent=11 // pred_fallthru
        _
      // Predicated region
      $region21: #{base_encoder_forward.14} parent=11 // pred_check
        %p146 = pneg %p99
      $region22: #{base_encoder_forward.14} parent=11 // pred_check_branch
        %148 = sbr.rel (%p146) target = $region24
      $region23: #{base_encoder_forward.14} parent=11 // pred_region
        _
      $region24: #{base_encoder_forward.14} parent=11 // pred_fallthru
        _
    $region12: #{base_encoder_forward.14} parent=5 // pred_fallthru
      _
    %p149 = scmp.lt.s32.totalorder %s10, 2
    // Predicated region
    $region25: #{base_encoder_forward.14} parent=5 // pred_check
      %p150 = pneg %p149
    $region26: #{base_encoder_forward.14} parent=5 // pred_check_branch
      %152 = sbr.rel (%p150) target = $region28
    $region27: #{base_encoder_forward.14} parent=5 // pred_region
      // Predicated region
      $region29: #{base_encoder_forward.14} parent=27 // pred_check
        %p153 = pneg %p30
      $region30: #{base_encoder_forward.14} parent=27 // pred_check_branch
        %155 = sbr.rel (%p153) target = $region32
      $region31: #{base_encoder_forward.14} parent=27 // pred_region
        %s156 = smul.u32 4, %s10
        %p157 = scmp.lt.s32.totalorder %s156, 7
        %s158 = scalar_select %p157, %s156, 7
        %s159 = smul.addr %s158, 8
        %s160 = scalar_lea.vmem %s0, %s159
        %s161 = smul.u32 4, %s10
      $region32: #{base_encoder_forward.14} parent=27 // pred_fallthru
        _
    $region28: #{base_encoder_forward.14} parent=5 // pred_fallthru
      _
    %p162 = scmp.le.s32.totalorder 1, %s10
    %p163 = scmp.lt.s32.totalorder %s10, 3
    %p164 = pnand %p162, %p163
    %p165 = pneg %p164
    // Predicated region
    $region33: #{base_encoder_forward.14} parent=5 // pred_check
      _
    $region34: #{base_encoder_forward.14} parent=5 // pred_check_branch
      %167 = sbr.rel (%p164) target = $region36
    $region35: #{base_encoder_forward.14} parent=5 // pred_region
      %s168 = ssub.s32 %s10, 1
      %s169 = smul.u32 4, %s15
      %p170 = scmp.lt.s32.totalorder %s169, 7
      %s171 = scalar_select %p170, %s169, 7
      %s172 = smul.addr %s171, 8
      %s173 = scalar_lea.vmem %s0, %s172
      %p174 = pneg %p36
      %p175 = pneg %p33
      %p176 = pneg %p57
      %p177 = pneg %p54
      %p178 = pneg %p78
      %p179 = pneg %p75
      %p180 = pneg %p99
      %p181 = pneg %p96
      %p182 = pneg %p125
      %p183 = pneg %p122
      %s184 = smul.u32 4, %s15
      %p185 = scmp.lt.s32.totalorder %s184, 7
      %s186 = scalar_select %p185, %s184, 7
      %s187 = smul.addr %s186, 4
      %s188 = scalar_lea.vmem %s4, %s187
      %s189 = smul.u32 4, %s15
      %p190 = scmp.lt.s32.totalorder %s189, 7
      %s191 = scalar_select %p190, %s189, 7
      %s192 = smul.addr %s191, 8
      %s193 = scalar_lea.vmem %s0, %s192
      %s194 = smul.u32 4, %s15
      %s195 = smul.u32 4, %s15
      %p196 = scmp.lt.s32.totalorder %s195, 7
      %s197 = scalar_select %p196, %s195, 7
      %s198 = smul.addr %s197, 4
      %s199 = scalar_lea.vmem %s4, %s198
      %s200 = smul.u32 4, %s15
      %v201 = vld [vmem:[%s193] sm:$0xff]
      %v202 = vld [vmem:[%s193 + $0x8] sm:$0xff]
      %v203 = vld [vmem:[%s193 + $0x10] sm:$0xff]
      %v204 = vld [vmem:[%s193 + $0x18] sm:$0xff]
      %205 = vrot.lane.b32.xlu0 %v201, 64
      %v206 = vpop.permute.xlu0 %205
      %207 = vrot.lane.b32.xlu0 %v202, 64
      %v208 = vpop.permute.xlu0 %207
      %209 = vrot.lane.b32.xlu0 %v203, 64
      %v210 = vpop.permute.xlu0 %209
      %211 = vrot.lane.b32.xlu0 %v204, 64
      %v212 = vpop.permute.xlu0 %211
      %v213 = vld [vmem:[%s1] sm:$0x1]
      %v215 = vperm.slane %v213, 0
      %v217 = vmul.f32 %v215, %v201
      %v218 = vmul.f32 %v215, %v202
      %v219 = vmul.f32 %v215, %v203
      %v220 = vmul.f32 %v215, %v204
      %v221 = vld [vmem:[%s2] sm:$0x1]
      %v223 = vperm.slane %v221, 0
      %v225 = vmul.f32 %v223, %v206
      %v226 = vmul.f32 %v223, %v208
      %v227 = vmul.f32 %v223, %v210
      %v228 = vmul.f32 %v223, %v212
      %v229 = vadd.f32 %v217, %v225
      %v230 = vadd.f32 %v218, %v226
      %v231 = vadd.f32 %v219, %v227
      %v232 = vadd.f32 %v220, %v228
      %v233 = vld [vmem:[%s3] sm:$0x1]
      %v235 = vperm.slane %v233, 0
      %v237 = vadd.f32 %v229, %v235
      %v238 = vadd.f32 %v230, %v235
      %v239 = vadd.f32 %v231, %v235
      %v240 = vadd.f32 %v232, %v235
      %v241 = vmax.f32 %v237, 0.0
      %v242 = vmax.f32 %v238, 0.0
      %v243 = vmax.f32 %v239, 0.0
      %v244 = vmax.f32 %v240, 0.0
      %v245 = vpack.c.bf16 %v241, %v241
      %v246 = vpack.c.bf16 %v242, %v242
      %v247 = vpack.c.bf16 %v243, %v243
      %v248 = vpack.c.bf16 %v244, %v244
      %249 = vst [vmem:[%s199] sm:$0xf] %v245
      %250 = vst [vmem:[%s199 + $0x4] sm:$0xf] %v246
      %251 = vst [vmem:[%s199 + $0x8] sm:$0xf] %v247
      %252 = vst [vmem:[%s199 + $0xc] sm:$0xf] %v248
      %s253 = smul.u32 4, %s15
      %p254 = scmp.lt.s32.totalorder %s253, 7
      %s255 = scalar_select %p254, %s253, 7
      %s256 = smul.addr %s255, 4
      %s257 = scalar_lea.vmem %s4, %s256
      // Predicated region
      $region37: #{base_encoder_forward.14} parent=35 // pred_check
        %p258 = pneg %p122
      $region38: #{base_encoder_forward.14} parent=35 // pred_check_branch
        %260 = sbr.rel (%p258) target = $region40
      $region39: #{base_encoder_forward.14} parent=35 // pred_region
        %s261 = smul.u32 4, %s15
      $region40: #{base_encoder_forward.14} parent=35 // pred_fallthru
        _
    $region36: #{base_encoder_forward.14} parent=5 // pred_fallthru
      _
    %p262 = scmp.le.s32.totalorder 2, %s10
    // Predicated region
    $region41: #{base_encoder_forward.14} parent=5 // pred_check
      %p263 = pneg %p262
    $region42: #{base_encoder_forward.14} parent=5 // pred_check_branch
      %265 = sbr.rel (%p263) target = $region44
    $region43: #{base_encoder_forward.14} parent=5 // pred_region
      %s266 = ssub.s32 %s10, 2
      // Predicated region
      $region45: #{base_encoder_forward.14} parent=43 // pred_check
        %p267 = pneg %p128
      $region46: #{base_encoder_forward.14} parent=43 // pred_check_branch
        %269 = sbr.rel (%p267) target = $region48
      $region47: #{base_encoder_forward.14} parent=43 // pred_region
        %s270 = smul.u32 4, %s16
        %p271 = scmp.lt.s32.totalorder %s270, 7
        %s272 = scalar_select %p271, %s270, 7
        %s273 = smul.addr %s272, 4
        %s274 = scalar_lea.vmem %s4, %s273
      $region48: #{base_encoder_forward.14} parent=43 // pred_fallthru
        _
    $region44: #{base_encoder_forward.14} parent=5 // pred_fallthru
      _
  $region6: #{base_encoder_forward.14} parent=0 // loop_footer
    %s14 = sadd.s32 1, %s10
  $region7: #{base_encoder_forward.14} parent=0 // loop_footer_branch
    %9 = sbr.rel target = $region3
  $region8: #{base_encoder_forward.14} parent=0 // loop_exit
    _

// kernel: base_encoder_forward.12
$region0: #{base_encoder_forward.12}
  #allocation0 [shape = 'u32[]', space=smem, size = 0x4, offset = 0x4, fixed_abs, tag = 'smem constant byte address 0x4 - core index']
  #allocation1 [shape = 'u32[72,128]{1,0:T(1,128)}', space=vmem, size = 0x9000, scoped, tag = 'internal scratch']
  %s0 = inlined_call_operand.vmem [shape: bf16[2,44,128], index: 0, kind: input, shape index: {}]
  %s1 = inlined_call_operand.vmem [shape: bf16[2,44,128], index: 1, kind: input, shape index: {}]
  %s2 = inlined_call_operand.vmem [shape: bf16[4,128,64], index: 2, kind: input, shape index: {}]
  %s3 = inlined_call_operand.vmem [shape: bf16[4,128,64], index: 3, kind: input, shape index: {}]
  %s4 = inlined_call_operand.vmem [shape: bf16[4,128,64], index: 4, kind: input, shape index: {}]
  %s5 = inlined_call_operand.vmem [shape: f32[2,32,128], index: 5, kind: output, shape index: {}]
  %s6 = sld [smem:[#allocation0]]
  $region53: #{base_encoder_forward.12} parent=0
    _
  %s8 = ssub.s32 1, %s6
  %s9 = scalar_select 0, %s8, %s6
  loop: start=0, step=1, limit=4
  $region2: #{base_encoder_forward.12} parent=0 // loop_pre_header
    _
  $region3: #{base_encoder_forward.12} parent=0 // loop_header
    %s11 = sphi 0, %s15
    %p12 = scmp.ge.s32.totalorder %s11, 4
    %s21 = sphi 0, %s23
    %s24 = sphi 0, %s21
    %s25 = sphi 0, %s24
    %s41 = sphi 0, %s25
    %s47 = sphi 0, %s49
    %s50 = sphi 0, %s47
    %s51 = sphi 0, %s50
    %s67 = sphi 0, %s51
    %s71 = sphi 0, %s71
    %s73 = sphi 0, %s71
    %s74 = sphi 0, %s73
    %s88 = sphi 0, %s74
    %s92 = sphi 0, %s92
    %s94 = sphi 0, %s92
    %s95 = sphi 0, %s94
    %s109 = sphi 0, %s95
    %s113 = sphi 0, %s113
    %s115 = sphi 0, %s113
    %s116 = sphi 0, %s115
    %s130 = sphi 0, %s116
    %s136 = sphi 0, %s138
    %s139 = sphi 0, %s136
    %s140 = sphi 0, %s139
    %s156 = sphi 0, %s140
  $region4: #{base_encoder_forward.12} parent=0 // loop_header_branch
    %14 = sbr.rel (%p12) target = $region8
  $region5: #{base_encoder_forward.12} parent=0 // loop_body
    %s16 = ssub.s32 %s11, 1
    %s17 = ssub.s32 %s11, 2
    %s18 = sadd.s32 %s11, 1
    %s19 = ssub.s32 %s11, %s18
    %p20 = scmp.eq.s32.totalorder %s19, 0
    %s22 = sadd.s32 %s21, 1
    %s23 = scalar_select %p20, %s21, %s22
    %p26 = pneg %p20
    %p27 = scmp.eq.s32.totalorder %s11, 1
    %p28 = por %p26, %p27
    %p29 = scmp.ne.s32.totalorder %s21, %s24
    %p30 = scmp.eq.s32.totalorder %s11, 0
    %p31 = por %p29, %p30
    %p32 = scmp.ne.s32.totalorder %s21, %s24
    %p33 = scmp.eq.s32.totalorder %s16, 1
    %p34 = por %p32, %p33
    %p35 = scmp.ne.s32.totalorder %s24, %s25
    %p36 = scmp.eq.s32.totalorder %s16, 0
    %p37 = por %p35, %p36
    %p38 = scmp.ne.s32.totalorder %s24, %s25
    %p39 = scmp.eq.s32.totalorder %s17, 1
    %p40 = por %p38, %p39
    %p42 = scmp.ne.s32.totalorder %s25, %s41
    %p43 = scmp.eq.s32.totalorder %s17, 0
    %p44 = por %p42, %p43
    %s45 = ssub.s32 %s11, %s18
    %p46 = scmp.eq.s32.totalorder %s45, 0
    %s48 = sadd.s32 %s47, 1
    %s49 = scalar_select %p46, %s47, %s48
    %p52 = pneg %p46
    %p53 = scmp.eq.s32.totalorder %s11, 1
    %p54 = por %p52, %p53
    %p55 = scmp.ne.s32.totalorder %s47, %s50
    %p56 = scmp.eq.s32.totalorder %s11, 0
    %p57 = por %p55, %p56
    %p58 = scmp.ne.s32.totalorder %s47, %s50
    %p59 = scmp.eq.s32.totalorder %s16, 1
    %p60 = por %p58, %p59
    %p61 = scmp.ne.s32.totalorder %s50, %s51
    %p62 = scmp.eq.s32.totalorder %s16, 0
    %p63 = por %p61, %p62
    %p64 = scmp.ne.s32.totalorder %s50, %s51
    %p65 = scmp.eq.s32.totalorder %s17, 1
    %p66 = por %p64, %p65
    %p68 = scmp.ne.s32.totalorder %s51, %s67
    %p69 = scmp.eq.s32.totalorder %s17, 0
    %p70 = por %p68, %p69
    %s72 = sadd.s32 %s71, 1
    %p75 = scmp.eq.s32.totalorder %s11, 1
    %p76 = scmp.ne.s32.totalorder %s71, %s73
    %p77 = scmp.eq.s32.totalorder %s11, 0
    %p78 = por %p76, %p77
    %p79 = scmp.ne.s32.totalorder %s71, %s73
    %p80 = scmp.eq.s32.totalorder %s16, 1
    %p81 = por %p79, %p80
    %p82 = scmp.ne.s32.totalorder %s73, %s74
    %p83 = scmp.eq.s32.totalorder %s16, 0
    %p84 = por %p82, %p83
    %p85 = scmp.ne.s32.totalorder %s73, %s74
    %p86 = scmp.eq.s32.totalorder %s17, 1
    %p87 = por %p85, %p86
    %p89 = scmp.ne.s32.totalorder %s74, %s88
    %p90 = scmp.eq.s32.totalorder %s17, 0
    %p91 = por %p89, %p90
    %s93 = sadd.s32 %s92, 1
    %p96 = scmp.eq.s32.totalorder %s11, 1
    %p97 = scmp.ne.s32.totalorder %s92, %s94
    %p98 = scmp.eq.s32.totalorder %s11, 0
    %p99 = por %p97, %p98
    %p100 = scmp.ne.s32.totalorder %s92, %s94
    %p101 = scmp.eq.s32.totalorder %s16, 1
    %p102 = por %p100, %p101
    %p103 = scmp.ne.s32.totalorder %s94, %s95
    %p104 = scmp.eq.s32.totalorder %s16, 0
    %p105 = por %p103, %p104
    %p106 = scmp.ne.s32.totalorder %s94, %s95
    %p107 = scmp.eq.s32.totalorder %s17, 1
    %p108 = por %p106, %p107
    %p110 = scmp.ne.s32.totalorder %s95, %s109
    %p111 = scmp.eq.s32.totalorder %s17, 0
    %p112 = por %p110, %p111
    %s114 = sadd.s32 %s113, 1
    %p117 = scmp.eq.s32.totalorder %s11, 1
    %p118 = scmp.ne.s32.totalorder %s113, %s115
    %p119 = scmp.eq.s32.totalorder %s11, 0
    %p120 = por %p118, %p119
    %p121 = scmp.ne.s32.totalorder %s113, %s115
    %p122 = scmp.eq.s32.totalorder %s16, 1
    %p123 = por %p121, %p122
    %p124 = scmp.ne.s32.totalorder %s115, %s116
    %p125 = scmp.eq.s32.totalorder %s16, 0
    %p126 = por %p124, %p125
    %p127 = scmp.ne.s32.totalorder %s115, %s116
    %p128 = scmp.eq.s32.totalorder %s17, 1
    %p129 = por %p127, %p128
    %p131 = scmp.ne.s32.totalorder %s116, %s130
    %p132 = scmp.eq.s32.totalorder %s17, 0
    %p133 = por %p131, %p132
    %s134 = ssub.s32 %s11, %s18
    %p135 = scmp.eq.s32.totalorder %s134, 0
    %s137 = sadd.s32 %s136, 1
    %s138 = scalar_select %p135, %s136, %s137
    %p141 = pneg %p135
    %p142 = scmp.eq.s32.totalorder %s11, 1
    %p143 = por %p141, %p142
    %p144 = scmp.ne.s32.totalorder %s136, %s139
    %p145 = scmp.eq.s32.totalorder %s11, 0
    %p146 = por %p144, %p145
    %p147 = scmp.ne.s32.totalorder %s136, %s139
    %p148 = scmp.eq.s32.totalorder %s16, 1
    %p149 = por %p147, %p148
    %p150 = scmp.ne.s32.totalorder %s139, %s140
    %p151 = scmp.eq.s32.totalorder %s16, 0
    %p152 = por %p150, %p151
    %p153 = scmp.ne.s32.totalorder %s139, %s140
    %p154 = scmp.eq.s32.totalorder %s17, 1
    %p155 = por %p153, %p154
    %p157 = scmp.ne.s32.totalorder %s140, %s156
    %p158 = scmp.eq.s32.totalorder %s17, 0
    %p159 = por %p157, %p158
    %p160 = scmp.le.s32.totalorder 1, %s11
    %p161 = scmp.lt.s32.totalorder %s11, 3
    %p162 = pnand %p160, %p161
    %p163 = pneg %p162
    // Predicated region
    $region9: #{base_encoder_forward.12} parent=5 // pred_check
      _
    $region10: #{base_encoder_forward.12} parent=5 // pred_check_branch
      %165 = sbr.rel (%p162) target = $region12
    $region11: #{base_encoder_forward.12} parent=5 // pred_region
      %s166 = ssub.s32 %s11, 1
      // Predicated region
      $region13: #{base_encoder_forward.12} parent=11 // pred_check
        %p167 = pneg %p84
      $region14: #{base_encoder_forward.12} parent=11 // pred_check_branch
        %169 = sbr.rel (%p167) target = $region16
      $region15: #{base_encoder_forward.12} parent=11 // pred_region
        _
      $region16: #{base_encoder_forward.12} parent=11 // pred_fallthru
        _
      // Predicated region
      $region17: #{base_encoder_forward.12} parent=11 // pred_check
        %p170 = pneg %p105
      $region18: #{base_encoder_forward.12} parent=11 // pred_check_branch
        %172 = sbr.rel (%p170) target = $region20
      $region19: #{base_encoder_forward.12} parent=11 // pred_region
        _
      $region20: #{base_encoder_forward.12} parent=11 // pred_fallthru
        _
      // Predicated region
      $region21: #{base_encoder_forward.12} parent=11 // pred_check
        %p173 = pneg %p126
      $region22: #{base_encoder_forward.12} parent=11 // pred_check_branch
        %175 = sbr.rel (%p173) target = $region24
      $region23: #{base_encoder_forward.12} parent=11 // pred_region
        _
      $region24: #{base_encoder_forward.12} parent=11 // pred_fallthru
        _
    $region12: #{base_encoder_forward.12} parent=5 // pred_fallthru
      _
    %p176 = scmp.lt.s32.totalorder %s11, 2
    // Predicated region
    $region25: #{base_encoder_forward.12} parent=5 // pred_check
      %p177 = pneg %p176
    $region26: #{base_encoder_forward.12} parent=5 // pred_check_branch
      %179 = sbr.rel (%p177) target = $region28
    $region27: #{base_encoder_forward.12} parent=5 // pred_region
      // Predicated region
      $region29: #{base_encoder_forward.12} parent=27 // pred_check
        %p180 = pneg %p31
      $region30: #{base_encoder_forward.12} parent=27 // pred_check_branch
        %182 = sbr.rel (%p180) target = $region32
      $region31: #{base_encoder_forward.12} parent=27 // pred_region
        %p183 = scmp.lt.s32.totalorder %s11, 1
        %s184 = scalar_select %p183, %s11, 1
        %s185 = smul.addr %s184, 6
        %s186 = smul.addr %s185, 4
        %s187 = scalar_lea.vmem %s0, %s186
      $region32: #{base_encoder_forward.12} parent=27 // pred_fallthru
        _
      // Predicated region
      $region33: #{base_encoder_forward.12} parent=27 // pred_check
        %p188 = pneg %p57
      $region34: #{base_encoder_forward.12} parent=27 // pred_check_branch
        %190 = sbr.rel (%p188) target = $region36
      $region35: #{base_encoder_forward.12} parent=27 // pred_region
        %p191 = scmp.lt.s32.totalorder %s11, 1
        %s192 = scalar_select %p191, %s11, 1
        %s193 = smul.addr %s192, 6
        %s194 = smul.addr %s193, 4
        %s195 = scalar_lea.vmem %s1, %s194
      $region36: #{base_encoder_forward.12} parent=27 // pred_fallthru
        _
    $region28: #{base_encoder_forward.12} parent=5 // pred_fallthru
      _
    %p196 = scmp.le.s32.totalorder 1, %s11
    %p197 = scmp.lt.s32.totalorder %s11, 3
    %p198 = pnand %p196, %p197
    %p199 = pneg %p198
    // Predicated region
    $region37: #{base_encoder_forward.12} parent=5 // pred_check
      _
    $region38: #{base_encoder_forward.12} parent=5 // pred_check_branch
      %201 = sbr.rel (%p198) target = $region40
    $region39: #{base_encoder_forward.12} parent=5 // pred_region
      %s202 = ssub.s32 %s11, 1
      %p203 = scmp.lt.s32.totalorder %s16, 1
      %s204 = scalar_select %p203, %s16, 1
      %s205 = smul.addr %s204, 6
      %s206 = smul.addr %s205, 4
      %s207 = scalar_lea.vmem %s0, %s206
      %p208 = pneg %p37
      %p209 = pneg %p34
      %p210 = scmp.lt.s32.totalorder %s16, 1
      %s211 = scalar_select %p210, %s16, 1
      %s212 = smul.addr %s211, 6
      %s213 = smul.addr %s212, 4
      %s214 = scalar_lea.vmem %s1, %s213
      %p215 = pneg %p63
      %p216 = pneg %p60
      %p217 = pneg %p84
      %p218 = pneg %p81
      %p219 = pneg %p105
      %p220 = pneg %p102
      %p221 = pneg %p126
      %p222 = pneg %p123
      %p223 = pneg %p152
      %p224 = pneg %p149
      %p225 = scmp.lt.s32.totalorder %s16, 1
      %s226 = scalar_select %p225, %s16, 1
      %s227 = smul.addr %s226, 4
      %s228 = smul.addr %s227, 8
      %s229 = scalar_lea.vmem %s5, %s228
      %p230 = scmp.lt.s32.totalorder %s16, 1
      %s231 = scalar_select %p230, %s16, 1
      %s232 = smul.addr %s231, 6
      %s233 = smul.addr %s232, 4
      %s234 = scalar_lea.vmem %s0, %s233
      %p235 = scmp.lt.s32.totalorder %s16, 1
      %s236 = scalar_select %p235, %s16, 1
      %s237 = smul.addr %s236, 6
      %s238 = smul.addr %s237, 4
      %s239 = scalar_lea.vmem %s1, %s238
      %p240 = scmp.lt.s32.totalorder %s16, 1
      %s241 = scalar_select %p240, %s16, 1
      %s242 = smul.addr %s241, 4
      %s243 = smul.addr %s242, 8
      %s244 = scalar_lea.vmem %s5, %s243
      %v245 = vld [vmem:[%s234] sm:$0xf]
      %v246 = vld [vmem:[%s234 + $0x4] sm:$0xf]
      %v247 = vld [vmem:[%s234 + $0x8] sm:$0xf]
      %v248 = vld [vmem:[%s234 + $0xc] sm:$0xf]
      %v249 = vld [vmem:[%s239] sm:$0xf]
      %v250 = vld [vmem:[%s239 + $0x4] sm:$0xf]
      %v251 = vld [vmem:[%s239 + $0x8] sm:$0xf]
      %v252 = vld [vmem:[%s239 + $0xc] sm:$0xf]
      %v253 = vunpack.c.l.bf16 %v245
      %v254 = vunpack.c.l.bf16 %v246
      %v255 = vunpack.c.l.bf16 %v247
      %v256 = vunpack.c.l.bf16 %v248
      %v257 = vunpack.c.l.bf16 %v249
      %v258 = vunpack.c.l.bf16 %v250
      %v259 = vunpack.c.l.bf16 %v251
      %v260 = vunpack.c.l.bf16 %v252
      %v261 = vadd.f32 %v253, %v257
      %v262 = vadd.f32 %v254, %v258
      %v263 = vadd.f32 %v255, %v259
      %v264 = vadd.f32 %v256, %v260
      %v265 = vpack.c.bf16 %v262, %v261
      %v266 = vpack.c.bf16 %v264, %v263
      %v267 = vld [vmem:[%s2] sm:$0xf]
      %v268 = vld [vmem:[%s2 + $0x4] sm:$0xf]
      %v269 = vld [vmem:[%s2 + $0x8] sm:$0xf]
      %v270 = vld [vmem:[%s2 + $0xc] sm:$0xf]
      %v271 = vld [vmem:[%s2 + $0x10] sm:$0xf]
      %v272 = vld [vmem:[%s2 + $0x14] sm:$0xf]
      %v273 = vld [vmem:[%s2 + $0x18] sm:$0xf]
      %v274 = vld [vmem:[%s2 + $0x1c] sm:$0xf]
      %v275 = vld [vmem:[%s2 + $0x20] sm:$0xf]
      %v276 = vld [vmem:[%s2 + $0x24] sm:$0xf]
      %v277 = vld [vmem:[%s2 + $0x28] sm:$0xf]
      %v278 = vld [vmem:[%s2 + $0x2c] sm:$0xf]
      %v279 = vld [vmem:[%s2 + $0x30] sm:$0xf]
      %v280 = vld [vmem:[%s2 + $0x34] sm:$0xf]
      %v281 = vld [vmem:[%s2 + $0x38] sm:$0xf]
      %v282 = vld [vmem:[%s2 + $0x3c] sm:$0xf]
      %v283 = vld [vmem:[%s3] sm:$0xf]
      %v284 = vld [vmem:[%s3 + $0x4] sm:$0xf]
      %v285 = vld [vmem:[%s3 + $0x8] sm:$0xf]
      %v286 = vld [vmem:[%s3 + $0xc] sm:$0xf]
      %v287 = vld [vmem:[%s3 + $0x10] sm:$0xf]
      %v288 = vld [vmem:[%s3 + $0x14] sm:$0xf]
      %v289 = vld [vmem:[%s3 + $0x18] sm:$0xf]
      %v290 = vld [vmem:[%s3 + $0x1c] sm:$0xf]
      %v291 = vld [vmem:[%s3 + $0x20] sm:$0xf]
      %v292 = vld [vmem:[%s3 + $0x24] sm:$0xf]
      %v293 = vld [vmem:[%s3 + $0x28] sm:$0xf]
      %v294 = vld [vmem:[%s3 + $0x2c] sm:$0xf]
      %v295 = vld [vmem:[%s3 + $0x30] sm:$0xf]
      %v296 = vld [vmem:[%s3 + $0x34] sm:$0xf]
      %v297 = vld [vmem:[%s3 + $0x38] sm:$0xf]
      %v298 = vld [vmem:[%s3 + $0x3c] sm:$0xf]
      %v299 = vld [vmem:[%s4] sm:$0xf]
      %v300 = vld [vmem:[%s4 + $0x4] sm:$0xf]
      %v301 = vld [vmem:[%s4 + $0x8] sm:$0xf]
      %v302 = vld [vmem:[%s4 + $0xc] sm:$0xf]
      %v303 = vld [vmem:[%s4 + $0x10] sm:$0xf]
      %v304 = vld [vmem:[%s4 + $0x14] sm:$0xf]
      %v305 = vld [vmem:[%s4 + $0x18] sm:$0xf]
      %v306 = vld [vmem:[%s4 + $0x1c] sm:$0xf]
      %v307 = vld [vmem:[%s4 + $0x20] sm:$0xf]
      %v308 = vld [vmem:[%s4 + $0x24] sm:$0xf]
      %v309 = vld [vmem:[%s4 + $0x28] sm:$0xf]
      %v310 = vld [vmem:[%s4 + $0x2c] sm:$0xf]
      %v311 = vld [vmem:[%s4 + $0x30] sm:$0xf]
      %v312 = vld [vmem:[%s4 + $0x34] sm:$0xf]
      %v313 = vld [vmem:[%s4 + $0x38] sm:$0xf]
      %v314 = vld [vmem:[%s4 + $0x3c] sm:$0xf]
      %v315 = vld [vmem:[%s234] sm:$0xc]
      %v316 = vld [vmem:[%s234 + $0x10] sm:$0x3]
      %v317 = vld [vmem:[%s239] sm:$0xc]
      %v318 = vld [vmem:[%s239 + $0x10] sm:$0x3]
      %v319 = vunpack.c.l.bf16 %v315
      %v320 = vunpack.c.l.bf16 %v316
      %v321 = vunpack.c.l.bf16 %v317
      %v322 = vunpack.c.l.bf16 %v318
      %v323 = vadd.f32 %v319, %v321
      %v324 = vadd.f32 %v320, %v322
      %v325 = vpack.c.bf16 %v262, %v323
      %v326 = vpack.c.bf16 %v324, %v324
      %s327 = scalar_lea.vmem %s2, 64
      %v328 = vld [vmem:[%s327] sm:$0xf]
      %v329 = vld [vmem:[%s327 + $0x4] sm:$0xf]
      %v330 = vld [vmem:[%s327 + $0x8] sm:$0xf]
      %v331 = vld [vmem:[%s327 + $0xc] sm:$0xf]
      %v332 = vld [vmem:[%s327 + $0x10] sm:$0xf]
      %v333 = vld [vmem:[%s327 + $0x14] sm:$0xf]
      %v334 = vld [vmem:[%s327 + $0x18] sm:$0xf]
      %v335 = vld [vmem:[%s327 + $0x1c] sm:$0xf]
      %v336 = vld [vmem:[%s327 + $0x20] sm:$0xf]
      %v337 = vld [vmem:[%s327 + $0x24] sm:$0xf]
      %v338 = vld [vmem:[%s327 + $0x28] sm:$0xf]
      %v339 = vld [vmem:[%s327 + $0x2c] sm:$0xf]
      %v340 = vld [vmem:[%s327 + $0x30] sm:$0xf]
      %v341 = vld [vmem:[%s327 + $0x34] sm:$0xf]
      %v342 = vld [vmem:[%s327 + $0x38] sm:$0xf]
      %v343 = vld [vmem:[%s327 + $0x3c] sm:$0xf]
      %v349 = vunpack.c.l.b16 %v315
      %v350 = vunpack.c.l.b16 %v246
      %v351 = vunpack.c.l.b16 %v247
      %v352 = vunpack.c.l.b16 %v248
      %v353 = vunpack.c.l.b16 %v316
      %v354 = vpack.c.b16 %v350, %v349
      %v355 = vpack.c.b16 %v352, %v351
      %v356 = vpack.c.b16 %v353, %v353
      %vm357 = vcmask 1045504
      %v358 = vrot.slane %v354, 2
      %v359 = vrot.slane %v355, 2
      %v360 = vsel %vm357, %v358, %v359
      %v361 = vrot.slane %v356, 2
      %v362 = vsel %vm357, %v359, %v361
      %v381 = vunpack.c.l.b16 %v328
      %v382 = vunpack.c.l.b16 %v329
      %v383 = vunpack.c.l.b16 %v330
      %v384 = vunpack.c.l.b16 %v331
      %v385 = vunpack.c.l.b16 %v332
      %v386 = vunpack.c.l.b16 %v333
      %v387 = vunpack.c.l.b16 %v334
      %v388 = vunpack.c.l.b16 %v335
      %v389 = vunpack.c.l.b16 %v336
      %v390 = vunpack.c.l.b16 %v337
      %v391 = vunpack.c.l.b16 %v338
      %v392 = vunpack.c.l.b16 %v339
      %v393 = vunpack.c.l.b16 %v340
      %v394 = vunpack.c.l.b16 %v341
      %v395 = vunpack.c.l.b16 %v342
      %v396 = vunpack.c.l.b16 %v343
      %v397 = vpack.c.b16 %v382, %v381
      %v398 = vpack.c.b16 %v384, %v383
      %v399 = vpack.c.b16 %v386, %v385
      %v400 = vpack.c.b16 %v388, %v387
      %v401 = vpack.c.b16 %v390, %v389
      %v402 = vpack.c.b16 %v392, %v391
      %v403 = vpack.c.b16 %v394, %v393
      %v404 = vpack.c.b16 %v396, %v395
      %413 = vmatpush.bf16.msra.mxu0 %v404
      %414 = vmatpush.bf16.msra.mxu0 %v403
      %415 = vmatpush.bf16.msra.mxu0 %v402
      %416 = vmatpush.bf16.msra.mxu0 %v401
      %417 = vmatpush.bf16.msra.mxu0 %v400
      %418 = vmatpush.bf16.msra.mxu0 %v399
      %419 = vmatpush.bf16.msra.mxu0 %v398
      %420 = vmatpush.bf16.msra.mxu0 %v397
      %421 = vmatmul.bf16.gmra.mxu0 %v360
      %v422 = vpop.f32.mrf.mxu0
      %v423 = vadd.f32 0.0, %v422
      %v424 = vpop.f32.mrf.mxu0
      %v425 = vadd.f32 0.0, %v424
      %426 = vmatmul.bf16.gmra.mxu0 %v362
      %v427 = vpop.f32.mrf.mxu0
      %v428 = vadd.f32 0.0, %v427
      %v429 = vpop.f32.mrf.mxu0
      %v430 = vadd.f32 0.0, %v429
      %431 = vdwg.mxu0
      %v433 = vunpack.c.l.b16 %v245
      %v434 = vpack.c.b16 %v350, %v433
      %v453 = vunpack.c.l.b16 %v267
      %v454 = vunpack.c.l.b16 %v268
      %v455 = vunpack.c.l.b16 %v269
      %v456 = vunpack.c.l.b16 %v270
      %v457 = vunpack.c.l.b16 %v271
      %v458 = vunpack.c.l.b16 %v272
      %v459 = vunpack.c.l.b16 %v273
      %v460 = vunpack.c.l.b16 %v274
      %v461 = vunpack.c.l.b16 %v275
      %v462 = vunpack.c.l.b16 %v276
      %v463 = vunpack.c.l.b16 %v277
      %v464 = vunpack.c.l.b16 %v278
      %v465 = vunpack.c.l.b16 %v279
      %v466 = vunpack.c.l.b16 %v280
      %v467 = vunpack.c.l.b16 %v281
      %v468 = vunpack.c.l.b16 %v282
      %v469 = vpack.c.b16 %v454, %v453
      %v470 = vpack.c.b16 %v456, %v455
      %v471 = vpack.c.b16 %v458, %v457
      %v472 = vpack.c.b16 %v460, %v459
      %v473 = vpack.c.b16 %v462, %v461
      %v474 = vpack.c.b16 %v464, %v463
      %v475 = vpack.c.b16 %v466, %v465
      %v476 = vpack.c.b16 %v468, %v467
      %485 = vmatpush.bf16.msra.mxu0 %v476
      %486 = vmatpush.bf16.msra.mxu0 %v475
      %487 = vmatpush.bf16.msra.mxu0 %v474
      %488 = vmatpush.bf16.msra.mxu0 %v473
      %489 = vmatpush.bf16.msra.mxu0 %v472
      %490 = vmatpush.bf16.msra.mxu0 %v471
      %491 = vmatpush.bf16.msra.mxu0 %v470
      %492 = vmatpush.bf16.msra.mxu0 %v469
      %493 = vmatmul.bf16.gmra.mxu0 %v434
      %v494 = vpop.f32.mrf.mxu0
      %v495 = vadd.f32 %v423, %v494
      %v496 = vpop.f32.mrf.mxu0
      %v497 = vadd.f32 %v425, %v496
      %498 = vmatmul.bf16.gmra.mxu0 %v355
      %v499 = vpop.f32.mrf.mxu0
      %v500 = vadd.f32 %v428, %v499
      %v501 = vpop.f32.mrf.mxu0
      %v502 = vadd.f32 %v430, %v501
      %503 = vdwg.mxu0
      %s504 = scalar_lea.vmem %s3, 64
      %v505 = vld [vmem:[%s504] sm:$0xf]
      %v506 = vld [vmem:[%s504 + $0x4] sm:$0xf]
      %v507 = vld [vmem:[%s504 + $0x8] sm:$0xf]
      %v508 = vld [vmem:[%s504 + $0xc] sm:$0xf]
      %v509 = vld [vmem:[%s504 + $0x10] sm:$0xf]
      %v510 = vld [vmem:[%s504 + $0x14] sm:$0xf]
      %v511 = vld [vmem:[%s504 + $0x18] sm:$0xf]
      %v512 = vld [vmem:[%s504 + $0x1c] sm:$0xf]
      %v513 = vld [vmem:[%s504 + $0x20] sm:$0xf]
      %v514 = vld [vmem:[%s504 + $0x24] sm:$0xf]
      %v515 = vld [vmem:[%s504 + $0x28] sm:$0xf]
      %v516 = vld [vmem:[%s504 + $0x2c] sm:$0xf]
      %v517 = vld [vmem:[%s504 + $0x30] sm:$0xf]
      %v518 = vld [vmem:[%s504 + $0x34] sm:$0xf]
      %v519 = vld [vmem:[%s504 + $0x38] sm:$0xf]
      %v520 = vld [vmem:[%s504 + $0x3c] sm:$0xf]
      %v526 = vunpack.c.l.b16 %v317
      %v527 = vunpack.c.l.b16 %v250
      %v528 = vunpack.c.l.b16 %v251
      %v529 = vunpack.c.l.b16 %v252
      %v530 = vunpack.c.l.b16 %v318
      %v531 = vpack.c.b16 %v527, %v526
      %v532 = vpack.c.b16 %v529, %v528
      %v533 = vpack.c.b16 %v530, %v530
      %v534 = vrot.slane %v531, 2
      %v535 = vrot.slane %v532, 2
      %v536 = vsel %vm357, %v534, %v535
      %v537 = vrot.slane %v533, 2
      %v538 = vsel %vm357, %v535, %v537
      %v557 = vunpack.c.l.b16 %v505
      %v558 = vunpack.c.l.b16 %v506
      %v559 = vunpack.c.l.b16 %v507
      %v560 = vunpack.c.l.b16 %v508
      %v561 = vunpack.c.l.b16 %v509
      %v562 = vunpack.c.l.b16 %v510
      %v563 = vunpack.c.l.b16 %v511
      %v564 = vunpack.c.l.b16 %v512
      %v565 = vunpack.c.l.b16 %v513
      %v566 = vunpack.c.l.b16 %v514
      %v567 = vunpack.c.l.b16 %v515
      %v568 = vunpack.c.l.b16 %v516
      %v569 = vunpack.c.l.b16 %v517
      %v570 = vunpack.c.l.b16 %v518
      %v571 = vunpack.c.l.b16 %v519
      %v572 = vunpack.c.l.b16 %v520
      %v573 = vpack.c.b16 %v558, %v557
      %v574 = vpack.c.b16 %v560, %v559
      %v575 = vpack.c.b16 %v562, %v561
      %v576 = vpack.c.b16 %v564, %v563
      %v577 = vpack.c.b16 %v566, %v565
      %v578 = vpack.c.b16 %v568, %v567
      %v579 = vpack.c.b16 %v570, %v569
      %v580 = vpack.c.b16 %v572, %v571
      %589 = vmatpush.bf16.msra.mxu0 %v580
      %590 = vmatpush.bf16.msra.mxu0 %v579
      %591 = vmatpush.bf16.msra.mxu0 %v578
      %592 = vmatpush.bf16.msra.mxu0 %v577
      %593 = vmatpush.bf16.msra.mxu0 %v576
      %594 = vmatpush.bf16.msra.mxu0 %v575
      %595 = vmatpush.bf16.msra.mxu0 %v574
      %596 = vmatpush.bf16.msra.mxu0 %v573
      %597 = vmatmul.bf16.gmra.mxu0 %v536
      %v598 = vpop.f32.mrf.mxu0
      %v599 = vadd.f32 0.0, %v598
      %v600 = vpop.f32.mrf.mxu0
      %v601 = vadd.f32 0.0, %v600
      %602 = vmatmul.bf16.gmra.mxu0 %v538
      %v603 = vpop.f32.mrf.mxu0
      %v604 = vadd.f32 0.0, %v603
      %v605 = vpop.f32.mrf.mxu0
      %v606 = vadd.f32 0.0, %v605
      %607 = vdwg.mxu0
      %v609 = vunpack.c.l.b16 %v249
      %v610 = vpack.c.b16 %v527, %v609
      %v629 = vunpack.c.l.b16 %v283
      %v630 = vunpack.c.l.b16 %v284
      %v631 = vunpack.c.l.b16 %v285
      %v632 = vunpack.c.l.b16 %v286
      %v633 = vunpack.c.l.b16 %v287
      %v634 = vunpack.c.l.b16 %v288
      %v635 = vunpack.c.l.b16 %v289
      %v636 = vunpack.c.l.b16 %v290
      %v637 = vunpack.c.l.b16 %v291
      %v638 = vunpack.c.l.b16 %v292
      %v639 = vunpack.c.l.b16 %v293
      %v640 = vunpack.c.l.b16 %v294
      %v641 = vunpack.c.l.b16 %v295
      %v642 = vunpack.c.l.b16 %v296
      %v643 = vunpack.c.l.b16 %v297
      %v644 = vunpack.c.l.b16 %v298
      %v645 = vpack.c.b16 %v630, %v629
      %v646 = vpack.c.b16 %v632, %v631
      %v647 = vpack.c.b16 %v634, %v633
      %v648 = vpack.c.b16 %v636, %v635
      %v649 = vpack.c.b16 %v638, %v637
      %v650 = vpack.c.b16 %v640, %v639
      %v651 = vpack.c.b16 %v642, %v641
      %v652 = vpack.c.b16 %v644, %v643
      %661 = vmatpush.bf16.msra.mxu0 %v652
      %662 = vmatpush.bf16.msra.mxu0 %v651
      %663 = vmatpush.bf16.msra.mxu0 %v650
      %664 = vmatpush.bf16.msra.mxu0 %v649
      %665 = vmatpush.bf16.msra.mxu0 %v648
      %666 = vmatpush.bf16.msra.mxu0 %v647
      %667 = vmatpush.bf16.msra.mxu0 %v646
      %668 = vmatpush.bf16.msra.mxu0 %v645
      %669 = vmatmul.bf16.gmra.mxu0 %v610
      %v670 = vpop.f32.mrf.mxu0
      %v671 = vadd.f32 %v599, %v670
      %v672 = vpop.f32.mrf.mxu0
      %v673 = vadd.f32 %v601, %v672
      %674 = vmatmul.bf16.gmra.mxu0 %v532
      %v675 = vpop.f32.mrf.mxu0
      %v676 = vadd.f32 %v604, %v675
      %v677 = vpop.f32.mrf.mxu0
      %v678 = vadd.f32 %v606, %v677
      %679 = vdwg.mxu0
      %s680 = scalar_lea.vmem %s4, 64
      %v681 = vld [vmem:[%s680] sm:$0xf]
      %v682 = vld [vmem:[%s680 + $0x4] sm:$0xf]
      %v683 = vld [vmem:[%s680 + $0x8] sm:$0xf]
      %v684 = vld [vmem:[%s680 + $0xc] sm:$0xf]
      %v685 = vld [vmem:[%s680 + $0x10] sm:$0xf]
      %v686 = vld [vmem:[%s680 + $0x14] sm:$0xf]
      %v687 = vld [vmem:[%s680 + $0x18] sm:$0xf]
      %v688 = vld [vmem:[%s680 + $0x1c] sm:$0xf]
      %v689 = vld [vmem:[%s680 + $0x20] sm:$0xf]
      %v690 = vld [vmem:[%s680 + $0x24] sm:$0xf]
      %v691 = vld [vmem:[%s680 + $0x28] sm:$0xf]
      %v692 = vld [vmem:[%s680 + $0x2c] sm:$0xf]
      %v693 = vld [vmem:[%s680 + $0x30] sm:$0xf]
      %v694 = vld [vmem:[%s680 + $0x34] sm:$0xf]
      %v695 = vld [vmem:[%s680 + $0x38] sm:$0xf]
      %v696 = vld [vmem:[%s680 + $0x3c] sm:$0xf]
      %v700 = vrot.slane %v325, 2
      %v701 = vrot.slane %v266, 2
      %v702 = vsel %vm357, %v700, %v701
      %v703 = vrot.slane %v326, 2
      %v704 = vsel %vm357, %v701, %v703
      %v723 = vunpack.c.l.b16 %v681
      %v724 = vunpack.c.l.b16 %v682
      %v725 = vunpack.c.l.b16 %v683
      %v726 = vunpack.c.l.b16 %v684
      %v727 = vunpack.c.l.b16 %v685
      %v728 = vunpack.c.l.b16 %v686
      %v729 = vunpack.c.l.b16 %v687
      %v730 = vunpack.c.l.b16 %v688
      %v731 = vunpack.c.l.b16 %v689
      %v732 = vunpack.c.l.b16 %v690
      %v733 = vunpack.c.l.b16 %v691
      %v734 = vunpack.c.l.b16 %v692
      %v735 = vunpack.c.l.b16 %v693
      %v736 = vunpack.c.l.b16 %v694
      %v737 = vunpack.c.l.b16 %v695
      %v738 = vunpack.c.l.b16 %v696
      %v739 = vpack.c.b16 %v724, %v723
      %v740 = vpack.c.b16 %v726, %v725
      %v741 = vpack.c.b16 %v728, %v727
      %v742 = vpack.c.b16 %v730, %v729
      %v743 = vpack.c.b16 %v732, %v731
      %v744 = vpack.c.b16 %v734, %v733
      %v745 = vpack.c.b16 %v736, %v735
      %v746 = vpack.c.b16 %v738, %v737
      %755 = vmatpush.bf16.msra.mxu0 %v746
      %756 = vmatpush.bf16.msra.mxu0 %v745
      %757 = vmatpush.bf16.msra.mxu0 %v744
      %758 = vmatpush.bf16.msra.mxu0 %v743
      %759 = vmatpush.bf16.msra.mxu0 %v742
      %760 = vmatpush.bf16.msra.mxu0 %v741
      %761 = vmatpush.bf16.msra.mxu0 %v740
      %762 = vmatpush.bf16.msra.mxu0 %v739
      %763 = vmatmul.bf16.gmra.mxu0 %v702
      %v764 = vpop.f32.mrf.mxu0
      %v765 = vadd.f32 0.0, %v764
      %v766 = vpop.f32.mrf.mxu0
      %v767 = vadd.f32 0.0, %v766
      %768 = vmatmul.bf16.gmra.mxu0 %v704
      %v769 = vpop.f32.mrf.mxu0
      %v770 = vadd.f32 0.0, %v769
      %v771 = vpop.f32.mrf.mxu0
      %v772 = vadd.f32 0.0, %v771
      %773 = vdwg.mxu0
      %v790 = vunpack.c.l.b16 %v299
      %v791 = vunpack.c.l.b16 %v300
      %v792 = vunpack.c.l.b16 %v301
      %v793 = vunpack.c.l.b16 %v302
      %v794 = vunpack.c.l.b16 %v303
      %v795 = vunpack.c.l.b16 %v304
      %v796 = vunpack.c.l.b16 %v305
      %v797 = vunpack.c.l.b16 %v306
      %v798 = vunpack.c.l.b16 %v307
      %v799 = vunpack.c.l.b16 %v308
      %v800 = vunpack.c.l.b16 %v309
      %v801 = vunpack.c.l.b16 %v310
      %v802 = vunpack.c.l.b16 %v311
      %v803 = vunpack.c.l.b16 %v312
      %v804 = vunpack.c.l.b16 %v313
      %v805 = vunpack.c.l.b16 %v314
      %v806 = vpack.c.b16 %v791, %v790
      %v807 = vpack.c.b16 %v793, %v792
      %v808 = vpack.c.b16 %v795, %v794
      %v809 = vpack.c.b16 %v797, %v796
      %v810 = vpack.c.b16 %v799, %v798
      %v811 = vpack.c.b16 %v801, %v800
      %v812 = vpack.c.b16 %v803, %v802
      %v813 = vpack.c.b16 %v805, %v804
      %822 = vmatpush.bf16.msra.mxu0 %v813
      %823 = vmatpush.bf16.msra.mxu0 %v812
      %824 = vmatpush.bf16.msra.mxu0 %v811
      %825 = vmatpush.bf16.msra.mxu0 %v810
      %826 = vmatpush.bf16.msra.mxu0 %v809
      %827 = vmatpush.bf16.msra.mxu0 %v808
      %828 = vmatpush.bf16.msra.mxu0 %v807
      %829 = vmatpush.bf16.msra.mxu0 %v806
      %830 = vmatmul.bf16.gmra.mxu0 %v265
      %v831 = vpop.f32.mrf.mxu0
      %v832 = vadd.f32 %v765, %v831
      %v833 = vpop.f32.mrf.mxu0
      %v834 = vadd.f32 %v767, %v833
      %835 = vmatmul.bf16.gmra.mxu0 %v266
      %v836 = vpop.f32.mrf.mxu0
      %v837 = vadd.f32 %v770, %v836
      %v838 = vpop.f32.mrf.mxu0
      %v839 = vadd.f32 %v772, %v838
      %840 = vdwg.mxu0
      %v841 = vld [vmem:[%s234 + $0x10] sm:$0xf]
      %v842 = vld [vmem:[%s239 + $0x10] sm:$0xf]
      %v843 = vunpack.c.l.bf16 %v841
      %v844 = vunpack.c.l.bf16 %v842
      %v845 = vadd.f32 %v843, %v844
      %v846 = vpack.c.bf16 %v263, %v262
      %v847 = vpack.c.bf16 %v845, %v264
      %s848 = scalar_lea.vmem %s2, 128
      %v849 = vld [vmem:[%s848] sm:$0xf]
      %v850 = vld [vmem:[%s848 + $0x4] sm:$0xf]
      %v851 = vld [vmem:[%s848 + $0x8] sm:$0xf]
      %v852 = vld [vmem:[%s848 + $0xc] sm:$0xf]
      %v853 = vld [vmem:[%s848 + $0x10] sm:$0xf]
      %v854 = vld [vmem:[%s848 + $0x14] sm:$0xf]
      %v855 = vld [vmem:[%s848 + $0x18] sm:$0xf]
      %v856 = vld [vmem:[%s848 + $0x1c] sm:$0xf]
      %v857 = vld [vmem:[%s848 + $0x20] sm:$0xf]
      %v858 = vld [vmem:[%s848 + $0x24] sm:$0xf]
      %v859 = vld [vmem:[%s848 + $0x28] sm:$0xf]
      %v860 = vld [vmem:[%s848 + $0x2c] sm:$0xf]
      %v861 = vld [vmem:[%s848 + $0x30] sm:$0xf]
      %v862 = vld [vmem:[%s848 + $0x34] sm:$0xf]
      %v863 = vld [vmem:[%s848 + $0x38] sm:$0xf]
      %v864 = vld [vmem:[%s848 + $0x3c] sm:$0xf]
      %v866 = vunpack.c.l.b16 %v841
      %v867 = vpack.c.b16 %v351, %v350
      %v868 = vpack.c.b16 %v866, %v352
      %v887 = vunpack.c.l.b16 %v849
      %v888 = vunpack.c.l.b16 %v850
      %v889 = vunpack.c.l.b16 %v851
      %v890 = vunpack.c.l.b16 %v852
      %v891 = vunpack.c.l.b16 %v853
      %v892 = vunpack.c.l.b16 %v854
      %v893 = vunpack.c.l.b16 %v855
      %v894 = vunpack.c.l.b16 %v856
      %v895 = vunpack.c.l.b16 %v857
      %v896 = vunpack.c.l.b16 %v858
      %v897 = vunpack.c.l.b16 %v859
      %v898 = vunpack.c.l.b16 %v860
      %v899 = vunpack.c.l.b16 %v861
      %v900 = vunpack.c.l.b16 %v862
      %v901 = vunpack.c.l.b16 %v863
      %v902 = vunpack.c.l.b16 %v864
      %v903 = vpack.c.b16 %v888, %v887
      %v904 = vpack.c.b16 %v890, %v889
      %v905 = vpack.c.b16 %v892, %v891
      %v906 = vpack.c.b16 %v894, %v893
      %v907 = vpack.c.b16 %v896, %v895
      %v908 = vpack.c.b16 %v898, %v897
      %v909 = vpack.c.b16 %v900, %v899
      %v910 = vpack.c.b16 %v902, %v901
      %919 = vmatpush.bf16.msra.mxu0 %v910
      %920 = vmatpush.bf16.msra.mxu0 %v909
      %921 = vmatpush.bf16.msra.mxu0 %v908
      %922 = vmatpush.bf16.msra.mxu0 %v907
      %923 = vmatpush.bf16.msra.mxu0 %v906
      %924 = vmatpush.bf16.msra.mxu0 %v905
      %925 = vmatpush.bf16.msra.mxu0 %v904
      %926 = vmatpush.bf16.msra.mxu0 %v903
      %927 = vmatmul.bf16.gmra.mxu0 %v867
      %v928 = vpop.f32.mrf.mxu0
      %v929 = vadd.f32 0.0, %v928
      %v930 = vpop.f32.mrf.mxu0
      %v931 = vadd.f32 0.0, %v930
      %932 = vmatmul.bf16.gmra.mxu0 %v868
      %v933 = vpop.f32.mrf.mxu0
      %v934 = vadd.f32 0.0, %v933
      %v935 = vpop.f32.mrf.mxu0
      %v936 = vadd.f32 0.0, %v935
      %937 = vdwg.mxu0
      %v938 = vadd.f32 %v495, %v929
      %v939 = vadd.f32 %v497, %v931
      %v940 = vadd.f32 %v500, %v934
      %v941 = vadd.f32 %v502, %v936
      %s942 = scalar_lea.vmem %s3, 128
      %v943 = vld [vmem:[%s942] sm:$0xf]
      %v944 = vld [vmem:[%s942 + $0x4] sm:$0xf]
      %v945 = vld [vmem:[%s942 + $0x8] sm:$0xf]
      %v946 = vld [vmem:[%s942 + $0xc] sm:$0xf]
      %v947 = vld [vmem:[%s942 + $0x10] sm:$0xf]
      %v948 = vld [vmem:[%s942 + $0x14] sm:$0xf]
      %v949 = vld [vmem:[%s942 + $0x18] sm:$0xf]
      %v950 = vld [vmem:[%s942 + $0x1c] sm:$0xf]
      %v951 = vld [vmem:[%s942 + $0x20] sm:$0xf]
      %v952 = vld [vmem:[%s942 + $0x24] sm:$0xf]
      %v953 = vld [vmem:[%s942 + $0x28] sm:$0xf]
      %v954 = vld [vmem:[%s942 + $0x2c] sm:$0xf]
      %v955 = vld [vmem:[%s942 + $0x30] sm:$0xf]
      %v956 = vld [vmem:[%s942 + $0x34] sm:$0xf]
      %v957 = vld [vmem:[%s942 + $0x38] sm:$0xf]
      %v958 = vld [vmem:[%s942 + $0x3c] sm:$0xf]
      %v960 = vunpack.c.l.b16 %v842
      %v961 = vpack.c.b16 %v528, %v527
      %v962 = vpack.c.b16 %v960, %v529
      %v981 = vunpack.c.l.b16 %v943
      %v982 = vunpack.c.l.b16 %v944
      %v983 = vunpack.c.l.b16 %v945
      %v984 = vunpack.c.l.b16 %v946
      %v985 = vunpack.c.l.b16 %v947
      %v986 = vunpack.c.l.b16 %v948
      %v987 = vunpack.c.l.b16 %v949
      %v988 = vunpack.c.l.b16 %v950
      %v989 = vunpack.c.l.b16 %v951
      %v990 = vunpack.c.l.b16 %v952
      %v991 = vunpack.c.l.b16 %v953
      %v992 = vunpack.c.l.b16 %v954
      %v993 = vunpack.c.l.b16 %v955
      %v994 = vunpack.c.l.b16 %v956
      %v995 = vunpack.c.l.b16 %v957
      %v996 = vunpack.c.l.b16 %v958
      %v997 = vpack.c.b16 %v982, %v981
      %v998 = vpack.c.b16 %v984, %v983
      %v999 = vpack.c.b16 %v986, %v985
      %v1000 = vpack.c.b16 %v988, %v987
      %v1001 = vpack.c.b16 %v990, %v989
      %v1002 = vpack.c.b16 %v992, %v991
      %v1003 = vpack.c.b16 %v994, %v993
      %v1004 = vpack.c.b16 %v996, %v995
      %1013 = vmatpush.bf16.msra.mxu0 %v1004
      %1014 = vmatpush.bf16.msra.mxu0 %v1003
      %1015 = vmatpush.bf16.msra.mxu0 %v1002
      %1016 = vmatpush.bf16.msra.mxu0 %v1001
      %1017 = vmatpush.bf16.msra.mxu0 %v1000
      %1018 = vmatpush.bf16.msra.mxu0 %v999
      %1019 = vmatpush.bf16.msra.mxu0 %v998
      %1020 = vmatpush.bf16.msra.mxu0 %v997
      %1021 = vmatmul.bf16.gmra.mxu0 %v961
      %v1022 = vpop.f32.mrf.mxu0
      %v1023 = vadd.f32 0.0, %v1022
      %v1024 = vpop.f32.mrf.mxu0
      %v1025 = vadd.f32 0.0, %v1024
      %1026 = vmatmul.bf16.gmra.mxu0 %v962
      %v1027 = vpop.f32.mrf.mxu0
      %v1028 = vadd.f32 0.0, %v1027
      %v1029 = vpop.f32.mrf.mxu0
      %v1030 = vadd.f32 0.0, %v1029
      %1031 = vdwg.mxu0
      %v1032 = vadd.f32 %v671, %v1023
      %v1033 = vadd.f32 %v673, %v1025
      %v1034 = vadd.f32 %v676, %v1028
      %v1035 = vadd.f32 %v678, %v1030
      %s1036 = scalar_lea.vmem %s4, 128
      %v1037 = vld [vmem:[%s1036] sm:$0xf]
      %v1038 = vld [vmem:[%s1036 + $0x4] sm:$0xf]
      %v1039 = vld [vmem:[%s1036 + $0x8] sm:$0xf]
      %v1040 = vld [vmem:[%s1036 + $0xc] sm:$0xf]
      %v1041 = vld [vmem:[%s1036 + $0x10] sm:$0xf]
      %v1042 = vld [vmem:[%s1036 + $0x14] sm:$0xf]
      %v1043 = vld [vmem:[%s1036 + $0x18] sm:$0xf]
      %v1044 = vld [vmem:[%s1036 + $0x1c] sm:$0xf]
      %v1045 = vld [vmem:[%s1036 + $0x20] sm:$0xf]
      %v1046 = vld [vmem:[%s1036 + $0x24] sm:$0xf]
      %v1047 = vld [vmem:[%s1036 + $0x28] sm:$0xf]
      %v1048 = vld [vmem:[%s1036 + $0x2c] sm:$0xf]
      %v1049 = vld [vmem:[%s1036 + $0x30] sm:$0xf]
      %v1050 = vld [vmem:[%s1036 + $0x34] sm:$0xf]
      %v1051 = vld [vmem:[%s1036 + $0x38] sm:$0xf]
      %v1052 = vld [vmem:[%s1036 + $0x3c] sm:$0xf]
      %v1069 = vunpack.c.l.b16 %v1037
      %v1070 = vunpack.c.l.b16 %v1038
      %v1071 = vunpack.c.l.b16 %v1039
      %v1072 = vunpack.c.l.b16 %v1040
      %v1073 = vunpack.c.l.b16 %v1041
      %v1074 = vunpack.c.l.b16 %v1042
      %v1075 = vunpack.c.l.b16 %v1043
      %v1076 = vunpack.c.l.b16 %v1044
      %v1077 = vunpack.c.l.b16 %v1045
      %v1078 = vunpack.c.l.b16 %v1046
      %v1079 = vunpack.c.l.b16 %v1047
      %v1080 = vunpack.c.l.b16 %v1048
      %v1081 = vunpack.c.l.b16 %v1049
      %v1082 = vunpack.c.l.b16 %v1050
      %v1083 = vunpack.c.l.b16 %v1051
      %v1084 = vunpack.c.l.b16 %v1052
      %v1085 = vpack.c.b16 %v1070, %v1069
      %v1086 = vpack.c.b16 %v1072, %v1071
      %v1087 = vpack.c.b16 %v1074, %v1073
      %v1088 = vpack.c.b16 %v1076, %v1075
      %v1089 = vpack.c.b16 %v1078, %v1077
      %v1090 = vpack.c.b16 %v1080, %v1079
      %v1091 = vpack.c.b16 %v1082, %v1081
      %v1092 = vpack.c.b16 %v1084, %v1083
      %1101 = vmatpush.bf16.msra.mxu0 %v1092
      %1102 = vmatpush.bf16.msra.mxu0 %v1091
      %1103 = vmatpush.bf16.msra.mxu0 %v1090
      %1104 = vmatpush.bf16.msra.mxu0 %v1089
      %1105 = vmatpush.bf16.msra.mxu0 %v1088
      %1106 = vmatpush.bf16.msra.mxu0 %v1087
      %1107 = vmatpush.bf16.msra.mxu0 %v1086
      %1108 = vmatpush.bf16.msra.mxu0 %v1085
      %1109 = vmatmul.bf16.gmra.mxu0 %v846
      %v1110 = vpop.f32.mrf.mxu0
      %v1111 = vadd.f32 0.0, %v1110
      %v1112 = vpop.f32.mrf.mxu0
      %v1113 = vadd.f32 0.0, %v1112
      %1114 = vmatmul.bf16.gmra.mxu0 %v847
      %v1115 = vpop.f32.mrf.mxu0
      %v1116 = vadd.f32 0.0, %v1115
      %v1117 = vpop.f32.mrf.mxu0
      %v1118 = vadd.f32 0.0, %v1117
      %1119 = vdwg.mxu0
      %v1120 = vadd.f32 %v832, %v1111
      %v1121 = vadd.f32 %v834, %v1113
      %v1122 = vadd.f32 %v837, %v1116
      %v1123 = vadd.f32 %v839, %v1118
      %v1124 = vld [vmem:[%s234 + $0x4] sm:$0xc]
      %v1125 = vld [vmem:[%s234 + $0x8] sm:$0xf]
      %v1126 = vld [vmem:[%s234 + $0xc] sm:$0xf]
      %v1127 = vld [vmem:[%s234 + $0x10] sm:$0xf]
      %v1128 = vld [vmem:[%s234 + $0x14] sm:$0x3]
      %v1129 = vld [vmem:[%s239 + $0x4] sm:$0xc]
      %v1130 = vld [vmem:[%s239 + $0x8] sm:$0xf]
      %v1131 = vld [vmem:[%s239 + $0xc] sm:$0xf]
      %v1132 = vld [vmem:[%s239 + $0x10] sm:$0xf]
      %v1133 = vld [vmem:[%s239 + $0x14] sm:$0x3]
      %v1134 = vunpack.c.l.bf16 %v1124
      %v1135 = vunpack.c.l.bf16 %v1125
      %v1136 = vunpack.c.l.bf16 %v1126
      %v1137 = vunpack.c.l.bf16 %v1127
      %v1138 = vunpack.c.l.bf16 %v1128
      %v1139 = vunpack.c.l.bf16 %v1129
      %v1140 = vunpack.c.l.bf16 %v1130
      %v1141 = vunpack.c.l.bf16 %v1131
      %v1142 = vunpack.c.l.bf16 %v1132
      %v1143 = vunpack.c.l.bf16 %v1133
      %v1144 = vadd.f32 %v1134, %v1139
      %v1145 = vadd.f32 %v1135, %v1140
      %v1146 = vadd.f32 %v1136, %v1141
      %v1147 = vadd.f32 %v1137, %v1142
      %v1148 = vadd.f32 %v1138, %v1143
      %v1149 = vpack.c.bf16 %v1145, %v1144
      %v1150 = vpack.c.bf16 %v1147, %v1146
      %v1151 = vpack.c.bf16 %v1148, %v1148
      %s1152 = scalar_lea.vmem %s2, 192
      %v1153 = vld [vmem:[%s1152] sm:$0xf]
      %v1154 = vld [vmem:[%s1152 + $0x4] sm:$0xf]
      %v1155 = vld [vmem:[%s1152 + $0x8] sm:$0xf]
      %v1156 = vld [vmem:[%s1152 + $0xc] sm:$0xf]
      %v1157 = vld [vmem:[%s1152 + $0x10] sm:$0xf]
      %v1158 = vld [vmem:[%s1152 + $0x14] sm:$0xf]
      %v1159 = vld [vmem:[%s1152 + $0x18] sm:$0xf]
      %v1160 = vld [vmem:[%s1152 + $0x1c] sm:$0xf]
      %v1161 = vld [vmem:[%s1152 + $0x20] sm:$0xf]
      %v1162 = vld [vmem:[%s1152 + $0x24] sm:$0xf]
      %v1163 = vld [vmem:[%s1152 + $0x28] sm:$0xf]
      %v1164 = vld [vmem:[%s1152 + $0x2c] sm:$0xf]
      %v1165 = vld [vmem:[%s1152 + $0x30] sm:$0xf]
      %v1166 = vld [vmem:[%s1152 + $0x34] sm:$0xf]
      %v1167 = vld [vmem:[%s1152 + $0x38] sm:$0xf]
      %v1168 = vld [vmem:[%s1152 + $0x3c] sm:$0xf]
      %v1174 = vunpack.c.l.b16 %v1124
      %v1175 = vunpack.c.l.b16 %v1125
      %v1176 = vunpack.c.l.b16 %v1126
      %v1177 = vunpack.c.l.b16 %v1127
      %v1178 = vunpack.c.l.b16 %v1128
      %v1179 = vpack.c.b16 %v1175, %v1174
      %v1180 = vpack.c.b16 %v1177, %v1176
      %v1181 = vpack.c.b16 %v1178, %v1178
      %v1182 = vrot.slane %v1179, 2
      %v1183 = vrot.slane %v1180, 2
      %v1184 = vsel %vm357, %v1182, %v1183
      %v1185 = vrot.slane %v1181, 2
      %v1186 = vsel %vm357, %v1183, %v1185
      %v1205 = vunpack.c.l.b16 %v1153
      %v1206 = vunpack.c.l.b16 %v1154
      %v1207 = vunpack.c.l.b16 %v1155
      %v1208 = vunpack.c.l.b16 %v1156
      %v1209 = vunpack.c.l.b16 %v1157
      %v1210 = vunpack.c.l.b16 %v1158
      %v1211 = vunpack.c.l.b16 %v1159
      %v1212 = vunpack.c.l.b16 %v1160
      %v1213 = vunpack.c.l.b16 %v1161
      %v1214 = vunpack.c.l.b16 %v1162
      %v1215 = vunpack.c.l.b16 %v1163
      %v1216 = vunpack.c.l.b16 %v1164
      %v1217 = vunpack.c.l.b16 %v1165
      %v1218 = vunpack.c.l.b16 %v1166
      %v1219 = vunpack.c.l.b16 %v1167
      %v1220 = vunpack.c.l.b16 %v1168
      %v1221 = vpack.c.b16 %v1206, %v1205
      %v1222 = vpack.c.b16 %v1208, %v1207
      %v1223 = vpack.c.b16 %v1210, %v1209
      %v1224 = vpack.c.b16 %v1212, %v1211
      %v1225 = vpack.c.b16 %v1214, %v1213
      %v1226 = vpack.c.b16 %v1216, %v1215
      %v1227 = vpack.c.b16 %v1218, %v1217
      %v1228 = vpack.c.b16 %v1220, %v1219
      %1237 = vmatpush.bf16.msra.mxu0 %v1228
      %1238 = vmatpush.bf16.msra.mxu0 %v1227
      %1239 = vmatpush.bf16.msra.mxu0 %v1226
      %1240 = vmatpush.bf16.msra.mxu0 %v1225
      %1241 = vmatpush.bf16.msra.mxu0 %v1224
      %1242 = vmatpush.bf16.msra.mxu0 %v1223
      %1243 = vmatpush.bf16.msra.mxu0 %v1222
      %1244 = vmatpush.bf16.msra.mxu0 %v1221
      %1245 = vmatmul.bf16.gmra.mxu0 %v1184
      %v1246 = vpop.f32.mrf.mxu0
      %v1247 = vadd.f32 0.0, %v1246
      %v1248 = vpop.f32.mrf.mxu0
      %v1249 = vadd.f32 0.0, %v1248
      %1250 = vmatmul.bf16.gmra.mxu0 %v1186
      %v1251 = vpop.f32.mrf.mxu0
      %v1252 = vadd.f32 0.0, %v1251
      %v1253 = vpop.f32.mrf.mxu0
      %v1254 = vadd.f32 0.0, %v1253
      %1255 = vdwg.mxu0
      %v1256 = vadd.f32 %v938, %v1247
      %v1257 = vadd.f32 %v939, %v1249
      %v1258 = vadd.f32 %v940, %v1252
      %v1259 = vadd.f32 %v941, %v1254
      %s1260 = scalar_lea.vmem %s3, 192
      %v1261 = vld [vmem:[%s1260] sm:$0xf]
      %v1262 = vld [vmem:[%s1260 + $0x4] sm:$0xf]
      %v1263 = vld [vmem:[%s1260 + $0x8] sm:$0xf]
      %v1264 = vld [vmem:[%s1260 + $0xc] sm:$0xf]
      %v1265 = vld [vmem:[%s1260 + $0x10] sm:$0xf]
      %v1266 = vld [vmem:[%s1260 + $0x14] sm:$0xf]
      %v1267 = vld [vmem:[%s1260 + $0x18] sm:$0xf]
      %v1268 = vld [vmem:[%s1260 + $0x1c] sm:$0xf]
      %v1269 = vld [vmem:[%s1260 + $0x20] sm:$0xf]
      %v1270 = vld [vmem:[%s1260 + $0x24] sm:$0xf]
      %v1271 = vld [vmem:[%s1260 + $0x28] sm:$0xf]
      %v1272 = vld [vmem:[%s1260 + $0x2c] sm:$0xf]
      %v1273 = vld [vmem:[%s1260 + $0x30] sm:$0xf]
      %v1274 = vld [vmem:[%s1260 + $0x34] sm:$0xf]
      %v1275 = vld [vmem:[%s1260 + $0x38] sm:$0xf]
      %v1276 = vld [vmem:[%s1260 + $0x3c] sm:$0xf]
      %v1282 = vunpack.c.l.b16 %v1129
      %v1283 = vunpack.c.l.b16 %v1130
      %v1284 = vunpack.c.l.b16 %v1131
      %v1285 = vunpack.c.l.b16 %v1132
      %v1286 = vunpack.c.l.b16 %v1133
      %v1287 = vpack.c.b16 %v1283, %v1282
      %v1288 = vpack.c.b16 %v1285, %v1284
      %v1289 = vpack.c.b16 %v1286, %v1286
      %v1290 = vrot.slane %v1287, 2
      %v1291 = vrot.slane %v1288, 2
      %v1292 = vsel %vm357, %v1290, %v1291
      %v1293 = vrot.slane %v1289, 2
      %v1294 = vsel %vm357, %v1291, %v1293
      %v1313 = vunpack.c.l.b16 %v1261
      %v1314 = vunpack.c.l.b16 %v1262
      %v1315 = vunpack.c.l.b16 %v1263
      %v1316 = vunpack.c.l.b16 %v1264
      %v1317 = vunpack.c.l.b16 %v1265
      %v1318 = vunpack.c.l.b16 %v1266
      %v1319 = vunpack.c.l.b16 %v1267
      %v1320 = vunpack.c.l.b16 %v1268
      %v1321 = vunpack.c.l.b16 %v1269
      %v1322 = vunpack.c.l.b16 %v1270
      %v1323 = vunpack.c.l.b16 %v1271
      %v1324 = vunpack.c.l.b16 %v1272
      %v1325 = vunpack.c.l.b16 %v1273
      %v1326 = vunpack.c.l.b16 %v1274
      %v1327 = vunpack.c.l.b16 %v1275
      %v1328 = vunpack.c.l.b16 %v1276
      %v1329 = vpack.c.b16 %v1314, %v1313
      %v1330 = vpack.c.b16 %v1316, %v1315
      %v1331 = vpack.c.b16 %v1318, %v1317
      %v1332 = vpack.c.b16 %v1320, %v1319
      %v1333 = vpack.c.b16 %v1322, %v1321
      %v1334 = vpack.c.b16 %v1324, %v1323
      %v1335 = vpack.c.b16 %v1326, %v1325
      %v1336 = vpack.c.b16 %v1328, %v1327
      %1345 = vmatpush.bf16.msra.mxu0 %v1336
      %1346 = vmatpush.bf16.msra.mxu0 %v1335
      %1347 = vmatpush.bf16.msra.mxu0 %v1334
      %1348 = vmatpush.bf16.msra.mxu0 %v1333
      %1349 = vmatpush.bf16.msra.mxu0 %v1332
      %1350 = vmatpush.bf16.msra.mxu0 %v1331
      %1351 = vmatpush.bf16.msra.mxu0 %v1330
      %1352 = vmatpush.bf16.msra.mxu0 %v1329
      %1353 = vmatmul.bf16.gmra.mxu0 %v1292
      %v1354 = vpop.f32.mrf.mxu0
      %v1355 = vadd.f32 0.0, %v1354
      %v1356 = vpop.f32.mrf.mxu0
      %v1357 = vadd.f32 0.0, %v1356
      %1358 = vmatmul.bf16.gmra.mxu0 %v1294
      %v1359 = vpop.f32.mrf.mxu0
      %v1360 = vadd.f32 0.0, %v1359
      %v1361 = vpop.f32.mrf.mxu0
      %v1362 = vadd.f32 0.0, %v1361
      %1363 = vdwg.mxu0
      %v1364 = vadd.f32 %v1032, %v1355
      %v1365 = vadd.f32 %v1033, %v1357
      %v1366 = vadd.f32 %v1034, %v1360
      %v1367 = vadd.f32 %v1035, %v1362
      %s1368 = scalar_lea.vmem %s4, 192
      %v1369 = vld [vmem:[%s1368] sm:$0xf]
      %v1370 = vld [vmem:[%s1368 + $0x4] sm:$0xf]
      %v1371 = vld [vmem:[%s1368 + $0x8] sm:$0xf]
      %v1372 = vld [vmem:[%s1368 + $0xc] sm:$0xf]
      %v1373 = vld [vmem:[%s1368 + $0x10] sm:$0xf]
      %v1374 = vld [vmem:[%s1368 + $0x14] sm:$0xf]
      %v1375 = vld [vmem:[%s1368 + $0x18] sm:$0xf]
      %v1376 = vld [vmem:[%s1368 + $0x1c] sm:$0xf]
      %v1377 = vld [vmem:[%s1368 + $0x20] sm:$0xf]
      %v1378 = vld [vmem:[%s1368 + $0x24] sm:$0xf]
      %v1379 = vld [vmem:[%s1368 + $0x28] sm:$0xf]
      %v1380 = vld [vmem:[%s1368 + $0x2c] sm:$0xf]
      %v1381 = vld [vmem:[%s1368 + $0x30] sm:$0xf]
      %v1382 = vld [vmem:[%s1368 + $0x34] sm:$0xf]
      %v1383 = vld [vmem:[%s1368 + $0x38] sm:$0xf]
      %v1384 = vld [vmem:[%s1368 + $0x3c] sm:$0xf]
      %v1388 = vrot.slane %v1149, 2
      %v1389 = vrot.slane %v1150, 2
      %v1390 = vsel %vm357, %v1388, %v1389
      %v1391 = vrot.slane %v1151, 2
      %v1392 = vsel %vm357, %v1389, %v1391
      %v1411 = vunpack.c.l.b16 %v1369
      %v1412 = vunpack.c.l.b16 %v1370
      %v1413 = vunpack.c.l.b16 %v1371
      %v1414 = vunpack.c.l.b16 %v1372
      %v1415 = vunpack.c.l.b16 %v1373
      %v1416 = vunpack.c.l.b16 %v1374
      %v1417 = vunpack.c.l.b16 %v1375
      %v1418 = vunpack.c.l.b16 %v1376
      %v1419 = vunpack.c.l.b16 %v1377
      %v1420 = vunpack.c.l.b16 %v1378
      %v1421 = vunpack.c.l.b16 %v1379
      %v1422 = vunpack.c.l.b16 %v1380
      %v1423 = vunpack.c.l.b16 %v1381
      %v1424 = vunpack.c.l.b16 %v1382
      %v1425 = vunpack.c.l.b16 %v1383
      %v1426 = vunpack.c.l.b16 %v1384
      %v1427 = vpack.c.b16 %v1412, %v1411
      %v1428 = vpack.c.b16 %v1414, %v1413
      %v1429 = vpack.c.b16 %v1416, %v1415
      %v1430 = vpack.c.b16 %v1418, %v1417
      %v1431 = vpack.c.b16 %v1420, %v1419
      %v1432 = vpack.c.b16 %v1422, %v1421
      %v1433 = vpack.c.b16 %v1424, %v1423
      %v1434 = vpack.c.b16 %v1426, %v1425
      %1443 = vmatpush.bf16.msra.mxu0 %v1434
      %1444 = vmatpush.bf16.msra.mxu0 %v1433
      %1445 = vmatpush.bf16.msra.mxu0 %v1432
      %1446 = vmatpush.bf16.msra.mxu0 %v1431
      %1447 = vmatpush.bf16.msra.mxu0 %v1430
      %1448 = vmatpush.bf16.msra.mxu0 %v1429
      %1449 = vmatpush.bf16.msra.mxu0 %v1428
      %1450 = vmatpush.bf16.msra.mxu0 %v1427
      %1451 = vmatmul.bf16.gmra.mxu0 %v1390
      %v1452 = vpop.f32.mrf.mxu0
      %v1453 = vadd.f32 0.0, %v1452
      %v1454 = vpop.f32.mrf.mxu0
      %v1455 = vadd.f32 0.0, %v1454
      %1456 = vmatmul.bf16.gmra.mxu0 %v1392
      %v1457 = vpop.f32.mrf.mxu0
      %v1458 = vadd.f32 0.0, %v1457
      %v1459 = vpop.f32.mrf.mxu0
      %v1460 = vadd.f32 0.0, %v1459
      %1461 = vdwg.mxu0
      %v1462 = vadd.f32 %v1120, %v1453
      %v1463 = vadd.f32 %v1121, %v1455
      %v1464 = vadd.f32 %v1122, %v1458
      %v1465 = vadd.f32 %v1123, %v1460
      %v1466 = vsub.f32 %v1256, %v1364
      %v1467 = vsub.f32 %v1257, %v1365
      %v1468 = vsub.f32 %v1258, %v1366
      %v1469 = vsub.f32 %v1259, %v1367
      %v1470 = vsub.f32 %v1462, %v1256
      %v1471 = vsub.f32 %v1463, %v1257
      %v1472 = vsub.f32 %v1464, %v1258
      %v1473 = vsub.f32 %v1465, %v1259
      %v1474 = vsub.f32 %v1470, %v1364
      %v1475 = vsub.f32 %v1471, %v1365
      %v1476 = vsub.f32 %v1472, %v1366
      %v1477 = vsub.f32 %v1473, %v1367
      %1482 = vrot.lane.b32.xlu0 %v1474, 64
      %v1483 = vpop.permute.xlu0 %1482
      %1484 = vrot.lane.b32.xlu0 %v1475, 64
      %v1485 = vpop.permute.xlu0 %1484
      %1486 = vrot.lane.b32.xlu0 %v1476, 64
      %v1487 = vpop.permute.xlu0 %1486
      %1488 = vrot.lane.b32.xlu0 %v1477, 64
      %v1489 = vpop.permute.xlu0 %1488
      %vm1494 = vcmask 523264
      %v1495 = vsel %vm1494, %v1466, %v1483
      %v1496 = vsel %vm1494, %v1467, %v1485
      %v1497 = vsel %vm1494, %v1468, %v1487
      %v1498 = vsel %vm1494, %v1469, %v1489
      %1499 = vst [vmem:[%s244] sm:$0xff] %v1495
      %1500 = vst [vmem:[%s244 + $0x8] sm:$0xff] %v1496
      %1501 = vst [vmem:[%s244 + $0x10] sm:$0xff] %v1497
      %1502 = vst [vmem:[%s244 + $0x18] sm:$0xff] %v1498
      %p1503 = scmp.lt.s32.totalorder %s16, 1
      %s1504 = scalar_select %p1503, %s16, 1
      %s1505 = smul.addr %s1504, 4
      %s1506 = smul.addr %s1505, 8
      %s1507 = scalar_lea.vmem %s5, %s1506
      // Predicated region
      $region41: #{base_encoder_forward.12} parent=39 // pred_check
        %p1508 = pneg %p149
      $region42: #{base_encoder_forward.12} parent=39 // pred_check_branch
        %1510 = sbr.rel (%p1508) target = $region44
      $region43: #{base_encoder_forward.12} parent=39 // pred_region
        _
      $region44: #{base_encoder_forward.12} parent=39 // pred_fallthru
        _
    $region40: #{base_encoder_forward.12} parent=5 // pred_fallthru
      _
    %p1511 = scmp.le.s32.totalorder 2, %s11
    // Predicated region
    $region45: #{base_encoder_forward.12} parent=5 // pred_check
      %p1512 = pneg %p1511
    $region46: #{base_encoder_forward.12} parent=5 // pred_check_branch
      %1514 = sbr.rel (%p1512) target = $region48
    $region47: #{base_encoder_forward.12} parent=5 // pred_region
      %s1515 = ssub.s32 %s11, 2
      // Predicated region
      $region49: #{base_encoder_forward.12} parent=47 // pred_check
        %p1516 = pneg %p155
      $region50: #{base_encoder_forward.12} parent=47 // pred_check_branch
        %1518 = sbr.rel (%p1516) target = $region52
      $region51: #{base_encoder_forward.12} parent=47 // pred_region
        %p1519 = scmp.lt.s32.totalorder %s17, 1
        %s1520 = scalar_select %p1519, %s17, 1
        %s1521 = smul.addr %s1520, 4
        %s1522 = smul.addr %s1521, 8
        %s1523 = scalar_lea.vmem %s5, %s1522
      $region52: #{base_encoder_forward.12} parent=47 // pred_fallthru
        _
    $region48: #{base_encoder_forward.12} parent=5 // pred_fallthru
      _
  $region6: #{base_encoder_forward.12} parent=0 // loop_footer
    %s15 = sadd.s32 1, %s11
  $region7: #{base_encoder_forward.12} parent=0 // loop_footer_branch
    %10 = sbr.rel target = $region3
  $region8: #{base_encoder_forward.12} parent=0 // loop_exit
    _

// kernel: base_encoder_forward.16
$region0: #{base_encoder_forward.16}
  #allocation0 [shape = 'u32[]', space=smem, size = 0x4, offset = 0x4, fixed_abs, tag = 'smem constant byte address 0x4 - core index']
  #allocation1 [shape = 'u32[72,128]{1,0:T(1,128)}', space=vmem, size = 0x9000, scoped, tag = 'internal scratch']
  %s0 = inlined_call_operand.vmem [shape: f32[16,256], index: 0, kind: input, shape index: {}]
  %s1 = inlined_call_operand.vmem [shape: f32[8,256], index: 1, kind: output, shape index: {}]
  %s2 = sld [smem:[#allocation0]]
  $region18: #{base_encoder_forward.16} parent=0
    _
  %s4 = ssub.s32 1, %s2
  %s5 = scalar_select 0, %s4, %s2
  // Predicated region
  $region2: #{base_encoder_forward.16} parent=0 // pred_check
    _
  $region3: #{base_encoder_forward.16} parent=0 // pred_check_branch
    %7 = sbr.rel (0) target = $region5
  $region4: #{base_encoder_forward.16} parent=0 // pred_region
    _
  $region5: #{base_encoder_forward.16} parent=0 // pred_fallthru
    _
  %p8 = scmp.eq.s32.totalorder 0, 0
  // Predicated region
  $region6: #{base_encoder_forward.16} parent=0 // pred_check
    %p9 = pneg %p8
  $region7: #{base_encoder_forward.16} parent=0 // pred_check_branch
    %11 = sbr.rel (%p9) target = $region9
  $region8: #{base_encoder_forward.16} parent=0 // pred_region
    %12 = vst [vmem:[%s1] sm:$0xff] 0.0
    %13 = vst [vmem:[%s1 + $0x8] sm:$0xff] 0.0
  $region9: #{base_encoder_forward.16} parent=0 // pred_fallthru
    _
  %v14 = vld [vmem:[%s0] sm:$0xff]
  %v15 = vld [vmem:[%s0 + $0x8] sm:$0xff]
  %v16 = vld [vmem:[%s0 + $0x10] sm:$0xff]
  %v17 = vld [vmem:[%s0 + $0x18] sm:$0xff]
  %v18 = vld [vmem:[%s1] ss:$8 sm:$0x3]
  %v19 = vadd.f32 %v14, %v16
  %v20 = vrot.slane %v19, 4
  %v21 = vadd.f32 %v19, %v20
  %v22 = vrot.slane %v21, 2
  %v23 = vadd.f32 %v21, %v22
  %v24 = vrot.slane %v23, 1
  %v25 = vadd.f32 %v23, %v24
  %v26 = vadd.f32 %v15, %v17
  %v27 = vrot.slane %v26, 4
  %v28 = vadd.f32 %v26, %v27
  %v29 = vrot.slane %v28, 2
  %v30 = vadd.f32 %v28, %v29
  %v31 = vrot.slane %v30, 1
  %v32 = vadd.f32 %v30, %v31
  %v35 = vrot.slane %v32, 7
  %vm36 = vcmask 1040384
  %v37 = vsel %vm36, %v25, %v35
  %v39 = vadd.f32 %v18, %v37
  %v40 = vlaneseq
  %vm41 = vcmp.ge.s32.totalorder %v40, 0
  %vm42 = vcmp.lt.s32.totalorder %v40, 256
  %vm43 = vmand %vm41, %vm42
  %44 = vst.msk [vmem:[%s1] ss:$8 sm:$0x3] %vm43, %v39
  %45 = vst.msk [vmem:[%s1] ss:$8 sm:$0x0] %vm43, %v39
  %s46 = scalar_lea.vmem %s1, 1
  %v47 = vld [vmem:[%s46] ss:$8 sm:$0x3]
  %v48 = vmul.f32 %v14, %v14
  %v49 = vmul.f32 %v15, %v15
  %v50 = vmul.f32 %v16, %v16
  %v51 = vmul.f32 %v17, %v17
  %v52 = vadd.f32 %v48, %v50
  %v53 = vrot.slane %v52, 4
  %v54 = vadd.f32 %v52, %v53
  %v55 = vrot.slane %v54, 2
  %v56 = vadd.f32 %v54, %v55
  %v57 = vrot.slane %v56, 1
  %v58 = vadd.f32 %v56, %v57
  %v59 = vadd.f32 %v49, %v51
  %v60 = vrot.slane %v59, 4
  %v61 = vadd.f32 %v59, %v60
  %v62 = vrot.slane %v61, 2
  %v63 = vadd.f32 %v61, %v62
  %v64 = vrot.slane %v63, 1
  %v65 = vadd.f32 %v63, %v64
  %v68 = vrot.slane %v65, 7
  %v69 = vsel %vm36, %v58, %v68
  %v71 = vadd.f32 %v47, %v69
  %72 = vst.msk [vmem:[%s46] ss:$8 sm:$0x3] %vm43, %v71
  %73 = vst.msk [vmem:[%s46] ss:$8 sm:$0x0] %vm43, %v71
  %s74 = scalar_lea.vmem %s1, 2
  %v75 = vld [vmem:[%s74] ss:$8 sm:$0x3]
  %v76 = vmul.f32 %v14, %v15
  %v77 = vmul.f32 %v16, %v17
  %v78 = vadd.f32 %v76, %v77
  %v79 = vrot.slane %v78, 4
  %v80 = vadd.f32 %v78, %v79
  %v81 = vrot.slane %v80, 2
  %v82 = vadd.f32 %v80, %v81
  %v83 = vrot.slane %v82, 1
  %v84 = vadd.f32 %v82, %v83
  %v86 = vrot.slane %v84, 7
  %v87 = vsel %vm36, %v84, %v86
  %v89 = vadd.f32 %v75, %v87
  %90 = vst.msk [vmem:[%s74] ss:$8 sm:$0x3] %vm43, %v89
  %91 = vst.msk [vmem:[%s74] ss:$8 sm:$0x0] %vm43, %v89
  // Predicated region
  $region10: #{base_encoder_forward.16} parent=0 // pred_check
    _
  $region11: #{base_encoder_forward.16} parent=0 // pred_check_branch
    %93 = sbr.rel (0) target = $region13
  $region12: #{base_encoder_forward.16} parent=0 // pred_region
    _
  $region13: #{base_encoder_forward.16} parent=0 // pred_fallthru
    _
  // Predicated region
  $region14: #{base_encoder_forward.16} parent=0 // pred_check
    _
  $region15: #{base_encoder_forward.16} parent=0 // pred_check_branch
    %95 = sbr.rel (0) target = $region17
  $region16: #{base_encoder_forward.16} parent=0 // pred_region
    _
  $region17: #{base_encoder_forward.16} parent=0 // pred_fallthru
    _

// kernel: base_encoder_forward.17
$region0: #{base_encoder_forward.17}
  #allocation0 [shape = 'u32[]', space=smem, size = 0x4, offset = 0x4, fixed_abs, tag = 'smem constant byte address 0x4 - core index']
  #allocation1 [shape = 'u32[72,128]{1,0:T(1,128)}', space=vmem, size = 0x9000, scoped, tag = 'internal scratch']
  %s0 = inlined_call_operand.vmem [shape: f32[16,256], index: 0, kind: input, shape index: {}]
  %s1 = inlined_call_operand.vmem [shape: f32[1,256], index: 1, kind: input, shape index: {}]
  %s2 = inlined_call_operand.vmem [shape: f32[1,256], index: 2, kind: input, shape index: {}]
  %s3 = inlined_call_operand.vmem [shape: f32[1,256], index: 3, kind: input, shape index: {}]
  %s4 = inlined_call_operand.vmem [shape: f32[16,256], index: 4, kind: output, shape index: {}]
  %s5 = sld [smem:[#allocation0]]
  $region26: #{base_encoder_forward.17} parent=0
    _
  %s7 = ssub.s32 1, %s5
  %s8 = scalar_select 0, %s7, %s5
  // Predicated region
  $region2: #{base_encoder_forward.17} parent=0 // pred_check
    _
  $region3: #{base_encoder_forward.17} parent=0 // pred_check_branch
    %10 = sbr.rel (0) target = $region5
  $region4: #{base_encoder_forward.17} parent=0 // pred_region
    _
  $region5: #{base_encoder_forward.17} parent=0 // pred_fallthru
    _
  // Predicated region
  $region6: #{base_encoder_forward.17} parent=0 // pred_check
    _
  $region7: #{base_encoder_forward.17} parent=0 // pred_check_branch
    %12 = sbr.rel (0) target = $region9
  $region8: #{base_encoder_forward.17} parent=0 // pred_region
    _
  $region9: #{base_encoder_forward.17} parent=0 // pred_fallthru
    _
  // Predicated region
  $region10: #{base_encoder_forward.17} parent=0 // pred_check
    _
  $region11: #{base_encoder_forward.17} parent=0 // pred_check_branch
    %14 = sbr.rel (0) target = $region13
  $region12: #{base_encoder_forward.17} parent=0 // pred_region
    _
  $region13: #{base_encoder_forward.17} parent=0 // pred_fallthru
    _
  // Predicated region
  $region14: #{base_encoder_forward.17} parent=0 // pred_check
    _
  $region15: #{base_encoder_forward.17} parent=0 // pred_check_branch
    %16 = sbr.rel (0) target = $region17
  $region16: #{base_encoder_forward.17} parent=0 // pred_region
    _
  $region17: #{base_encoder_forward.17} parent=0 // pred_fallthru
    _
  %v17 = vld [vmem:[%s0] sm:$0xff]
  %v18 = vld [vmem:[%s0 + $0x8] sm:$0xff]
  %v19 = vld [vmem:[%s0 + $0x10] sm:$0xff]
  %v20 = vld [vmem:[%s0 + $0x18] sm:$0xff]
  %v21 = vld [vmem:[%s1] sm:$0x3]
  %v23 = vperm.slane %v21, 0
  %v24 = vperm.slane %v21, 1
  %v27 = vmul.f32 %v23, %v17
  %v28 = vmul.f32 %v24, %v18
  %v29 = vmul.f32 %v23, %v19
  %v30 = vmul.f32 %v24, %v20
  %v31 = vld [vmem:[%s2] sm:$0x3]
  %v33 = vperm.slane %v31, 0
  %v34 = vperm.slane %v31, 1
  %v37 = vmul.f32 %v33, %v18
  %v38 = vmul.f32 %v34, %v17
  %v39 = vmul.f32 %v33, %v20
  %v40 = vmul.f32 %v34, %v19
  %v41 = vadd.f32 %v27, %v37
  %v42 = vadd.f32 %v28, %v38
  %v43 = vadd.f32 %v29, %v39
  %v44 = vadd.f32 %v30, %v40
  %v45 = vld [vmem:[%s3] sm:$0x3]
  %v47 = vperm.slane %v45, 0
  %v48 = vperm.slane %v45, 1
  %v51 = vadd.f32 %v41, %v47
  %v52 = vadd.f32 %v42, %v48
  %v53 = vadd.f32 %v43, %v47
  %v54 = vadd.f32 %v44, %v48
  %v55 = vmax.f32 %v51, 0.0
  %v56 = vmax.f32 %v52, 0.0
  %v57 = vmax.f32 %v53, 0.0
  %v58 = vmax.f32 %v54, 0.0
  %59 = vst [vmem:[%s4] sm:$0xff] %v55
  %60 = vst [vmem:[%s4 + $0x8] sm:$0xff] %v56
  %61 = vst [vmem:[%s4 + $0x10] sm:$0xff] %v57
  %62 = vst [vmem:[%s4 + $0x18] sm:$0xff] %v58
  // Predicated region
  $region18: #{base_encoder_forward.17} parent=0 // pred_check
    _
  $region19: #{base_encoder_forward.17} parent=0 // pred_check_branch
    %64 = sbr.rel (0) target = $region21
  $region20: #{base_encoder_forward.17} parent=0 // pred_region
    _
  $region21: #{base_encoder_forward.17} parent=0 // pred_fallthru
    _
  // Predicated region
  $region22: #{base_encoder_forward.17} parent=0 // pred_check
    _
  $region23: #{base_encoder_forward.17} parent=0 // pred_check_branch
    %66 = sbr.rel (0) target = $region25
  $region24: #{base_encoder_forward.17} parent=0 // pred_region
    _
  $region25: #{base_encoder_forward.17} parent=0 // pred_fallthru
    _

// kernel: base_encoder_forward.15
$region0: #{base_encoder_forward.15}
  #allocation0 [shape = 'u32[]', space=smem, size = 0x4, offset = 0x4, fixed_abs, tag = 'smem constant byte address 0x4 - core index']
  #allocation1 [shape = 'u32[72,128]{1,0:T(1,128)}', space=vmem, size = 0x9000, scoped, tag = 'internal scratch']
  %s0 = inlined_call_operand.vmem [shape: bf16[2,12,256], index: 0, kind: input, shape index: {}]
  %s1 = inlined_call_operand.vmem [shape: bf16[2,12,256], index: 1, kind: input, shape index: {}]
  %s2 = inlined_call_operand.vmem [shape: bf16[2,256,128], index: 2, kind: input, shape index: {}]
  %s3 = inlined_call_operand.vmem [shape: bf16[2,256,128], index: 3, kind: input, shape index: {}]
  %s4 = inlined_call_operand.vmem [shape: bf16[2,256,128], index: 4, kind: input, shape index: {}]
  %s5 = inlined_call_operand.vmem [shape: f32[2,8,256], index: 5, kind: output, shape index: {}]
  %s6 = sld [smem:[#allocation0]]
  $region53: #{base_encoder_forward.15} parent=0
    _
  %s8 = ssub.s32 1, %s6
  %s9 = scalar_select 0, %s8, %s6
  loop: start=0, step=1, limit=4
  $region2: #{base_encoder_forward.15} parent=0 // loop_pre_header
    _
  $region3: #{base_encoder_forward.15} parent=0 // loop_header
    %s11 = sphi 0, %s15
    %p12 = scmp.ge.s32.totalorder %s11, 4
    %s21 = sphi 0, %s23
    %s24 = sphi 0, %s21
    %s25 = sphi 0, %s24
    %s41 = sphi 0, %s25
    %s47 = sphi 0, %s49
    %s50 = sphi 0, %s47
    %s51 = sphi 0, %s50
    %s67 = sphi 0, %s51
    %s71 = sphi 0, %s71
    %s73 = sphi 0, %s71
    %s74 = sphi 0, %s73
    %s88 = sphi 0, %s74
    %s92 = sphi 0, %s92
    %s94 = sphi 0, %s92
    %s95 = sphi 0, %s94
    %s109 = sphi 0, %s95
    %s113 = sphi 0, %s113
    %s115 = sphi 0, %s113
    %s116 = sphi 0, %s115
    %s130 = sphi 0, %s116
    %s136 = sphi 0, %s138
    %s139 = sphi 0, %s136
    %s140 = sphi 0, %s139
    %s156 = sphi 0, %s140
  $region4: #{base_encoder_forward.15} parent=0 // loop_header_branch
    %14 = sbr.rel (%p12) target = $region8
  $region5: #{base_encoder_forward.15} parent=0 // loop_body
    %s16 = ssub.s32 %s11, 1
    %s17 = ssub.s32 %s11, 2
    %s18 = sadd.s32 %s11, 1
    %s19 = ssub.s32 %s11, %s18
    %p20 = scmp.eq.s32.totalorder %s19, 0
    %s22 = sadd.s32 %s21, 1
    %s23 = scalar_select %p20, %s21, %s22
    %p26 = pneg %p20
    %p27 = scmp.eq.s32.totalorder %s11, 1
    %p28 = por %p26, %p27
    %p29 = scmp.ne.s32.totalorder %s21, %s24
    %p30 = scmp.eq.s32.totalorder %s11, 0
    %p31 = por %p29, %p30
    %p32 = scmp.ne.s32.totalorder %s21, %s24
    %p33 = scmp.eq.s32.totalorder %s16, 1
    %p34 = por %p32, %p33
    %p35 = scmp.ne.s32.totalorder %s24, %s25
    %p36 = scmp.eq.s32.totalorder %s16, 0
    %p37 = por %p35, %p36
    %p38 = scmp.ne.s32.totalorder %s24, %s25
    %p39 = scmp.eq.s32.totalorder %s17, 1
    %p40 = por %p38, %p39
    %p42 = scmp.ne.s32.totalorder %s25, %s41
    %p43 = scmp.eq.s32.totalorder %s17, 0
    %p44 = por %p42, %p43
    %s45 = ssub.s32 %s11, %s18
    %p46 = scmp.eq.s32.totalorder %s45, 0
    %s48 = sadd.s32 %s47, 1
    %s49 = scalar_select %p46, %s47, %s48
    %p52 = pneg %p46
    %p53 = scmp.eq.s32.totalorder %s11, 1
    %p54 = por %p52, %p53
    %p55 = scmp.ne.s32.totalorder %s47, %s50
    %p56 = scmp.eq.s32.totalorder %s11, 0
    %p57 = por %p55, %p56
    %p58 = scmp.ne.s32.totalorder %s47, %s50
    %p59 = scmp.eq.s32.totalorder %s16, 1
    %p60 = por %p58, %p59
    %p61 = scmp.ne.s32.totalorder %s50, %s51
    %p62 = scmp.eq.s32.totalorder %s16, 0
    %p63 = por %p61, %p62
    %p64 = scmp.ne.s32.totalorder %s50, %s51
    %p65 = scmp.eq.s32.totalorder %s17, 1
    %p66 = por %p64, %p65
    %p68 = scmp.ne.s32.totalorder %s51, %s67
    %p69 = scmp.eq.s32.totalorder %s17, 0
    %p70 = por %p68, %p69
    %s72 = sadd.s32 %s71, 1
    %p75 = scmp.eq.s32.totalorder %s11, 1
    %p76 = scmp.ne.s32.totalorder %s71, %s73
    %p77 = scmp.eq.s32.totalorder %s11, 0
    %p78 = por %p76, %p77
    %p79 = scmp.ne.s32.totalorder %s71, %s73
    %p80 = scmp.eq.s32.totalorder %s16, 1
    %p81 = por %p79, %p80
    %p82 = scmp.ne.s32.totalorder %s73, %s74
    %p83 = scmp.eq.s32.totalorder %s16, 0
    %p84 = por %p82, %p83
    %p85 = scmp.ne.s32.totalorder %s73, %s74
    %p86 = scmp.eq.s32.totalorder %s17, 1
    %p87 = por %p85, %p86
    %p89 = scmp.ne.s32.totalorder %s74, %s88
    %p90 = scmp.eq.s32.totalorder %s17, 0
    %p91 = por %p89, %p90
    %s93 = sadd.s32 %s92, 1
    %p96 = scmp.eq.s32.totalorder %s11, 1
    %p97 = scmp.ne.s32.totalorder %s92, %s94
    %p98 = scmp.eq.s32.totalorder %s11, 0
    %p99 = por %p97, %p98
    %p100 = scmp.ne.s32.totalorder %s92, %s94
    %p101 = scmp.eq.s32.totalorder %s16, 1
    %p102 = por %p100, %p101
    %p103 = scmp.ne.s32.totalorder %s94, %s95
    %p104 = scmp.eq.s32.totalorder %s16, 0
    %p105 = por %p103, %p104
    %p106 = scmp.ne.s32.totalorder %s94, %s95
    %p107 = scmp.eq.s32.totalorder %s17, 1
    %p108 = por %p106, %p107
    %p110 = scmp.ne.s32.totalorder %s95, %s109
    %p111 = scmp.eq.s32.totalorder %s17, 0
    %p112 = por %p110, %p111
    %s114 = sadd.s32 %s113, 1
    %p117 = scmp.eq.s32.totalorder %s11, 1
    %p118 = scmp.ne.s32.totalorder %s113, %s115
    %p119 = scmp.eq.s32.totalorder %s11, 0
    %p120 = por %p118, %p119
    %p121 = scmp.ne.s32.totalorder %s113, %s115
    %p122 = scmp.eq.s32.totalorder %s16, 1
    %p123 = por %p121, %p122
    %p124 = scmp.ne.s32.totalorder %s115, %s116
    %p125 = scmp.eq.s32.totalorder %s16, 0
    %p126 = por %p124, %p125
    %p127 = scmp.ne.s32.totalorder %s115, %s116
    %p128 = scmp.eq.s32.totalorder %s17, 1
    %p129 = por %p127, %p128
    %p131 = scmp.ne.s32.totalorder %s116, %s130
    %p132 = scmp.eq.s32.totalorder %s17, 0
    %p133 = por %p131, %p132
    %s134 = ssub.s32 %s11, %s18
    %p135 = scmp.eq.s32.totalorder %s134, 0
    %s137 = sadd.s32 %s136, 1
    %s138 = scalar_select %p135, %s136, %s137
    %p141 = pneg %p135
    %p142 = scmp.eq.s32.totalorder %s11, 1
    %p143 = por %p141, %p142
    %p144 = scmp.ne.s32.totalorder %s136, %s139
    %p145 = scmp.eq.s32.totalorder %s11, 0
    %p146 = por %p144, %p145
    %p147 = scmp.ne.s32.totalorder %s136, %s139
    %p148 = scmp.eq.s32.totalorder %s16, 1
    %p149 = por %p147, %p148
    %p150 = scmp.ne.s32.totalorder %s139, %s140
    %p151 = scmp.eq.s32.totalorder %s16, 0
    %p152 = por %p150, %p151
    %p153 = scmp.ne.s32.totalorder %s139, %s140
    %p154 = scmp.eq.s32.totalorder %s17, 1
    %p155 = por %p153, %p154
    %p157 = scmp.ne.s32.totalorder %s140, %s156
    %p158 = scmp.eq.s32.totalorder %s17, 0
    %p159 = por %p157, %p158
    %p160 = scmp.le.s32.totalorder 1, %s11
    %p161 = scmp.lt.s32.totalorder %s11, 3
    %p162 = pnand %p160, %p161
    %p163 = pneg %p162
    // Predicated region
    $region9: #{base_encoder_forward.15} parent=5 // pred_check
      _
    $region10: #{base_encoder_forward.15} parent=5 // pred_check_branch
      %165 = sbr.rel (%p162) target = $region12
    $region11: #{base_encoder_forward.15} parent=5 // pred_region
      %s166 = ssub.s32 %s11, 1
      // Predicated region
      $region13: #{base_encoder_forward.15} parent=11 // pred_check
        %p167 = pneg %p84
      $region14: #{base_encoder_forward.15} parent=11 // pred_check_branch
        %169 = sbr.rel (%p167) target = $region16
      $region15: #{base_encoder_forward.15} parent=11 // pred_region
        _
      $region16: #{base_encoder_forward.15} parent=11 // pred_fallthru
        _
      // Predicated region
      $region17: #{base_encoder_forward.15} parent=11 // pred_check
        %p170 = pneg %p105
      $region18: #{base_encoder_forward.15} parent=11 // pred_check_branch
        %172 = sbr.rel (%p170) target = $region20
      $region19: #{base_encoder_forward.15} parent=11 // pred_region
        _
      $region20: #{base_encoder_forward.15} parent=11 // pred_fallthru
        _
      // Predicated region
      $region21: #{base_encoder_forward.15} parent=11 // pred_check
        %p173 = pneg %p126
      $region22: #{base_encoder_forward.15} parent=11 // pred_check_branch
        %175 = sbr.rel (%p173) target = $region24
      $region23: #{base_encoder_forward.15} parent=11 // pred_region
        _
      $region24: #{base_encoder_forward.15} parent=11 // pred_fallthru
        _
    $region12: #{base_encoder_forward.15} parent=5 // pred_fallthru
      _
    %p176 = scmp.lt.s32.totalorder %s11, 2
    // Predicated region
    $region25: #{base_encoder_forward.15} parent=5 // pred_check
      %p177 = pneg %p176
    $region26: #{base_encoder_forward.15} parent=5 // pred_check_branch
      %179 = sbr.rel (%p177) target = $region28
    $region27: #{base_encoder_forward.15} parent=5 // pred_region
      // Predicated region
      $region29: #{base_encoder_forward.15} parent=27 // pred_check
        %p180 = pneg %p31
      $region30: #{base_encoder_forward.15} parent=27 // pred_check_branch
        %182 = sbr.rel (%p180) target = $region32
      $region31: #{base_encoder_forward.15} parent=27 // pred_region
        %p183 = scmp.lt.s32.totalorder %s11, 1
        %s184 = scalar_select %p183, %s11, 1
        %s185 = smul.addr %s184, 4
        %s186 = smul.addr %s185, 4
        %s187 = scalar_lea.vmem %s0, %s186
      $region32: #{base_encoder_forward.15} parent=27 // pred_fallthru
        _
      // Predicated region
      $region33: #{base_encoder_forward.15} parent=27 // pred_check
        %p188 = pneg %p57
      $region34: #{base_encoder_forward.15} parent=27 // pred_check_branch
        %190 = sbr.rel (%p188) target = $region36
      $region35: #{base_encoder_forward.15} parent=27 // pred_region
        %p191 = scmp.lt.s32.totalorder %s11, 1
        %s192 = scalar_select %p191, %s11, 1
        %s193 = smul.addr %s192, 4
        %s194 = smul.addr %s193, 4
        %s195 = scalar_lea.vmem %s1, %s194
      $region36: #{base_encoder_forward.15} parent=27 // pred_fallthru
        _
    $region28: #{base_encoder_forward.15} parent=5 // pred_fallthru
      _
    %p196 = scmp.le.s32.totalorder 1, %s11
    %p197 = scmp.lt.s32.totalorder %s11, 3
    %p198 = pnand %p196, %p197
    %p199 = pneg %p198
    // Predicated region
    $region37: #{base_encoder_forward.15} parent=5 // pred_check
      _
    $region38: #{base_encoder_forward.15} parent=5 // pred_check_branch
      %201 = sbr.rel (%p198) target = $region40
    $region39: #{base_encoder_forward.15} parent=5 // pred_region
      %s202 = ssub.s32 %s11, 1
      %p203 = scmp.lt.s32.totalorder %s16, 1
      %s204 = scalar_select %p203, %s16, 1
      %s205 = smul.addr %s204, 4
      %s206 = smul.addr %s205, 4
      %s207 = scalar_lea.vmem %s0, %s206
      %p208 = pneg %p37
      %p209 = pneg %p34
      %p210 = scmp.lt.s32.totalorder %s16, 1
      %s211 = scalar_select %p210, %s16, 1
      %s212 = smul.addr %s211, 4
      %s213 = smul.addr %s212, 4
      %s214 = scalar_lea.vmem %s1, %s213
      %p215 = pneg %p63
      %p216 = pneg %p60
      %p217 = pneg %p84
      %p218 = pneg %p81
      %p219 = pneg %p105
      %p220 = pneg %p102
      %p221 = pneg %p126
      %p222 = pneg %p123
      %p223 = pneg %p152
      %p224 = pneg %p149
      %p225 = scmp.lt.s32.totalorder %s16, 1
      %s226 = scalar_select %p225, %s16, 1
      %s227 = smul.addr %s226, 2
      %s228 = smul.addr %s227, 8
      %s229 = scalar_lea.vmem %s5, %s228
      %p230 = scmp.lt.s32.totalorder %s16, 1
      %s231 = scalar_select %p230, %s16, 1
      %s232 = smul.addr %s231, 4
      %s233 = smul.addr %s232, 4
      %s234 = scalar_lea.vmem %s0, %s233
      %p235 = scmp.lt.s32.totalorder %s16, 1
      %s236 = scalar_select %p235, %s16, 1
      %s237 = smul.addr %s236, 4
      %s238 = smul.addr %s237, 4
      %s239 = scalar_lea.vmem %s1, %s238
      %p240 = scmp.lt.s32.totalorder %s16, 1
      %s241 = scalar_select %p240, %s16, 1
      %s242 = smul.addr %s241, 2
      %s243 = smul.addr %s242, 8
      %s244 = scalar_lea.vmem %s5, %s243
      %v245 = vld [vmem:[%s234] sm:$0xff]
      %v246 = vld [vmem:[%s239] sm:$0xff]
      %v247 = vunpack.c.l.bf16 %v245
      %v248 = vunpack.c.h.bf16 %v245
      %v249 = vunpack.c.l.bf16 %v246
      %v250 = vunpack.c.h.bf16 %v246
      %v251 = vadd.f32 %v247, %v249
      %v252 = vadd.f32 %v248, %v250
      %v253 = vpack.c.bf16 %v251, %v251
      %v254 = vpack.c.bf16 %v252, %v252
      %v255 = vld [vmem:[%s2] sm:$0xf]
      %v256 = vld [vmem:[%s2 + $0x4] sm:$0xf]
      %v257 = vld [vmem:[%s2 + $0x8] sm:$0xf]
      %v258 = vld [vmem:[%s2 + $0xc] sm:$0xf]
      %v259 = vld [vmem:[%s2 + $0x10] sm:$0xf]
      %v260 = vld [vmem:[%s2 + $0x14] sm:$0xf]
      %v261 = vld [vmem:[%s2 + $0x18] sm:$0xf]
      %v262 = vld [vmem:[%s2 + $0x1c] sm:$0xf]
      %v263 = vld [vmem:[%s2 + $0x20] sm:$0xf]
      %v264 = vld [vmem:[%s2 + $0x24] sm:$0xf]
      %v265 = vld [vmem:[%s2 + $0x28] sm:$0xf]
      %v266 = vld [vmem:[%s2 + $0x2c] sm:$0xf]
      %v267 = vld [vmem:[%s2 + $0x30] sm:$0xf]
      %v268 = vld [vmem:[%s2 + $0x34] sm:$0xf]
      %v269 = vld [vmem:[%s2 + $0x38] sm:$0xf]
      %v270 = vld [vmem:[%s2 + $0x3c] sm:$0xf]
      %v271 = vld [vmem:[%s2 + $0x40] sm:$0xf]
      %v272 = vld [vmem:[%s2 + $0x44] sm:$0xf]
      %v273 = vld [vmem:[%s2 + $0x48] sm:$0xf]
      %v274 = vld [vmem:[%s2 + $0x4c] sm:$0xf]
      %v275 = vld [vmem:[%s2 + $0x50] sm:$0xf]
      %v276 = vld [vmem:[%s2 + $0x54] sm:$0xf]
      %v277 = vld [vmem:[%s2 + $0x58] sm:$0xf]
      %v278 = vld [vmem:[%s2 + $0x5c] sm:$0xf]
      %v279 = vld [vmem:[%s2 + $0x60] sm:$0xf]
      %v280 = vld [vmem:[%s2 + $0x64] sm:$0xf]
      %v281 = vld [vmem:[%s2 + $0x68] sm:$0xf]
      %v282 = vld [vmem:[%s2 + $0x6c] sm:$0xf]
      %v283 = vld [vmem:[%s2 + $0x70] sm:$0xf]
      %v284 = vld [vmem:[%s2 + $0x74] sm:$0xf]
      %v285 = vld [vmem:[%s2 + $0x78] sm:$0xf]
      %v286 = vld [vmem:[%s2 + $0x7c] sm:$0xf]
      %v287 = vld [vmem:[%s3] sm:$0xf]
      %v288 = vld [vmem:[%s3 + $0x4] sm:$0xf]
      %v289 = vld [vmem:[%s3 + $0x8] sm:$0xf]
      %v290 = vld [vmem:[%s3 + $0xc] sm:$0xf]
      %v291 = vld [vmem:[%s3 + $0x10] sm:$0xf]
      %v292 = vld [vmem:[%s3 + $0x14] sm:$0xf]
      %v293 = vld [vmem:[%s3 + $0x18] sm:$0xf]
      %v294 = vld [vmem:[%s3 + $0x1c] sm:$0xf]
      %v295 = vld [vmem:[%s3 + $0x20] sm:$0xf]
      %v296 = vld [vmem:[%s3 + $0x24] sm:$0xf]
      %v297 = vld [vmem:[%s3 + $0x28] sm:$0xf]
      %v298 = vld [vmem:[%s3 + $0x2c] sm:$0xf]
      %v299 = vld [vmem:[%s3 + $0x30] sm:$0xf]
      %v300 = vld [vmem:[%s3 + $0x34] sm:$0xf]
      %v301 = vld [vmem:[%s3 + $0x38] sm:$0xf]
      %v302 = vld [vmem:[%s3 + $0x3c] sm:$0xf]
      %v303 = vld [vmem:[%s3 + $0x40] sm:$0xf]
      %v304 = vld [vmem:[%s3 + $0x44] sm:$0xf]
      %v305 = vld [vmem:[%s3 + $0x48] sm:$0xf]
      %v306 = vld [vmem:[%s3 + $0x4c] sm:$0xf]
      %v307 = vld [vmem:[%s3 + $0x50] sm:$0xf]
      %v308 = vld [vmem:[%s3 + $0x54] sm:$0xf]
      %v309 = vld [vmem:[%s3 + $0x58] sm:$0xf]
      %v310 = vld [vmem:[%s3 + $0x5c] sm:$0xf]
      %v311 = vld [vmem:[%s3 + $0x60] sm:$0xf]
      %v312 = vld [vmem:[%s3 + $0x64] sm:$0xf]
      %v313 = vld [vmem:[%s3 + $0x68] sm:$0xf]
      %v314 = vld [vmem:[%s3 + $0x6c] sm:$0xf]
      %v315 = vld [vmem:[%s3 + $0x70] sm:$0xf]
      %v316 = vld [vmem:[%s3 + $0x74] sm:$0xf]
      %v317 = vld [vmem:[%s3 + $0x78] sm:$0xf]
      %v318 = vld [vmem:[%s3 + $0x7c] sm:$0xf]
      %v319 = vld [vmem:[%s4] sm:$0xf]
      %v320 = vld [vmem:[%s4 + $0x4] sm:$0xf]
      %v321 = vld [vmem:[%s4 + $0x8] sm:$0xf]
      %v322 = vld [vmem:[%s4 + $0xc] sm:$0xf]
      %v323 = vld [vmem:[%s4 + $0x10] sm:$0xf]
      %v324 = vld [vmem:[%s4 + $0x14] sm:$0xf]
      %v325 = vld [vmem:[%s4 + $0x18] sm:$0xf]
      %v326 = vld [vmem:[%s4 + $0x1c] sm:$0xf]
      %v327 = vld [vmem:[%s4 + $0x20] sm:$0xf]
      %v328 = vld [vmem:[%s4 + $0x24] sm:$0xf]
      %v329 = vld [vmem:[%s4 + $0x28] sm:$0xf]
      %v330 = vld [vmem:[%s4 + $0x2c] sm:$0xf]
      %v331 = vld [vmem:[%s4 + $0x30] sm:$0xf]
      %v332 = vld [vmem:[%s4 + $0x34] sm:$0xf]
      %v333 = vld [vmem:[%s4 + $0x38] sm:$0xf]
      %v334 = vld [vmem:[%s4 + $0x3c] sm:$0xf]
      %v335 = vld [vmem:[%s4 + $0x40] sm:$0xf]
      %v336 = vld [vmem:[%s4 + $0x44] sm:$0xf]
      %v337 = vld [vmem:[%s4 + $0x48] sm:$0xf]
      %v338 = vld [vmem:[%s4 + $0x4c] sm:$0xf]
      %v339 = vld [vmem:[%s4 + $0x50] sm:$0xf]
      %v340 = vld [vmem:[%s4 + $0x54] sm:$0xf]
      %v341 = vld [vmem:[%s4 + $0x58] sm:$0xf]
      %v342 = vld [vmem:[%s4 + $0x5c] sm:$0xf]
      %v343 = vld [vmem:[%s4 + $0x60] sm:$0xf]
      %v344 = vld [vmem:[%s4 + $0x64] sm:$0xf]
      %v345 = vld [vmem:[%s4 + $0x68] sm:$0xf]
      %v346 = vld [vmem:[%s4 + $0x6c] sm:$0xf]
      %v347 = vld [vmem:[%s4 + $0x70] sm:$0xf]
      %v348 = vld [vmem:[%s4 + $0x74] sm:$0xf]
      %v349 = vld [vmem:[%s4 + $0x78] sm:$0xf]
      %v350 = vld [vmem:[%s4 + $0x7c] sm:$0xf]
      %v351 = vld [vmem:[%s234] sm:$0xcc]
      %v352 = vld [vmem:[%s234 + $0x8] sm:$0x33]
      %v353 = vld [vmem:[%s239] sm:$0xcc]
      %v354 = vld [vmem:[%s239 + $0x8] sm:$0x33]
      %v355 = vunpack.c.l.bf16 %v351
      %v356 = vunpack.c.h.bf16 %v351
      %v357 = vunpack.c.l.bf16 %v352
      %v358 = vunpack.c.h.bf16 %v352
      %v359 = vunpack.c.l.bf16 %v353
      %v360 = vunpack.c.h.bf16 %v353
      %v361 = vunpack.c.l.bf16 %v354
      %v362 = vunpack.c.h.bf16 %v354
      %v363 = vadd.f32 %v355, %v359
      %v364 = vadd.f32 %v356, %v360
      %v365 = vadd.f32 %v357, %v361
      %v366 = vadd.f32 %v358, %v362
      %v367 = vpack.c.bf16 %v365, %v363
      %v368 = vpack.c.bf16 %v366, %v364
      %s369 = scalar_lea.vmem %s2, 128
      %v370 = vld [vmem:[%s369] sm:$0xf]
      %v371 = vld [vmem:[%s369 + $0x4] sm:$0xf]
      %v372 = vld [vmem:[%s369 + $0x8] sm:$0xf]
      %v373 = vld [vmem:[%s369 + $0xc] sm:$0xf]
      %v374 = vld [vmem:[%s369 + $0x10] sm:$0xf]
      %v375 = vld [vmem:[%s369 + $0x14] sm:$0xf]
      %v376 = vld [vmem:[%s369 + $0x18] sm:$0xf]
      %v377 = vld [vmem:[%s369 + $0x1c] sm:$0xf]
      %v378 = vld [vmem:[%s369 + $0x20] sm:$0xf]
      %v379 = vld [vmem:[%s369 + $0x24] sm:$0xf]
      %v380 = vld [vmem:[%s369 + $0x28] sm:$0xf]
      %v381 = vld [vmem:[%s369 + $0x2c] sm:$0xf]
      %v382 = vld [vmem:[%s369 + $0x30] sm:$0xf]
      %v383 = vld [vmem:[%s369 + $0x34] sm:$0xf]
      %v384 = vld [vmem:[%s369 + $0x38] sm:$0xf]
      %v385 = vld [vmem:[%s369 + $0x3c] sm:$0xf]
      %v386 = vld [vmem:[%s369 + $0x40] sm:$0xf]
      %v387 = vld [vmem:[%s369 + $0x44] sm:$0xf]
      %v388 = vld [vmem:[%s369 + $0x48] sm:$0xf]
      %v389 = vld [vmem:[%s369 + $0x4c] sm:$0xf]
      %v390 = vld [vmem:[%s369 + $0x50] sm:$0xf]
      %v391 = vld [vmem:[%s369 + $0x54] sm:$0xf]
      %v392 = vld [vmem:[%s369 + $0x58] sm:$0xf]
      %v393 = vld [vmem:[%s369 + $0x5c] sm:$0xf]
      %v394 = vld [vmem:[%s369 + $0x60] sm:$0xf]
      %v395 = vld [vmem:[%s369 + $0x64] sm:$0xf]
      %v396 = vld [vmem:[%s369 + $0x68] sm:$0xf]
      %v397 = vld [vmem:[%s369 + $0x6c] sm:$0xf]
      %v398 = vld [vmem:[%s369 + $0x70] sm:$0xf]
      %v399 = vld [vmem:[%s369 + $0x74] sm:$0xf]
      %v400 = vld [vmem:[%s369 + $0x78] sm:$0xf]
      %v401 = vld [vmem:[%s369 + $0x7c] sm:$0xf]
      %v404 = vunpack.c.l.b16 %v351
      %v405 = vunpack.c.h.b16 %v351
      %v406 = vunpack.c.l.b16 %v352
      %v407 = vunpack.c.h.b16 %v352
      %v408 = vpack.c.b16 %v406, %v404
      %v409 = vpack.c.b16 %v407, %v405
      %v410 = vrot.slane %v408, 2
      %v411 = vrot.slane %v409, 2
      %v446 = vunpack.c.l.b16 %v370
      %v447 = vunpack.c.l.b16 %v371
      %v448 = vunpack.c.l.b16 %v372
      %v449 = vunpack.c.l.b16 %v373
      %v450 = vunpack.c.l.b16 %v374
      %v451 = vunpack.c.l.b16 %v375
      %v452 = vunpack.c.l.b16 %v376
      %v453 = vunpack.c.l.b16 %v377
      %v454 = vunpack.c.l.b16 %v378
      %v455 = vunpack.c.l.b16 %v379
      %v456 = vunpack.c.l.b16 %v380
      %v457 = vunpack.c.l.b16 %v381
      %v458 = vunpack.c.l.b16 %v382
      %v459 = vunpack.c.l.b16 %v383
      %v460 = vunpack.c.l.b16 %v384
      %v461 = vunpack.c.l.b16 %v385
      %v462 = vunpack.c.l.b16 %v386
      %v463 = vunpack.c.l.b16 %v387
      %v464 = vunpack.c.l.b16 %v388
      %v465 = vunpack.c.l.b16 %v389
      %v466 = vunpack.c.l.b16 %v390
      %v467 = vunpack.c.l.b16 %v391
      %v468 = vunpack.c.l.b16 %v392
      %v469 = vunpack.c.l.b16 %v393
      %v470 = vunpack.c.l.b16 %v394
      %v471 = vunpack.c.l.b16 %v395
      %v472 = vunpack.c.l.b16 %v396
      %v473 = vunpack.c.l.b16 %v397
      %v474 = vunpack.c.l.b16 %v398
      %v475 = vunpack.c.l.b16 %v399
      %v476 = vunpack.c.l.b16 %v400
      %v477 = vunpack.c.l.b16 %v401
      %v478 = vpack.c.b16 %v447, %v446
      %v479 = vpack.c.b16 %v449, %v448
      %v480 = vpack.c.b16 %v451, %v450
      %v481 = vpack.c.b16 %v453, %v452
      %v482 = vpack.c.b16 %v455, %v454
      %v483 = vpack.c.b16 %v457, %v456
      %v484 = vpack.c.b16 %v459, %v458
      %v485 = vpack.c.b16 %v461, %v460
      %v486 = vpack.c.b16 %v463, %v462
      %v487 = vpack.c.b16 %v465, %v464
      %v488 = vpack.c.b16 %v467, %v466
      %v489 = vpack.c.b16 %v469, %v468
      %v490 = vpack.c.b16 %v471, %v470
      %v491 = vpack.c.b16 %v473, %v472
      %v492 = vpack.c.b16 %v475, %v474
      %v493 = vpack.c.b16 %v477, %v476
      %510 = vmatpush.bf16.msra.mxu0 %v485
      %511 = vmatpush.bf16.msra.mxu0 %v484
      %512 = vmatpush.bf16.msra.mxu0 %v483
      %513 = vmatpush.bf16.msra.mxu0 %v482
      %514 = vmatpush.bf16.msra.mxu0 %v481
      %515 = vmatpush.bf16.msra.mxu0 %v480
      %516 = vmatpush.bf16.msra.mxu0 %v479
      %517 = vmatpush.bf16.msra.mxu0 %v478
      %518 = vmatmul.bf16.gmra.mxu0 %v410
      %v519 = vpop.f32.mrf.mxu0
      %v520 = vadd.f32 0.0, %v519
      %v521 = vpop.f32.mrf.mxu0
      %522 = vdwg.mxu0
      %523 = vmatpush.bf16.msra.mxu0 %v493
      %524 = vmatpush.bf16.msra.mxu0 %v492
      %525 = vmatpush.bf16.msra.mxu0 %v491
      %526 = vmatpush.bf16.msra.mxu0 %v490
      %527 = vmatpush.bf16.msra.mxu0 %v489
      %528 = vmatpush.bf16.msra.mxu0 %v488
      %529 = vmatpush.bf16.msra.mxu0 %v487
      %530 = vmatpush.bf16.msra.mxu0 %v486
      %531 = vmatmul.bf16.gmra.mxu0 %v411
      %v532 = vpop.f32.mrf.mxu0
      %v533 = vadd.f32 %v520, %v532
      %v534 = vpop.f32.mrf.mxu0
      %535 = vdwg.mxu0
      %v537 = vunpack.c.l.b16 %v245
      %v538 = vunpack.c.h.b16 %v245
      %v539 = vpack.c.b16 %v537, %v537
      %v540 = vpack.c.b16 %v538, %v538
      %v575 = vunpack.c.l.b16 %v255
      %v576 = vunpack.c.l.b16 %v256
      %v577 = vunpack.c.l.b16 %v257
      %v578 = vunpack.c.l.b16 %v258
      %v579 = vunpack.c.l.b16 %v259
      %v580 = vunpack.c.l.b16 %v260
      %v581 = vunpack.c.l.b16 %v261
      %v582 = vunpack.c.l.b16 %v262
      %v583 = vunpack.c.l.b16 %v263
      %v584 = vunpack.c.l.b16 %v264
      %v585 = vunpack.c.l.b16 %v265
      %v586 = vunpack.c.l.b16 %v266
      %v587 = vunpack.c.l.b16 %v267
      %v588 = vunpack.c.l.b16 %v268
      %v589 = vunpack.c.l.b16 %v269
      %v590 = vunpack.c.l.b16 %v270
      %v591 = vunpack.c.l.b16 %v271
      %v592 = vunpack.c.l.b16 %v272
      %v593 = vunpack.c.l.b16 %v273
      %v594 = vunpack.c.l.b16 %v274
      %v595 = vunpack.c.l.b16 %v275
      %v596 = vunpack.c.l.b16 %v276
      %v597 = vunpack.c.l.b16 %v277
      %v598 = vunpack.c.l.b16 %v278
      %v599 = vunpack.c.l.b16 %v279
      %v600 = vunpack.c.l.b16 %v280
      %v601 = vunpack.c.l.b16 %v281
      %v602 = vunpack.c.l.b16 %v282
      %v603 = vunpack.c.l.b16 %v283
      %v604 = vunpack.c.l.b16 %v284
      %v605 = vunpack.c.l.b16 %v285
      %v606 = vunpack.c.l.b16 %v286
      %v607 = vpack.c.b16 %v576, %v575
      %v608 = vpack.c.b16 %v578, %v577
      %v609 = vpack.c.b16 %v580, %v579
      %v610 = vpack.c.b16 %v582, %v581
      %v611 = vpack.c.b16 %v584, %v583
      %v612 = vpack.c.b16 %v586, %v585
      %v613 = vpack.c.b16 %v588, %v587
      %v614 = vpack.c.b16 %v590, %v589
      %v615 = vpack.c.b16 %v592, %v591
      %v616 = vpack.c.b16 %v594, %v593
      %v617 = vpack.c.b16 %v596, %v595
      %v618 = vpack.c.b16 %v598, %v597
      %v619 = vpack.c.b16 %v600, %v599
      %v620 = vpack.c.b16 %v602, %v601
      %v621 = vpack.c.b16 %v604, %v603
      %v622 = vpack.c.b16 %v606, %v605
      %639 = vmatpush.bf16.msra.mxu0 %v614
      %640 = vmatpush.bf16.msra.mxu0 %v613
      %641 = vmatpush.bf16.msra.mxu0 %v612
      %642 = vmatpush.bf16.msra.mxu0 %v611
      %643 = vmatpush.bf16.msra.mxu0 %v610
      %644 = vmatpush.bf16.msra.mxu0 %v609
      %645 = vmatpush.bf16.msra.mxu0 %v608
      %646 = vmatpush.bf16.msra.mxu0 %v607
      %647 = vmatmul.bf16.gmra.mxu0 %v539
      %v648 = vpop.f32.mrf.mxu0
      %v649 = vadd.f32 %v533, %v648
      %v650 = vpop.f32.mrf.mxu0
      %651 = vdwg.mxu0
      %652 = vmatpush.bf16.msra.mxu0 %v622
      %653 = vmatpush.bf16.msra.mxu0 %v621
      %654 = vmatpush.bf16.msra.mxu0 %v620
      %655 = vmatpush.bf16.msra.mxu0 %v619
      %656 = vmatpush.bf16.msra.mxu0 %v618
      %657 = vmatpush.bf16.msra.mxu0 %v617
      %658 = vmatpush.bf16.msra.mxu0 %v616
      %659 = vmatpush.bf16.msra.mxu0 %v615
      %660 = vmatmul.bf16.gmra.mxu0 %v540
      %v661 = vpop.f32.mrf.mxu0
      %v662 = vadd.f32 %v649, %v661
      %v663 = vpop.f32.mrf.mxu0
      %664 = vdwg.mxu0
      %s665 = scalar_lea.vmem %s3, 128
      %v666 = vld [vmem:[%s665] sm:$0xf]
      %v667 = vld [vmem:[%s665 + $0x4] sm:$0xf]
      %v668 = vld [vmem:[%s665 + $0x8] sm:$0xf]
      %v669 = vld [vmem:[%s665 + $0xc] sm:$0xf]
      %v670 = vld [vmem:[%s665 + $0x10] sm:$0xf]
      %v671 = vld [vmem:[%s665 + $0x14] sm:$0xf]
      %v672 = vld [vmem:[%s665 + $0x18] sm:$0xf]
      %v673 = vld [vmem:[%s665 + $0x1c] sm:$0xf]
      %v674 = vld [vmem:[%s665 + $0x20] sm:$0xf]
      %v675 = vld [vmem:[%s665 + $0x24] sm:$0xf]
      %v676 = vld [vmem:[%s665 + $0x28] sm:$0xf]
      %v677 = vld [vmem:[%s665 + $0x2c] sm:$0xf]
      %v678 = vld [vmem:[%s665 + $0x30] sm:$0xf]
      %v679 = vld [vmem:[%s665 + $0x34] sm:$0xf]
      %v680 = vld [vmem:[%s665 + $0x38] sm:$0xf]
      %v681 = vld [vmem:[%s665 + $0x3c] sm:$0xf]
      %v682 = vld [vmem:[%s665 + $0x40] sm:$0xf]
      %v683 = vld [vmem:[%s665 + $0x44] sm:$0xf]
      %v684 = vld [vmem:[%s665 + $0x48] sm:$0xf]
      %v685 = vld [vmem:[%s665 + $0x4c] sm:$0xf]
      %v686 = vld [vmem:[%s665 + $0x50] sm:$0xf]
      %v687 = vld [vmem:[%s665 + $0x54] sm:$0xf]
      %v688 = vld [vmem:[%s665 + $0x58] sm:$0xf]
      %v689 = vld [vmem:[%s665 + $0x5c] sm:$0xf]
      %v690 = vld [vmem:[%s665 + $0x60] sm:$0xf]
      %v691 = vld [vmem:[%s665 + $0x64] sm:$0xf]
      %v692 = vld [vmem:[%s665 + $0x68] sm:$0xf]
      %v693 = vld [vmem:[%s665 + $0x6c] sm:$0xf]
      %v694 = vld [vmem:[%s665 + $0x70] sm:$0xf]
      %v695 = vld [vmem:[%s665 + $0x74] sm:$0xf]
      %v696 = vld [vmem:[%s665 + $0x78] sm:$0xf]
      %v697 = vld [vmem:[%s665 + $0x7c] sm:$0xf]
      %v700 = vunpack.c.l.b16 %v353
      %v701 = vunpack.c.h.b16 %v353
      %v702 = vunpack.c.l.b16 %v354
      %v703 = vunpack.c.h.b16 %v354
      %v704 = vpack.c.b16 %v702, %v700
      %v705 = vpack.c.b16 %v703, %v701
      %v706 = vrot.slane %v704, 2
      %v707 = vrot.slane %v705, 2
      %v742 = vunpack.c.l.b16 %v666
      %v743 = vunpack.c.l.b16 %v667
      %v744 = vunpack.c.l.b16 %v668
      %v745 = vunpack.c.l.b16 %v669
      %v746 = vunpack.c.l.b16 %v670
      %v747 = vunpack.c.l.b16 %v671
      %v748 = vunpack.c.l.b16 %v672
      %v749 = vunpack.c.l.b16 %v673
      %v750 = vunpack.c.l.b16 %v674
      %v751 = vunpack.c.l.b16 %v675
      %v752 = vunpack.c.l.b16 %v676
      %v753 = vunpack.c.l.b16 %v677
      %v754 = vunpack.c.l.b16 %v678
      %v755 = vunpack.c.l.b16 %v679
      %v756 = vunpack.c.l.b16 %v680
      %v757 = vunpack.c.l.b16 %v681
      %v758 = vunpack.c.l.b16 %v682
      %v759 = vunpack.c.l.b16 %v683
      %v760 = vunpack.c.l.b16 %v684
      %v761 = vunpack.c.l.b16 %v685
      %v762 = vunpack.c.l.b16 %v686
      %v763 = vunpack.c.l.b16 %v687
      %v764 = vunpack.c.l.b16 %v688
      %v765 = vunpack.c.l.b16 %v689
      %v766 = vunpack.c.l.b16 %v690
      %v767 = vunpack.c.l.b16 %v691
      %v768 = vunpack.c.l.b16 %v692
      %v769 = vunpack.c.l.b16 %v693
      %v770 = vunpack.c.l.b16 %v694
      %v771 = vunpack.c.l.b16 %v695
      %v772 = vunpack.c.l.b16 %v696
      %v773 = vunpack.c.l.b16 %v697
      %v774 = vpack.c.b16 %v743, %v742
      %v775 = vpack.c.b16 %v745, %v744
      %v776 = vpack.c.b16 %v747, %v746
      %v777 = vpack.c.b16 %v749, %v748
      %v778 = vpack.c.b16 %v751, %v750
      %v779 = vpack.c.b16 %v753, %v752
      %v780 = vpack.c.b16 %v755, %v754
      %v781 = vpack.c.b16 %v757, %v756
      %v782 = vpack.c.b16 %v759, %v758
      %v783 = vpack.c.b16 %v761, %v760
      %v784 = vpack.c.b16 %v763, %v762
      %v785 = vpack.c.b16 %v765, %v764
      %v786 = vpack.c.b16 %v767, %v766
      %v787 = vpack.c.b16 %v769, %v768
      %v788 = vpack.c.b16 %v771, %v770
      %v789 = vpack.c.b16 %v773, %v772
      %806 = vmatpush.bf16.msra.mxu0 %v781
      %807 = vmatpush.bf16.msra.mxu0 %v780
      %808 = vmatpush.bf16.msra.mxu0 %v779
      %809 = vmatpush.bf16.msra.mxu0 %v778
      %810 = vmatpush.bf16.msra.mxu0 %v777
      %811 = vmatpush.bf16.msra.mxu0 %v776
      %812 = vmatpush.bf16.msra.mxu0 %v775
      %813 = vmatpush.bf16.msra.mxu0 %v774
      %814 = vmatmul.bf16.gmra.mxu0 %v706
      %v815 = vpop.f32.mrf.mxu0
      %v816 = vadd.f32 0.0, %v815
      %v817 = vpop.f32.mrf.mxu0
      %818 = vdwg.mxu0
      %819 = vmatpush.bf16.msra.mxu0 %v789
      %820 = vmatpush.bf16.msra.mxu0 %v788
      %821 = vmatpush.bf16.msra.mxu0 %v787
      %822 = vmatpush.bf16.msra.mxu0 %v786
      %823 = vmatpush.bf16.msra.mxu0 %v785
      %824 = vmatpush.bf16.msra.mxu0 %v784
      %825 = vmatpush.bf16.msra.mxu0 %v783
      %826 = vmatpush.bf16.msra.mxu0 %v782
      %827 = vmatmul.bf16.gmra.mxu0 %v707
      %v828 = vpop.f32.mrf.mxu0
      %v829 = vadd.f32 %v816, %v828
      %v830 = vpop.f32.mrf.mxu0
      %831 = vdwg.mxu0
      %v833 = vunpack.c.l.b16 %v246
      %v834 = vunpack.c.h.b16 %v246
      %v835 = vpack.c.b16 %v833, %v833
      %v836 = vpack.c.b16 %v834, %v834
      %v871 = vunpack.c.l.b16 %v287
      %v872 = vunpack.c.l.b16 %v288
      %v873 = vunpack.c.l.b16 %v289
      %v874 = vunpack.c.l.b16 %v290
      %v875 = vunpack.c.l.b16 %v291
      %v876 = vunpack.c.l.b16 %v292
      %v877 = vunpack.c.l.b16 %v293
      %v878 = vunpack.c.l.b16 %v294
      %v879 = vunpack.c.l.b16 %v295
      %v880 = vunpack.c.l.b16 %v296
      %v881 = vunpack.c.l.b16 %v297
      %v882 = vunpack.c.l.b16 %v298
      %v883 = vunpack.c.l.b16 %v299
      %v884 = vunpack.c.l.b16 %v300
      %v885 = vunpack.c.l.b16 %v301
      %v886 = vunpack.c.l.b16 %v302
      %v887 = vunpack.c.l.b16 %v303
      %v888 = vunpack.c.l.b16 %v304
      %v889 = vunpack.c.l.b16 %v305
      %v890 = vunpack.c.l.b16 %v306
      %v891 = vunpack.c.l.b16 %v307
      %v892 = vunpack.c.l.b16 %v308
      %v893 = vunpack.c.l.b16 %v309
      %v894 = vunpack.c.l.b16 %v310
      %v895 = vunpack.c.l.b16 %v311
      %v896 = vunpack.c.l.b16 %v312
      %v897 = vunpack.c.l.b16 %v313
      %v898 = vunpack.c.l.b16 %v314
      %v899 = vunpack.c.l.b16 %v315
      %v900 = vunpack.c.l.b16 %v316
      %v901 = vunpack.c.l.b16 %v317
      %v902 = vunpack.c.l.b16 %v318
      %v903 = vpack.c.b16 %v872, %v871
      %v904 = vpack.c.b16 %v874, %v873
      %v905 = vpack.c.b16 %v876, %v875
      %v906 = vpack.c.b16 %v878, %v877
      %v907 = vpack.c.b16 %v880, %v879
      %v908 = vpack.c.b16 %v882, %v881
      %v909 = vpack.c.b16 %v884, %v883
      %v910 = vpack.c.b16 %v886, %v885
      %v911 = vpack.c.b16 %v888, %v887
      %v912 = vpack.c.b16 %v890, %v889
      %v913 = vpack.c.b16 %v892, %v891
      %v914 = vpack.c.b16 %v894, %v893
      %v915 = vpack.c.b16 %v896, %v895
      %v916 = vpack.c.b16 %v898, %v897
      %v917 = vpack.c.b16 %v900, %v899
      %v918 = vpack.c.b16 %v902, %v901
      %935 = vmatpush.bf16.msra.mxu0 %v910
      %936 = vmatpush.bf16.msra.mxu0 %v909
      %937 = vmatpush.bf16.msra.mxu0 %v908
      %938 = vmatpush.bf16.msra.mxu0 %v907
      %939 = vmatpush.bf16.msra.mxu0 %v906
      %940 = vmatpush.bf16.msra.mxu0 %v905
      %941 = vmatpush.bf16.msra.mxu0 %v904
      %942 = vmatpush.bf16.msra.mxu0 %v903
      %943 = vmatmul.bf16.gmra.mxu0 %v835
      %v944 = vpop.f32.mrf.mxu0
      %v945 = vadd.f32 %v829, %v944
      %v946 = vpop.f32.mrf.mxu0
      %947 = vdwg.mxu0
      %948 = vmatpush.bf16.msra.mxu0 %v918
      %949 = vmatpush.bf16.msra.mxu0 %v917
      %950 = vmatpush.bf16.msra.mxu0 %v916
      %951 = vmatpush.bf16.msra.mxu0 %v915
      %952 = vmatpush.bf16.msra.mxu0 %v914
      %953 = vmatpush.bf16.msra.mxu0 %v913
      %954 = vmatpush.bf16.msra.mxu0 %v912
      %955 = vmatpush.bf16.msra.mxu0 %v911
      %956 = vmatmul.bf16.gmra.mxu0 %v836
      %v957 = vpop.f32.mrf.mxu0
      %v958 = vadd.f32 %v945, %v957
      %v959 = vpop.f32.mrf.mxu0
      %960 = vdwg.mxu0
      %s961 = scalar_lea.vmem %s4, 128
      %v962 = vld [vmem:[%s961] sm:$0xf]
      %v963 = vld [vmem:[%s961 + $0x4] sm:$0xf]
      %v964 = vld [vmem:[%s961 + $0x8] sm:$0xf]
      %v965 = vld [vmem:[%s961 + $0xc] sm:$0xf]
      %v966 = vld [vmem:[%s961 + $0x10] sm:$0xf]
      %v967 = vld [vmem:[%s961 + $0x14] sm:$0xf]
      %v968 = vld [vmem:[%s961 + $0x18] sm:$0xf]
      %v969 = vld [vmem:[%s961 + $0x1c] sm:$0xf]
      %v970 = vld [vmem:[%s961 + $0x20] sm:$0xf]
      %v971 = vld [vmem:[%s961 + $0x24] sm:$0xf]
      %v972 = vld [vmem:[%s961 + $0x28] sm:$0xf]
      %v973 = vld [vmem:[%s961 + $0x2c] sm:$0xf]
      %v974 = vld [vmem:[%s961 + $0x30] sm:$0xf]
      %v975 = vld [vmem:[%s961 + $0x34] sm:$0xf]
      %v976 = vld [vmem:[%s961 + $0x38] sm:$0xf]
      %v977 = vld [vmem:[%s961 + $0x3c] sm:$0xf]
      %v978 = vld [vmem:[%s961 + $0x40] sm:$0xf]
      %v979 = vld [vmem:[%s961 + $0x44] sm:$0xf]
      %v980 = vld [vmem:[%s961 + $0x48] sm:$0xf]
      %v981 = vld [vmem:[%s961 + $0x4c] sm:$0xf]
      %v982 = vld [vmem:[%s961 + $0x50] sm:$0xf]
      %v983 = vld [vmem:[%s961 + $0x54] sm:$0xf]
      %v984 = vld [vmem:[%s961 + $0x58] sm:$0xf]
      %v985 = vld [vmem:[%s961 + $0x5c] sm:$0xf]
      %v986 = vld [vmem:[%s961 + $0x60] sm:$0xf]
      %v987 = vld [vmem:[%s961 + $0x64] sm:$0xf]
      %v988 = vld [vmem:[%s961 + $0x68] sm:$0xf]
      %v989 = vld [vmem:[%s961 + $0x6c] sm:$0xf]
      %v990 = vld [vmem:[%s961 + $0x70] sm:$0xf]
      %v991 = vld [vmem:[%s961 + $0x74] sm:$0xf]
      %v992 = vld [vmem:[%s961 + $0x78] sm:$0xf]
      %v993 = vld [vmem:[%s961 + $0x7c] sm:$0xf]
      %v996 = vrot.slane %v367, 2
      %v997 = vrot.slane %v368, 2
      %v1032 = vunpack.c.l.b16 %v962
      %v1033 = vunpack.c.l.b16 %v963
      %v1034 = vunpack.c.l.b16 %v964
      %v1035 = vunpack.c.l.b16 %v965
      %v1036 = vunpack.c.l.b16 %v966
      %v1037 = vunpack.c.l.b16 %v967
      %v1038 = vunpack.c.l.b16 %v968
      %v1039 = vunpack.c.l.b16 %v969
      %v1040 = vunpack.c.l.b16 %v970
      %v1041 = vunpack.c.l.b16 %v971
      %v1042 = vunpack.c.l.b16 %v972
      %v1043 = vunpack.c.l.b16 %v973
      %v1044 = vunpack.c.l.b16 %v974
      %v1045 = vunpack.c.l.b16 %v975
      %v1046 = vunpack.c.l.b16 %v976
      %v1047 = vunpack.c.l.b16 %v977
      %v1048 = vunpack.c.l.b16 %v978
      %v1049 = vunpack.c.l.b16 %v979
      %v1050 = vunpack.c.l.b16 %v980
      %v1051 = vunpack.c.l.b16 %v981
      %v1052 = vunpack.c.l.b16 %v982
      %v1053 = vunpack.c.l.b16 %v983
      %v1054 = vunpack.c.l.b16 %v984
      %v1055 = vunpack.c.l.b16 %v985
      %v1056 = vunpack.c.l.b16 %v986
      %v1057 = vunpack.c.l.b16 %v987
      %v1058 = vunpack.c.l.b16 %v988
      %v1059 = vunpack.c.l.b16 %v989
      %v1060 = vunpack.c.l.b16 %v990
      %v1061 = vunpack.c.l.b16 %v991
      %v1062 = vunpack.c.l.b16 %v992
      %v1063 = vunpack.c.l.b16 %v993
      %v1064 = vpack.c.b16 %v1033, %v1032
      %v1065 = vpack.c.b16 %v1035, %v1034
      %v1066 = vpack.c.b16 %v1037, %v1036
      %v1067 = vpack.c.b16 %v1039, %v1038
      %v1068 = vpack.c.b16 %v1041, %v1040
      %v1069 = vpack.c.b16 %v1043, %v1042
      %v1070 = vpack.c.b16 %v1045, %v1044
      %v1071 = vpack.c.b16 %v1047, %v1046
      %v1072 = vpack.c.b16 %v1049, %v1048
      %v1073 = vpack.c.b16 %v1051, %v1050
      %v1074 = vpack.c.b16 %v1053, %v1052
      %v1075 = vpack.c.b16 %v1055, %v1054
      %v1076 = vpack.c.b16 %v1057, %v1056
      %v1077 = vpack.c.b16 %v1059, %v1058
      %v1078 = vpack.c.b16 %v1061, %v1060
      %v1079 = vpack.c.b16 %v1063, %v1062
      %1096 = vmatpush.bf16.msra.mxu0 %v1071
      %1097 = vmatpush.bf16.msra.mxu0 %v1070
      %1098 = vmatpush.bf16.msra.mxu0 %v1069
      %1099 = vmatpush.bf16.msra.mxu0 %v1068
      %1100 = vmatpush.bf16.msra.mxu0 %v1067
      %1101 = vmatpush.bf16.msra.mxu0 %v1066
      %1102 = vmatpush.bf16.msra.mxu0 %v1065
      %1103 = vmatpush.bf16.msra.mxu0 %v1064
      %1104 = vmatmul.bf16.gmra.mxu0 %v996
      %v1105 = vpop.f32.mrf.mxu0
      %v1106 = vadd.f32 0.0, %v1105
      %v1107 = vpop.f32.mrf.mxu0
      %1108 = vdwg.mxu0
      %1109 = vmatpush.bf16.msra.mxu0 %v1079
      %1110 = vmatpush.bf16.msra.mxu0 %v1078
      %1111 = vmatpush.bf16.msra.mxu0 %v1077
      %1112 = vmatpush.bf16.msra.mxu0 %v1076
      %1113 = vmatpush.bf16.msra.mxu0 %v1075
      %1114 = vmatpush.bf16.msra.mxu0 %v1074
      %1115 = vmatpush.bf16.msra.mxu0 %v1073
      %1116 = vmatpush.bf16.msra.mxu0 %v1072
      %1117 = vmatmul.bf16.gmra.mxu0 %v997
      %v1118 = vpop.f32.mrf.mxu0
      %v1119 = vadd.f32 %v1106, %v1118
      %v1120 = vpop.f32.mrf.mxu0
      %1121 = vdwg.mxu0
      %v1154 = vunpack.c.l.b16 %v319
      %v1155 = vunpack.c.l.b16 %v320
      %v1156 = vunpack.c.l.b16 %v321
      %v1157 = vunpack.c.l.b16 %v322
      %v1158 = vunpack.c.l.b16 %v323
      %v1159 = vunpack.c.l.b16 %v324
      %v1160 = vunpack.c.l.b16 %v325
      %v1161 = vunpack.c.l.b16 %v326
      %v1162 = vunpack.c.l.b16 %v327
      %v1163 = vunpack.c.l.b16 %v328
      %v1164 = vunpack.c.l.b16 %v329
      %v1165 = vunpack.c.l.b16 %v330
      %v1166 = vunpack.c.l.b16 %v331
      %v1167 = vunpack.c.l.b16 %v332
      %v1168 = vunpack.c.l.b16 %v333
      %v1169 = vunpack.c.l.b16 %v334
      %v1170 = vunpack.c.l.b16 %v335
      %v1171 = vunpack.c.l.b16 %v336
      %v1172 = vunpack.c.l.b16 %v337
      %v1173 = vunpack.c.l.b16 %v338
      %v1174 = vunpack.c.l.b16 %v339
      %v1175 = vunpack.c.l.b16 %v340
      %v1176 = vunpack.c.l.b16 %v341
      %v1177 = vunpack.c.l.b16 %v342
      %v1178 = vunpack.c.l.b16 %v343
      %v1179 = vunpack.c.l.b16 %v344
      %v1180 = vunpack.c.l.b16 %v345
      %v1181 = vunpack.c.l.b16 %v346
      %v1182 = vunpack.c.l.b16 %v347
      %v1183 = vunpack.c.l.b16 %v348
      %v1184 = vunpack.c.l.b16 %v349
      %v1185 = vunpack.c.l.b16 %v350
      %v1186 = vpack.c.b16 %v1155, %v1154
      %v1187 = vpack.c.b16 %v1157, %v1156
      %v1188 = vpack.c.b16 %v1159, %v1158
      %v1189 = vpack.c.b16 %v1161, %v1160
      %v1190 = vpack.c.b16 %v1163, %v1162
      %v1191 = vpack.c.b16 %v1165, %v1164
      %v1192 = vpack.c.b16 %v1167, %v1166
      %v1193 = vpack.c.b16 %v1169, %v1168
      %v1194 = vpack.c.b16 %v1171, %v1170
      %v1195 = vpack.c.b16 %v1173, %v1172
      %v1196 = vpack.c.b16 %v1175, %v1174
      %v1197 = vpack.c.b16 %v1177, %v1176
      %v1198 = vpack.c.b16 %v1179, %v1178
      %v1199 = vpack.c.b16 %v1181, %v1180
      %v1200 = vpack.c.b16 %v1183, %v1182
      %v1201 = vpack.c.b16 %v1185, %v1184
      %1218 = vmatpush.bf16.msra.mxu0 %v1193
      %1219 = vmatpush.bf16.msra.mxu0 %v1192
      %1220 = vmatpush.bf16.msra.mxu0 %v1191
      %1221 = vmatpush.bf16.msra.mxu0 %v1190
      %1222 = vmatpush.bf16.msra.mxu0 %v1189
      %1223 = vmatpush.bf16.msra.mxu0 %v1188
      %1224 = vmatpush.bf16.msra.mxu0 %v1187
      %1225 = vmatpush.bf16.msra.mxu0 %v1186
      %1226 = vmatmul.bf16.gmra.mxu0 %v253
      %v1227 = vpop.f32.mrf.mxu0
      %v1228 = vadd.f32 %v1119, %v1227
      %v1229 = vpop.f32.mrf.mxu0
      %1230 = vdwg.mxu0
      %1231 = vmatpush.bf16.msra.mxu0 %v1201
      %1232 = vmatpush.bf16.msra.mxu0 %v1200
      %1233 = vmatpush.bf16.msra.mxu0 %v1199
      %1234 = vmatpush.bf16.msra.mxu0 %v1198
      %1235 = vmatpush.bf16.msra.mxu0 %v1197
      %1236 = vmatpush.bf16.msra.mxu0 %v1196
      %1237 = vmatpush.bf16.msra.mxu0 %v1195
      %1238 = vmatpush.bf16.msra.mxu0 %v1194
      %1239 = vmatmul.bf16.gmra.mxu0 %v254
      %v1240 = vpop.f32.mrf.mxu0
      %v1241 = vadd.f32 %v1228, %v1240
      %v1242 = vpop.f32.mrf.mxu0
      %1243 = vdwg.mxu0
      %v1244 = vsub.f32 %v662, %v958
      %v1245 = vsub.f32 %v1241, %v662
      %v1246 = vsub.f32 %v1245, %v958
      %1247 = vst [vmem:[%s244] sm:$0xff] %v1244
      %1248 = vst [vmem:[%s244 + $0x8] sm:$0xff] %v1246
      %p1249 = scmp.lt.s32.totalorder %s16, 1
      %s1250 = scalar_select %p1249, %s16, 1
      %s1251 = smul.addr %s1250, 2
      %s1252 = smul.addr %s1251, 8
      %s1253 = scalar_lea.vmem %s5, %s1252
      // Predicated region
      $region41: #{base_encoder_forward.15} parent=39 // pred_check
        %p1254 = pneg %p149
      $region42: #{base_encoder_forward.15} parent=39 // pred_check_branch
        %1256 = sbr.rel (%p1254) target = $region44
      $region43: #{base_encoder_forward.15} parent=39 // pred_region
        _
      $region44: #{base_encoder_forward.15} parent=39 // pred_fallthru
        _
    $region40: #{base_encoder_forward.15} parent=5 // pred_fallthru
      _
    %p1257 = scmp.le.s32.totalorder 2, %s11
    // Predicated region
    $region45: #{base_encoder_forward.15} parent=5 // pred_check
      %p1258 = pneg %p1257
    $region46: #{base_encoder_forward.15} parent=5 // pred_check_branch
      %1260 = sbr.rel (%p1258) target = $region48
    $region47: #{base_encoder_forward.15} parent=5 // pred_region
      %s1261 = ssub.s32 %s11, 2
      // Predicated region
      $region49: #{base_encoder_forward.15} parent=47 // pred_check
        %p1262 = pneg %p155
      $region50: #{base_encoder_forward.15} parent=47 // pred_check_branch
        %1264 = sbr.rel (%p1262) target = $region52
      $region51: #{base_encoder_forward.15} parent=47 // pred_region
        %p1265 = scmp.lt.s32.totalorder %s17, 1
        %s1266 = scalar_select %p1265, %s17, 1
        %s1267 = smul.addr %s1266, 2
        %s1268 = smul.addr %s1267, 8
        %s1269 = scalar_lea.vmem %s5, %s1268
      $region52: #{base_encoder_forward.15} parent=47 // pred_fallthru
        _
    $region48: #{base_encoder_forward.15} parent=5 // pred_fallthru
      _
  $region6: #{base_encoder_forward.15} parent=0 // loop_footer
    %s15 = sadd.s32 1, %s11
  $region7: #{base_encoder_forward.15} parent=0 // loop_footer_branch
    %10 = sbr.rel target = $region3
  $region8: #{base_encoder_forward.15} parent=0 // loop_exit
    _

</llo_original>
